<compile_context>
chip_gen: v6e
topology: v6e:2x2x1
jax: 0.10.0
libtpu: 0.0.40
codegen_flags: <defaults>
</compile_context>

<pallas_src>
import functools

import numpy as np
import jax
import jax.numpy as jnp
from jax.experimental import pallas as pl
from jax.experimental.pallas import tpu as pltpu


# ------------------------------- helpers ------------------------------------


def _zeros_map(ndim):
    return lambda i: (0,) * ndim


def _layernorm(x, gamma, beta, eps):
    mean = jnp.mean(x, axis=-1, keepdims=True)
    xc = x - mean
    var = jnp.mean(xc * xc, axis=-1, keepdims=True)
    return xc * jax.lax.rsqrt(var + eps) * gamma + beta


def build_conv_pool_matrix(conv_w, conv_b, *, cin, H, W, cout):
    """Express conv3x3(pad=1)+bias (pre-ReLU) at the 4 positions of each 2x2
    pool window as ONE dense matmul on the NCHW-flattened input.

    conv_w: [kh, kw, cin, cout] (HWIO), conv_b: [cout]
    Returns:
      mat  [cin*H*W, 4*D]  with D = cout*(H//2)*(W//2); column s*D + f holds the
           conv at pool-window position s=(di,dj) for flattened-NCHW feature
           f = c*(Hp*Wp) + ph*Wp + pw.
      bias [1, 4*D]
    """
    Hp, Wp = H // 2, W // 2
    D = cout * Hp * Wp
    c, ph, pw, di, dj, ki, kj, ci = np.meshgrid(
        np.arange(cout), np.arange(Hp), np.arange(Wp),
        np.arange(2), np.arange(2), np.arange(3), np.arange(3),
        np.arange(cin), indexing="ij")
    i = 2 * ph + di + ki - 1            # input row hit by this tap (pad=1)
    j = 2 * pw + dj + kj - 1
    valid = (i >= 0) & (i < H) & (j >= 0) & (j < W)   # out-of-range == zero pad
    rows = (ci * (H * W) + i * W + j)[valid]          # NCHW flat input index
    cols = ((di * 2 + dj) * D + c * (Hp * Wp) + ph * Wp + pw)[valid]
    vals = conv_w[ki[valid], kj[valid], ci[valid], c[valid]]
    mat = jnp.zeros((cin * H * W, 4 * D), jnp.float32).at[rows, cols].set(vals)
    col_channel = (np.arange(4 * D) % D) // (Hp * Wp)
    bias = conv_b[col_channel][None, :].astype(jnp.float32)
    return mat, bias


# ----------------------------- fused Pallas kernel ---------------------------


def fused_cnn_batchformer_kernel(
    x_ref,                                # [B, Cin*H*W] f32 (NCHW-flattened image)
    convmat_ref, convb_ref,               # [K, 4D] bf16, [1, 4D] f32
    wqkv_ref, bqkv_ref,                   # [D, 3D] bf16, [1, 3D] f32
    wo_ref, bo_ref,                       # [D, D]  bf16, [1, D]  f32
    g1_ref, be1_ref,                      # LayerNorm1 [1, D] f32
    w1_ref, b1_ref, w2_ref, b2_ref,       # FFN  bf16 / f32
    g2_ref, be2_ref,                      # LayerNorm2
    wcls_ref, bcls_ref,                   # [D, 128] bf16, [1, 128] f32 (padded)
    out_ref,                              # [n_slots, B, 128] f32
    *, d_model, nhead, eps, is_train,
):
    D = d_model
    hd = D // nhead
    mm = wqkv_ref.dtype                   # matmul operand dtype (bfloat16)

    # ---- features: conv3x3(pad=1) + bias + ReLU + maxpool2x2, one matmul ----
    xb = x_ref[...].astype(mm)
    pre = jnp.dot(xb, convmat_ref[...], preferred_element_type=jnp.float32)
    pre = jnp.maximum(pre + convb_ref[...], 0.0)            # [B, 4D] f32
    # max over the 4 pool positions: 256-wide, 128-aligned lane slices.
    feat = jnp.maximum(jnp.maximum(pre[:, 0:D], pre[:, D:2 * D]),
                       jnp.maximum(pre[:, 2 * D:3 * D], pre[:, 3 * D:4 * D]))

    def classify(z):                                         # z: [B, D] f32
        return (jnp.dot(z.astype(mm), wcls_ref[...],
                        preferred_element_type=jnp.float32) + bcls_ref[...])

    if not is_train:                                         # eval: no batchFormer
        out_ref[0, :, :] = classify(feat)
        return

    # ---- batchFormer: post-norm TransformerEncoderLayer, seq axis == batch ----
    qkv = (jnp.dot(feat.astype(mm), wqkv_ref[...],
                   preferred_element_type=jnp.float32) + bqkv_ref[...])  # [B, 3D]
    scale = 1.0 / (hd ** 0.5)
    attn = None
    for h in range(nhead):                                   # static unroll
        lo, hi = h * hd, (h + 1) * hd
        qh = qkv[:, lo:hi]
        kh = qkv[:, D + lo:D + hi]
        vh = qkv[:, 2 * D + lo:2 * D + hi]
        s = jax.lax.dot_general(qh, kh, (((1,), (1,)), ((), ())),
                                preferred_element_type=jnp.float32) * scale
        s = s - jnp.max(s, axis=-1, keepdims=True)
        p = jnp.exp(s)
        p = p * pl.reciprocal(jnp.sum(p, axis=-1, keepdims=True), approx=True)
        oh = jnp.dot(p, vh, preferred_element_type=jnp.float32)      # [B, hd]
        # out_proj applied per-head row-slice of wo (== concat-then-matmul)
        contrib = jnp.dot(oh.astype(mm), wo_ref[lo:hi, :],
                          preferred_element_type=jnp.float32)
        attn = contrib if attn is None else attn + contrib
    x1 = _layernorm(feat + attn + bo_ref[...], g1_ref[...], be1_ref[...], eps)

    h1 = jnp.maximum(jnp.dot(x1.astype(mm), w1_ref[...],
                             preferred_element_type=jnp.float32) + b1_ref[...], 0.0)
    ff = (jnp.dot(h1.astype(mm), w2_ref[...],
                  preferred_element_type=jnp.float32) + b2_ref[...])
    x2 = _layernorm(x1 + ff, g2_ref[...], be2_ref[...], eps)

    # ---- classifier on cat([enc, pre_x], dim=0); one full block per slot ----
    out_ref[0, :, :] = classify(x2)      # encoder branch -> rows [0, B)
    out_ref[1, :, :] = classify(feat)    # skip branch    -> rows [B, 2B)


# ------------------------------- parameters ---------------------------------


def init_raw_params(key, *, cin=3, cout=4, hw=16, num_classes=10):
    """'Logical' f32 parameters mirroring the PyTorch module's layout
    (projection matrices stored so kernels compute x @ W)."""
    d = cout * (hw // 2) * (hw // 2)
    dff = d
    ks = jax.random.split(key, 14)
    s = 0.05
    n = jax.random.normal
    return {
        "conv_w": n(ks[0], (3, 3, cin, cout), jnp.float32) * s,    # HWIO
        "conv_b": n(ks[1], (cout,), jnp.float32) * s,
        "wq": n(ks[2], (d, d), jnp.float32) * s, "bq": n(ks[3], (d,), jnp.float32) * s,
        "wk": n(ks[4], (d, d), jnp.float32) * s, "bk": n(ks[5], (d,), jnp.float32) * s,
        "wv": n(ks[6], (d, d), jnp.float32) * s, "bv": n(ks[7], (d,), jnp.float32) * s,
        "wo": n(ks[8], (d, d), jnp.float32) * s, "bo": n(ks[9], (d,), jnp.float32) * s,
        "ln1_g": jnp.ones((d,), jnp.float32), "ln1_b": jnp.zeros((d,), jnp.float32),
        "w1": n(ks[10], (d, dff), jnp.float32) * s, "b1": jnp.zeros((dff,), jnp.float32),
        "w2": n(ks[11], (dff, d), jnp.float32) * s, "b2": jnp.zeros((d,), jnp.float32),
        "ln2_g": jnp.ones((d,), jnp.float32), "ln2_b": jnp.zeros((d,), jnp.float32),
        "cls_w": n(ks[12], (d, num_classes), jnp.float32) * s,
        "cls_b": n(ks[13], (num_classes,), jnp.float32) * s,
    }, d


def pack_params(raw, *, cin, hw, cout, num_classes, cls_pad=128,
                matmul_dtype=jnp.bfloat16):
    """One-time packing: conv -> dense matmul matrix, fused QKV, padded
    classifier, bf16 matmul weights (elementwise params stay f32)."""
    d = cout * (hw // 2) * (hw // 2)
    convmat, convb = build_conv_pool_matrix(raw["conv_w"], raw["conv_b"],
                                            cin=cin, H=hw, W=hw, cout=cout)
    wqkv = jnp.concatenate([raw["wq"], raw["wk"], raw["wv"]], axis=1)
    bqkv = jnp.concatenate([raw["bq"], raw["bk"], raw["bv"]], axis=0)[None, :]
    cls_w = jnp.zeros((d, cls_pad), jnp.float32).at[:, :num_classes].set(raw["cls_w"])
    cls_b = jnp.zeros((1, cls_pad), jnp.float32).at[0, :num_classes].set(raw["cls_b"])
    mmc = lambda a: a.astype(matmul_dtype)
    row = lambda a: a[None, :].astype(jnp.float32)
    return {
        "convmat": mmc(convmat), "convb": convb,
        "wqkv": mmc(wqkv), "bqkv": bqkv.astype(jnp.float32),
        "wo": mmc(raw["wo"]), "bo": row(raw["bo"]),
        "ln1_g": row(raw["ln1_g"]), "ln1_b": row(raw["ln1_b"]),
        "w1": mmc(raw["w1"]), "b1": row(raw["b1"]),
        "w2": mmc(raw["w2"]), "b2": row(raw["b2"]),
        "ln2_g": row(raw["ln2_g"]), "ln2_b": row(raw["ln2_b"]),
        "cls_w": mmc(cls_w), "cls_b": cls_b,
    }


# ------------------------------- forward pass --------------------------------


def cnn_with_batch_forward(params, x, y, is_train=True, *, nhead=2, eps=1e-5,
                           num_classes=10):
    """x: [B, Cin, H, W] NCHW f32; y: [B] int32. Returns (logits, y)."""
    B = x.shape[0]
    d = params["wo"].shape[0]
    cls_pad = params["cls_w"].shape[1]
    n_slots = 2 if is_train else 1

    x_flat = x.reshape(B, -1).astype(jnp.float32)     # NCHW flatten (no copy)
    operands = (x_flat, params["convmat"], params["convb"],
                params["wqkv"], params["bqkv"], params["wo"], params["bo"],
                params["ln1_g"], params["ln1_b"],
                params["w1"], params["b1"], params["w2"], params["b2"],
                params["ln2_g"], params["ln2_b"],
                params["cls_w"], params["cls_b"])

    out = pl.pallas_call(
        functools.partial(fused_cnn_batchformer_kernel, d_model=d, nhead=nhead,
                          eps=eps, is_train=is_train),
        out_shape=jax.ShapeDtypeStruct((n_slots, B, cls_pad), jnp.float32),
        grid=(1,),
        in_specs=[pl.BlockSpec(a.shape, _zeros_map(a.ndim)) for a in operands],
        out_specs=pl.BlockSpec((n_slots, B, cls_pad), _zeros_map(3)),
        compiler_params=pltpu.CompilerParams(
            dimension_semantics=("arbitrary",)),
    )(*operands)

    logits = out.reshape(n_slots * B, cls_pad)[:, :num_classes]
    y_out = jnp.concatenate([y, y], axis=0) if is_train else y
    return logits, y_out


# ----------------------------------- main ------------------------------------

if __name__ == "__main__":
    key = jax.random.PRNGKey(0)
    pkey, xkey, ykey = jax.random.split(key, 3)

    B, CIN, COUT, HW, NUM_CLASSES = 2, 3, 4, 16, 10
    raw, feature_dim = init_raw_params(pkey, cin=CIN, cout=COUT, hw=HW,
                                       num_classes=NUM_CLASSES)
    params = pack_params(raw, cin=CIN, hw=HW, cout=COUT, num_classes=NUM_CLASSES)

    x = jax.random.normal(xkey, (B, CIN, HW, HW), jnp.float32)   # NCHW input
    y = jax.random.randint(ykey, (B,), 0, NUM_CLASSES, jnp.int32)

    forward = jax.jit(functools.partial(cnn_with_batch_forward, is_train=True,
                                        num_classes=NUM_CLASSES))
    logits, y_out = forward(params, x, y)
    logits, y_out = jax.block_until_ready((logits, y_out))

    assert logits.shape == (2 * B, NUM_CLASSES), logits.shape
    assert y_out.shape == (2 * B,), y_out.shape
    assert bool(jnp.all(jnp.isfinite(logits)))
    print("KERNEL_OK")
</pallas_src>

<mosaic_0001>
module attributes {stable_mosaic.version = 11 : i64} {
  func.func @fused_cnn_batchformer_kernel(%arg0: i32, %arg1: memref<2x768xf32, #tpu.memory_space<vmem>>, %arg2: memref<768x1024xbf16, #tpu.memory_space<vmem>>, %arg3: memref<1x1024xf32, #tpu.memory_space<vmem>>, %arg4: memref<256x768xbf16, #tpu.memory_space<vmem>>, %arg5: memref<1x768xf32, #tpu.memory_space<vmem>>, %arg6: memref<256x256xbf16, #tpu.memory_space<vmem>>, %arg7: memref<1x256xf32, #tpu.memory_space<vmem>>, %arg8: memref<1x256xf32, #tpu.memory_space<vmem>>, %arg9: memref<1x256xf32, #tpu.memory_space<vmem>>, %arg10: memref<256x256xbf16, #tpu.memory_space<vmem>>, %arg11: memref<1x256xf32, #tpu.memory_space<vmem>>, %arg12: memref<256x256xbf16, #tpu.memory_space<vmem>>, %arg13: memref<1x256xf32, #tpu.memory_space<vmem>>, %arg14: memref<1x256xf32, #tpu.memory_space<vmem>>, %arg15: memref<1x256xf32, #tpu.memory_space<vmem>>, %arg16: memref<256x128xbf16, #tpu.memory_space<vmem>>, %arg17: memref<1x128xf32, #tpu.memory_space<vmem>>, %arg18: memref<2x2x128xf32, #tpu.memory_space<vmem>>) attributes {dimension_semantics = [#tpu.dimension_semantics<arbitrary>], iteration_bounds = array<i64: 1>, scalar_prefetch = 0 : i64, scratch_operands = 0 : i64, tpu.core_type = #tpu.core_type<tc>, window_params = [{pipeline_mode = #tpu.pipeline_mode<synchronous>, transform_indices = @transform_0, window_bounds = array<i64: 2, 768>}, {pipeline_mode = #tpu.pipeline_mode<synchronous>, transform_indices = @transform_1, window_bounds = array<i64: 768, 1024>}, {pipeline_mode = #tpu.pipeline_mode<synchronous>, transform_indices = @transform_2, window_bounds = array<i64: 1, 1024>}, {pipeline_mode = #tpu.pipeline_mode<synchronous>, transform_indices = @transform_3, window_bounds = array<i64: 256, 768>}, {pipeline_mode = #tpu.pipeline_mode<synchronous>, transform_indices = @transform_4, window_bounds = array<i64: 1, 768>}, {pipeline_mode = #tpu.pipeline_mode<synchronous>, transform_indices = @transform_5, window_bounds = array<i64: 256, 256>}, {pipeline_mode = #tpu.pipeline_mode<synchronous>, transform_indices = @transform_6, window_bounds = array<i64: 1, 256>}, {pipeline_mode = #tpu.pipeline_mode<synchronous>, transform_indices = @transform_7, window_bounds = array<i64: 1, 256>}, {pipeline_mode = #tpu.pipeline_mode<synchronous>, transform_indices = @transform_8, window_bounds = array<i64: 1, 256>}, {pipeline_mode = #tpu.pipeline_mode<synchronous>, transform_indices = @transform_9, window_bounds = array<i64: 256, 256>}, {pipeline_mode = #tpu.pipeline_mode<synchronous>, transform_indices = @transform_10, window_bounds = array<i64: 1, 256>}, {pipeline_mode = #tpu.pipeline_mode<synchronous>, transform_indices = @transform_11, window_bounds = array<i64: 256, 256>}, {pipeline_mode = #tpu.pipeline_mode<synchronous>, transform_indices = @transform_12, window_bounds = array<i64: 1, 256>}, {pipeline_mode = #tpu.pipeline_mode<synchronous>, transform_indices = @transform_13, window_bounds = array<i64: 1, 256>}, {pipeline_mode = #tpu.pipeline_mode<synchronous>, transform_indices = @transform_14, window_bounds = array<i64: 1, 256>}, {pipeline_mode = #tpu.pipeline_mode<synchronous>, transform_indices = @transform_15, window_bounds = array<i64: 256, 128>}, {pipeline_mode = #tpu.pipeline_mode<synchronous>, transform_indices = @transform_16, window_bounds = array<i64: 1, 128>}, {pipeline_mode = #tpu.pipeline_mode<synchronous>, transform_indices = @transform_17, window_bounds = array<i64: 2, 2, 128>}]} {
    %c0 = arith.constant 0 : index
    %c0_0 = arith.constant 0 : index
    %0 = vector.load %arg1[%c0, %c0_0] : memref<2x768xf32, #tpu.memory_space<vmem>>, vector<2x768xf32>
    %1 = arith.truncf %0 : vector<2x768xf32> to vector<2x768xbf16>
    %c0_1 = arith.constant 0 : index
    %c0_2 = arith.constant 0 : index
    %2 = vector.load %arg2[%c0_1, %c0_2] : memref<768x1024xbf16, #tpu.memory_space<vmem>>, vector<768x1024xbf16>
    %cst = arith.constant dense<0.000000e+00> : vector<2x1024xf32>
    %3 = tpu.matmul %1, %2, %cst {dimension_numbers = #tpu.dot_dimension_numbers<[1], [0], [0], [1], [0, 0, 1, 1], [], []>} : vector<2x768xbf16>, vector<768x1024xbf16>, vector<2x1024xf32> -> vector<2x1024xf32>
    %c0_3 = arith.constant 0 : index
    %c0_4 = arith.constant 0 : index
    %4 = vector.load %arg3[%c0_3, %c0_4] : memref<1x1024xf32, #tpu.memory_space<vmem>>, vector<1x1024xf32>
    %5 = vector.broadcast %4 : vector<1x1024xf32> to vector<2x1024xf32>
    %6 = arith.addf %3, %5 : vector<2x1024xf32>
    %cst_5 = arith.constant 0.000000e+00 : f32
    %7 = vector.broadcast %cst_5 : f32 to vector<2x1024xf32>
    %8 = arith.maximumf %6, %7 : vector<2x1024xf32>
    %9 = vector.extract_strided_slice %8 {offsets = [0, 0], sizes = [2, 256], strides = [1, 1]} : vector<2x1024xf32> to vector<2x256xf32>
    %10 = vector.extract_strided_slice %8 {offsets = [0, 256], sizes = [2, 256], strides = [1, 1]} : vector<2x1024xf32> to vector<2x256xf32>
    %11 = arith.maximumf %9, %10 : vector<2x256xf32>
    %12 = vector.extract_strided_slice %8 {offsets = [0, 512], sizes = [2, 256], strides = [1, 1]} : vector<2x1024xf32> to vector<2x256xf32>
    %13 = vector.extract_strided_slice %8 {offsets = [0, 768], sizes = [2, 256], strides = [1, 1]} : vector<2x1024xf32> to vector<2x256xf32>
    %14 = arith.maximumf %12, %13 : vector<2x256xf32>
    %15 = arith.maximumf %11, %14 : vector<2x256xf32>
    %16 = arith.truncf %15 : vector<2x256xf32> to vector<2x256xbf16>
    %c0_6 = arith.constant 0 : index
    %c0_7 = arith.constant 0 : index
    %17 = vector.load %arg4[%c0_6, %c0_7] : memref<256x768xbf16, #tpu.memory_space<vmem>>, vector<256x768xbf16>
    %cst_8 = arith.constant dense<0.000000e+00> : vector<2x768xf32>
    %18 = tpu.matmul %16, %17, %cst_8 {dimension_numbers = #tpu.dot_dimension_numbers<[1], [0], [0], [1], [0, 0, 1, 1], [], []>} : vector<2x256xbf16>, vector<256x768xbf16>, vector<2x768xf32> -> vector<2x768xf32>
    %c0_9 = arith.constant 0 : index
    %c0_10 = arith.constant 0 : index
    %19 = vector.load %arg5[%c0_9, %c0_10] : memref<1x768xf32, #tpu.memory_space<vmem>>, vector<1x768xf32>
    %20 = vector.broadcast %19 : vector<1x768xf32> to vector<2x768xf32>
    %21 = arith.addf %18, %20 : vector<2x768xf32>
    %22 = vector.extract_strided_slice %21 {offsets = [0, 0], sizes = [2, 128], strides = [1, 1]} : vector<2x768xf32> to vector<2x128xf32>
    %23 = vector.extract_strided_slice %21 {offsets = [0, 256], sizes = [2, 128], strides = [1, 1]} : vector<2x768xf32> to vector<2x128xf32>
    %24 = vector.extract_strided_slice %21 {offsets = [0, 512], sizes = [2, 128], strides = [1, 1]} : vector<2x768xf32> to vector<2x128xf32>
    %cst_11 = arith.constant dense<0.000000e+00> : vector<2x2xf32>
    %25 = tpu.matmul %22, %23, %cst_11 {dimension_numbers = #tpu.dot_dimension_numbers<[1], [1], [0], [0], [0, 0, 1, 0], [], []>} : vector<2x128xf32>, vector<2x128xf32>, vector<2x2xf32> -> vector<2x2xf32>
    %cst_12 = arith.constant 0.0883883461 : f32
    %26 = vector.broadcast %cst_12 : f32 to vector<2x2xf32>
    %27 = arith.mulf %25, %26 : vector<2x2xf32>
    %cst_13 = arith.constant dense<0xFF800000> : vector<2xf32>
    %28 = vector.multi_reduction <maximumf>, %27, %cst_13 [1] : vector<2x2xf32> to vector<2xf32>
    %29 = vector.shape_cast %28 : vector<2xf32> to vector<2x1xf32>
    %30 = vector.broadcast %29 : vector<2x1xf32> to vector<2x2xf32>
    %31 = arith.subf %27, %30 : vector<2x2xf32>
    %32 = math.exp %31 : vector<2x2xf32>
    %cst_14 = arith.constant dense<0.000000e+00> : vector<2xf32>
    %33 = vector.multi_reduction <add>, %32, %cst_14 [1] : vector<2x2xf32> to vector<2xf32>
    %34 = vector.shape_cast %33 : vector<2xf32> to vector<2x1xf32>
    %35 = tpu.reciprocal %34 {approx = true} : vector<2x1xf32> -> vector<2x1xf32>
    %36 = vector.broadcast %35 : vector<2x1xf32> to vector<2x2xf32>
    %37 = arith.mulf %32, %36 : vector<2x2xf32>
    %cst_15 = arith.constant dense<0.000000e+00> : vector<2x128xf32>
    %38 = tpu.matmul %37, %24, %cst_15 {dimension_numbers = #tpu.dot_dimension_numbers<[1], [0], [0], [1], [0, 0, 1, 1], [], []>} : vector<2x2xf32>, vector<2x128xf32>, vector<2x128xf32> -> vector<2x128xf32>
    %39 = arith.truncf %38 : vector<2x128xf32> to vector<2x128xbf16>
    %c0_16 = arith.constant 0 : index
    %c0_17 = arith.constant 0 : index
    %40 = vector.load %arg6[%c0_16, %c0_17] : memref<256x256xbf16, #tpu.memory_space<vmem>>, vector<128x256xbf16>
    %cst_18 = arith.constant dense<0.000000e+00> : vector<2x256xf32>
    %41 = tpu.matmul %39, %40, %cst_18 {dimension_numbers = #tpu.dot_dimension_numbers<[1], [0], [0], [1], [0, 0, 1, 1], [], []>} : vector<2x128xbf16>, vector<128x256xbf16>, vector<2x256xf32> -> vector<2x256xf32>
    %42 = vector.extract_strided_slice %21 {offsets = [0, 128], sizes = [2, 128], strides = [1, 1]} : vector<2x768xf32> to vector<2x128xf32>
    %43 = vector.extract_strided_slice %21 {offsets = [0, 384], sizes = [2, 128], strides = [1, 1]} : vector<2x768xf32> to vector<2x128xf32>
    %44 = vector.extract_strided_slice %21 {offsets = [0, 640], sizes = [2, 128], strides = [1, 1]} : vector<2x768xf32> to vector<2x128xf32>
    %cst_19 = arith.constant dense<0.000000e+00> : vector<2x2xf32>
    %45 = tpu.matmul %42, %43, %cst_19 {dimension_numbers = #tpu.dot_dimension_numbers<[1], [1], [0], [0], [0, 0, 1, 0], [], []>} : vector<2x128xf32>, vector<2x128xf32>, vector<2x2xf32> -> vector<2x2xf32>
    %cst_20 = arith.constant 0.0883883461 : f32
    %46 = vector.broadcast %cst_20 : f32 to vector<2x2xf32>
    %47 = arith.mulf %45, %46 : vector<2x2xf32>
    %cst_21 = arith.constant dense<0xFF800000> : vector<2xf32>
    %48 = vector.multi_reduction <maximumf>, %47, %cst_21 [1] : vector<2x2xf32> to vector<2xf32>
    %49 = vector.shape_cast %48 : vector<2xf32> to vector<2x1xf32>
    %50 = vector.broadcast %49 : vector<2x1xf32> to vector<2x2xf32>
    %51 = arith.subf %47, %50 : vector<2x2xf32>
    %52 = math.exp %51 : vector<2x2xf32>
    %cst_22 = arith.constant dense<0.000000e+00> : vector<2xf32>
    %53 = vector.multi_reduction <add>, %52, %cst_22 [1] : vector<2x2xf32> to vector<2xf32>
    %54 = vector.shape_cast %53 : vector<2xf32> to vector<2x1xf32>
    %55 = tpu.reciprocal %54 {approx = true} : vector<2x1xf32> -> vector<2x1xf32>
    %56 = vector.broadcast %55 : vector<2x1xf32> to vector<2x2xf32>
    %57 = arith.mulf %52, %56 : vector<2x2xf32>
    %cst_23 = arith.constant dense<0.000000e+00> : vector<2x128xf32>
    %58 = tpu.matmul %57, %44, %cst_23 {dimension_numbers = #tpu.dot_dimension_numbers<[1], [0], [0], [1], [0, 0, 1, 1], [], []>} : vector<2x2xf32>, vector<2x128xf32>, vector<2x128xf32> -> vector<2x128xf32>
    %59 = arith.truncf %58 : vector<2x128xf32> to vector<2x128xbf16>
    %c128 = arith.constant 128 : index
    %c0_24 = arith.constant 0 : index
    %60 = vector.load %arg6[%c128, %c0_24] : memref<256x256xbf16, #tpu.memory_space<vmem>>, vector<128x256xbf16>
    %cst_25 = arith.constant dense<0.000000e+00> : vector<2x256xf32>
    %61 = tpu.matmul %59, %60, %cst_25 {dimension_numbers = #tpu.dot_dimension_numbers<[1], [0], [0], [1], [0, 0, 1, 1], [], []>} : vector<2x128xbf16>, vector<128x256xbf16>, vector<2x256xf32> -> vector<2x256xf32>
    %62 = arith.addf %41, %61 : vector<2x256xf32>
    %63 = arith.addf %15, %62 : vector<2x256xf32>
    %c0_26 = arith.constant 0 : index
    %c0_27 = arith.constant 0 : index
    %64 = vector.load %arg7[%c0_26, %c0_27] : memref<1x256xf32, #tpu.memory_space<vmem>>, vector<1x256xf32>
    %65 = vector.broadcast %64 : vector<1x256xf32> to vector<2x256xf32>
    %66 = arith.addf %63, %65 : vector<2x256xf32>
    %c0_28 = arith.constant 0 : index
    %c0_29 = arith.constant 0 : index
    %67 = vector.load %arg8[%c0_28, %c0_29] : memref<1x256xf32, #tpu.memory_space<vmem>>, vector<1x256xf32>
    %c0_30 = arith.constant 0 : index
    %c0_31 = arith.constant 0 : index
    %68 = vector.load %arg9[%c0_30, %c0_31] : memref<1x256xf32, #tpu.memory_space<vmem>>, vector<1x256xf32>
    %cst_32 = arith.constant dense<0.000000e+00> : vector<2xf32>
    %69 = vector.multi_reduction <add>, %66, %cst_32 [1] : vector<2x256xf32> to vector<2xf32>
    %70 = vector.shape_cast %69 : vector<2xf32> to vector<2x1xf32>
    %cst_33 = arith.constant 2.560000e+02 : f32
    %71 = vector.broadcast %cst_33 : f32 to vector<2x1xf32>
    %72 = arith.divf %70, %71 : vector<2x1xf32>
    %73 = vector.broadcast %72 : vector<2x1xf32> to vector<2x256xf32>
    %74 = arith.subf %66, %73 : vector<2x256xf32>
    %75 = arith.mulf %74, %74 : vector<2x256xf32>
    %cst_34 = arith.constant dense<0.000000e+00> : vector<2xf32>
    %76 = vector.multi_reduction <add>, %75, %cst_34 [1] : vector<2x256xf32> to vector<2xf32>
    %77 = vector.shape_cast %76 : vector<2xf32> to vector<2x1xf32>
    %cst_35 = arith.constant 2.560000e+02 : f32
    %78 = vector.broadcast %cst_35 : f32 to vector<2x1xf32>
    %79 = arith.divf %77, %78 : vector<2x1xf32>
    %cst_36 = arith.constant 9.99999974E-6 : f32
    %80 = vector.broadcast %cst_36 : f32 to vector<2x1xf32>
    %81 = arith.addf %79, %80 : vector<2x1xf32>
    %82 = math.rsqrt %81 : vector<2x1xf32>
    %83 = vector.broadcast %82 : vector<2x1xf32> to vector<2x256xf32>
    %84 = arith.mulf %74, %83 : vector<2x256xf32>
    %85 = vector.broadcast %67 : vector<1x256xf32> to vector<2x256xf32>
    %86 = arith.mulf %84, %85 : vector<2x256xf32>
    %87 = vector.broadcast %68 : vector<1x256xf32> to vector<2x256xf32>
    %88 = arith.addf %86, %87 : vector<2x256xf32>
    %89 = arith.truncf %88 : vector<2x256xf32> to vector<2x256xbf16>
    %c0_37 = arith.constant 0 : index
    %c0_38 = arith.constant 0 : index
    %90 = vector.load %arg10[%c0_37, %c0_38] : memref<256x256xbf16, #tpu.memory_space<vmem>>, vector<256x256xbf16>
    %cst_39 = arith.constant dense<0.000000e+00> : vector<2x256xf32>
    %91 = tpu.matmul %89, %90, %cst_39 {dimension_numbers = #tpu.dot_dimension_numbers<[1], [0], [0], [1], [0, 0, 1, 1], [], []>} : vector<2x256xbf16>, vector<256x256xbf16>, vector<2x256xf32> -> vector<2x256xf32>
    %c0_40 = arith.constant 0 : index
    %c0_41 = arith.constant 0 : index
    %92 = vector.load %arg11[%c0_40, %c0_41] : memref<1x256xf32, #tpu.memory_space<vmem>>, vector<1x256xf32>
    %93 = vector.broadcast %92 : vector<1x256xf32> to vector<2x256xf32>
    %94 = arith.addf %91, %93 : vector<2x256xf32>
    %cst_42 = arith.constant 0.000000e+00 : f32
    %95 = vector.broadcast %cst_42 : f32 to vector<2x256xf32>
    %96 = arith.maximumf %94, %95 : vector<2x256xf32>
    %97 = arith.truncf %96 : vector<2x256xf32> to vector<2x256xbf16>
    %c0_43 = arith.constant 0 : index
    %c0_44 = arith.constant 0 : index
    %98 = vector.load %arg12[%c0_43, %c0_44] : memref<256x256xbf16, #tpu.memory_space<vmem>>, vector<256x256xbf16>
    %cst_45 = arith.constant dense<0.000000e+00> : vector<2x256xf32>
    %99 = tpu.matmul %97, %98, %cst_45 {dimension_numbers = #tpu.dot_dimension_numbers<[1], [0], [0], [1], [0, 0, 1, 1], [], []>} : vector<2x256xbf16>, vector<256x256xbf16>, vector<2x256xf32> -> vector<2x256xf32>
    %c0_46 = arith.constant 0 : index
    %c0_47 = arith.constant 0 : index
    %100 = vector.load %arg13[%c0_46, %c0_47] : memref<1x256xf32, #tpu.memory_space<vmem>>, vector<1x256xf32>
    %101 = vector.broadcast %100 : vector<1x256xf32> to vector<2x256xf32>
    %102 = arith.addf %99, %101 : vector<2x256xf32>
    %103 = arith.addf %88, %102 : vector<2x256xf32>
    %c0_48 = arith.constant 0 : index
    %c0_49 = arith.constant 0 : index
    %104 = vector.load %arg14[%c0_48, %c0_49] : memref<1x256xf32, #tpu.memory_space<vmem>>, vector<1x256xf32>
    %c0_50 = arith.constant 0 : index
    %c0_51 = arith.constant 0 : index
    %105 = vector.load %arg15[%c0_50, %c0_51] : memref<1x256xf32, #tpu.memory_space<vmem>>, vector<1x256xf32>
    %cst_52 = arith.constant dense<0.000000e+00> : vector<2xf32>
    %106 = vector.multi_reduction <add>, %103, %cst_52 [1] : vector<2x256xf32> to vector<2xf32>
    %107 = vector.shape_cast %106 : vector<2xf32> to vector<2x1xf32>
    %cst_53 = arith.constant 2.560000e+02 : f32
    %108 = vector.broadcast %cst_53 : f32 to vector<2x1xf32>
    %109 = arith.divf %107, %108 : vector<2x1xf32>
    %110 = vector.broadcast %109 : vector<2x1xf32> to vector<2x256xf32>
    %111 = arith.subf %103, %110 : vector<2x256xf32>
    %112 = arith.mulf %111, %111 : vector<2x256xf32>
    %cst_54 = arith.constant dense<0.000000e+00> : vector<2xf32>
    %113 = vector.multi_reduction <add>, %112, %cst_54 [1] : vector<2x256xf32> to vector<2xf32>
    %114 = vector.shape_cast %113 : vector<2xf32> to vector<2x1xf32>
    %cst_55 = arith.constant 2.560000e+02 : f32
    %115 = vector.broadcast %cst_55 : f32 to vector<2x1xf32>
    %116 = arith.divf %114, %115 : vector<2x1xf32>
    %cst_56 = arith.constant 9.99999974E-6 : f32
    %117 = vector.broadcast %cst_56 : f32 to vector<2x1xf32>
    %118 = arith.addf %116, %117 : vector<2x1xf32>
    %119 = math.rsqrt %118 : vector<2x1xf32>
    %120 = vector.broadcast %119 : vector<2x1xf32> to vector<2x256xf32>
    %121 = arith.mulf %111, %120 : vector<2x256xf32>
    %122 = vector.broadcast %104 : vector<1x256xf32> to vector<2x256xf32>
    %123 = arith.mulf %121, %122 : vector<2x256xf32>
    %124 = vector.broadcast %105 : vector<1x256xf32> to vector<2x256xf32>
    %125 = arith.addf %123, %124 : vector<2x256xf32>
    %126 = arith.truncf %125 : vector<2x256xf32> to vector<2x256xbf16>
    %c0_57 = arith.constant 0 : index
    %c0_58 = arith.constant 0 : index
    %127 = vector.load %arg16[%c0_57, %c0_58] : memref<256x128xbf16, #tpu.memory_space<vmem>>, vector<256x128xbf16>
    %cst_59 = arith.constant dense<0.000000e+00> : vector<2x128xf32>
    %128 = tpu.matmul %126, %127, %cst_59 {dimension_numbers = #tpu.dot_dimension_numbers<[1], [0], [0], [1], [0, 0, 1, 1], [], []>} : vector<2x256xbf16>, vector<256x128xbf16>, vector<2x128xf32> -> vector<2x128xf32>
    %c0_60 = arith.constant 0 : index
    %c0_61 = arith.constant 0 : index
    %129 = vector.load %arg17[%c0_60, %c0_61] : memref<1x128xf32, #tpu.memory_space<vmem>>, vector<1x128xf32>
    %130 = vector.broadcast %129 : vector<1x128xf32> to vector<2x128xf32>
    %131 = arith.addf %128, %130 : vector<2x128xf32>
    %c0_62 = arith.constant 0 : index
    %c0_63 = arith.constant 0 : index
    %c0_64 = arith.constant 0 : index
    %132 = vector.load %arg18[%c0_62, %c0_63, %c0_64] : memref<2x2x128xf32, #tpu.memory_space<vmem>>, vector<1x2x128xf32>
    %133 = vector.shape_cast %132 : vector<1x2x128xf32> to vector<2x128xf32>
    %134 = vector.shape_cast %131 : vector<2x128xf32> to vector<1x2x128xf32>
    tpu.vector_store %arg18[%c0_62, %c0_63, %c0_64], %134 {strides = array<i32>} : memref<2x2x128xf32, #tpu.memory_space<vmem>>, vector<1x2x128xf32>,
    %135 = arith.truncf %15 : vector<2x256xf32> to vector<2x256xbf16>
    %c0_65 = arith.constant 0 : index
    %c0_66 = arith.constant 0 : index
    %136 = vector.load %arg16[%c0_65, %c0_66] : memref<256x128xbf16, #tpu.memory_space<vmem>>, vector<256x128xbf16>
    %cst_67 = arith.constant dense<0.000000e+00> : vector<2x128xf32>
    %137 = tpu.matmul %135, %136, %cst_67 {dimension_numbers = #tpu.dot_dimension_numbers<[1], [0], [0], [1], [0, 0, 1, 1], [], []>} : vector<2x256xbf16>, vector<256x128xbf16>, vector<2x128xf32> -> vector<2x128xf32>
    %c0_68 = arith.constant 0 : index
    %c0_69 = arith.constant 0 : index
    %138 = vector.load %arg17[%c0_68, %c0_69] : memref<1x128xf32, #tpu.memory_space<vmem>>, vector<1x128xf32>
    %139 = vector.broadcast %138 : vector<1x128xf32> to vector<2x128xf32>
    %140 = arith.addf %137, %139 : vector<2x128xf32>
    %c1 = arith.constant 1 : index
    %c0_70 = arith.constant 0 : index
    %c0_71 = arith.constant 0 : index
    %141 = vector.load %arg18[%c1, %c0_70, %c0_71] : memref<2x2x128xf32, #tpu.memory_space<vmem>>, vector<1x2x128xf32>
    %142 = vector.shape_cast %141 : vector<1x2x128xf32> to vector<2x128xf32>
    %143 = vector.shape_cast %140 : vector<2x128xf32> to vector<1x2x128xf32>
    tpu.vector_store %arg18[%c1, %c0_70, %c0_71], %143 {strides = array<i32>} : memref<2x2x128xf32, #tpu.memory_space<vmem>>, vector<1x2x128xf32>,
    return
  }
  func.func @transform_0(%arg0: i32) -> (i32, i32) {
    %c0_i32 = arith.constant 0 : i32
    %c0_i32_0 = arith.constant 0 : i32
    %c0_i32_1 = arith.constant 0 : i32
    return %c0_i32, %c0_i32_0 : i32, i32
  }
  func.func @transform_1(%arg0: i32) -> (i32, i32) {
    %c0_i32 = arith.constant 0 : i32
    %c0_i32_0 = arith.constant 0 : i32
    %c0_i32_1 = arith.constant 0 : i32
    return %c0_i32, %c0_i32_0 : i32, i32
  }
  func.func @transform_2(%arg0: i32) -> (i32, i32) {
    %c0_i32 = arith.constant 0 : i32
    %c0_i32_0 = arith.constant 0 : i32
    %c0_i32_1 = arith.constant 0 : i32
    return %c0_i32, %c0_i32_0 : i32, i32
  }
  func.func @transform_3(%arg0: i32) -> (i32, i32) {
    %c0_i32 = arith.constant 0 : i32
    %c0_i32_0 = arith.constant 0 : i32
    %c0_i32_1 = arith.constant 0 : i32
    return %c0_i32, %c0_i32_0 : i32, i32
  }
  func.func @transform_4(%arg0: i32) -> (i32, i32) {
    %c0_i32 = arith.constant 0 : i32
    %c0_i32_0 = arith.constant 0 : i32
    %c0_i32_1 = arith.constant 0 : i32
    return %c0_i32, %c0_i32_0 : i32, i32
  }
  func.func @transform_5(%arg0: i32) -> (i32, i32) {
    %c0_i32 = arith.constant 0 : i32
    %c0_i32_0 = arith.constant 0 : i32
    %c0_i32_1 = arith.constant 0 : i32
    return %c0_i32, %c0_i32_0 : i32, i32
  }
  func.func @transform_6(%arg0: i32) -> (i32, i32) {
    %c0_i32 = arith.constant 0 : i32
    %c0_i32_0 = arith.constant 0 : i32
    %c0_i32_1 = arith.constant 0 : i32
    return %c0_i32, %c0_i32_0 : i32, i32
  }
  func.func @transform_7(%arg0: i32) -> (i32, i32) {
    %c0_i32 = arith.constant 0 : i32
    %c0_i32_0 = arith.constant 0 : i32
    %c0_i32_1 = arith.constant 0 : i32
    return %c0_i32, %c0_i32_0 : i32, i32
  }
  func.func @transform_8(%arg0: i32) -> (i32, i32) {
    %c0_i32 = arith.constant 0 : i32
    %c0_i32_0 = arith.constant 0 : i32
    %c0_i32_1 = arith.constant 0 : i32
    return %c0_i32, %c0_i32_0 : i32, i32
  }
  func.func @transform_9(%arg0: i32) -> (i32, i32) {
    %c0_i32 = arith.constant 0 : i32
    %c0_i32_0 = arith.constant 0 : i32
    %c0_i32_1 = arith.constant 0 : i32
    return %c0_i32, %c0_i32_0 : i32, i32
  }
  func.func @transform_10(%arg0: i32) -> (i32, i32) {
    %c0_i32 = arith.constant 0 : i32
    %c0_i32_0 = arith.constant 0 : i32
    %c0_i32_1 = arith.constant 0 : i32
    return %c0_i32, %c0_i32_0 : i32, i32
  }
  func.func @transform_11(%arg0: i32) -> (i32, i32) {
    %c0_i32 = arith.constant 0 : i32
    %c0_i32_0 = arith.constant 0 : i32
    %c0_i32_1 = arith.constant 0 : i32
    return %c0_i32, %c0_i32_0 : i32, i32
  }
  func.func @transform_12(%arg0: i32) -> (i32, i32) {
    %c0_i32 = arith.constant 0 : i32
    %c0_i32_0 = arith.constant 0 : i32
    %c0_i32_1 = arith.constant 0 : i32
    return %c0_i32, %c0_i32_0 : i32, i32
  }
  func.func @transform_13(%arg0: i32) -> (i32, i32) {
    %c0_i32 = arith.constant 0 : i32
    %c0_i32_0 = arith.constant 0 : i32
    %c0_i32_1 = arith.constant 0 : i32
    return %c0_i32, %c0_i32_0 : i32, i32
  }
  func.func @transform_14(%arg0: i32) -> (i32, i32) {
    %c0_i32 = arith.constant 0 : i32
    %c0_i32_0 = arith.constant 0 : i32
    %c0_i32_1 = arith.constant 0 : i32
    return %c0_i32, %c0_i32_0 : i32, i32
  }
  func.func @transform_15(%arg0: i32) -> (i32, i32) {
    %c0_i32 = arith.constant 0 : i32
    %c0_i32_0 = arith.constant 0 : i32
    %c0_i32_1 = arith.constant 0 : i32
    return %c0_i32, %c0_i32_0 : i32, i32
  }
  func.func @transform_16(%arg0: i32) -> (i32, i32) {
    %c0_i32 = arith.constant 0 : i32
    %c0_i32_0 = arith.constant 0 : i32
    %c0_i32_1 = arith.constant 0 : i32
    return %c0_i32, %c0_i32_0 : i32, i32
  }
  func.func @transform_17(%arg0: i32) -> (i32, i32, i32) {
    %c0_i32 = arith.constant 0 : i32
    %c0_i32_0 = arith.constant 0 : i32
    %c0_i32_1 = arith.constant 0 : i32
    %c0_i32_2 = arith.constant 0 : i32
    return %c0_i32, %c0_i32_0, %c0_i32_1 : i32, i32, i32
  }
}

</mosaic_0001>

<llo_original>
// kernel: cnn_with_batch_forward.1
$region0: #{cnn_with_batch_forward.1}
  #allocation0 [shape = 'u32[]', space=smem, size = 0x4, offset = 0x4, fixed_abs, tag = 'smem constant byte address 0x4 - core index']
  #allocation1 [shape = 'u32[144,128]{1,0:T(1,128)}', space=vmem, size = 0x12000, scoped, tag = 'internal scratch']
  %s0 = inlined_call_operand.vmem [shape: f32[2,768], index: 0, kind: input, shape index: {}]
  %s1 = inlined_call_operand.hbm [shape: bf16[768,1024], index: 1, kind: input, shape index: {}]
  %s2 = inlined_call_operand.hbm [shape: f32[1,1024], index: 2, kind: input, shape index: {}]
  %s3 = inlined_call_operand.hbm [shape: bf16[256,768], index: 3, kind: input, shape index: {}]
  %s4 = inlined_call_operand.hbm [shape: f32[1,768], index: 4, kind: input, shape index: {}]
  %s5 = inlined_call_operand.hbm [shape: bf16[256,256], index: 5, kind: input, shape index: {}]
  %s6 = inlined_call_operand.hbm [shape: f32[1,256], index: 6, kind: input, shape index: {}]
  %s7 = inlined_call_operand.hbm [shape: f32[1,256], index: 7, kind: input, shape index: {}]
  %s8 = inlined_call_operand.hbm [shape: f32[1,256], index: 8, kind: input, shape index: {}]
  %s9 = inlined_call_operand.hbm [shape: bf16[256,256], index: 9, kind: input, shape index: {}]
  %s10 = inlined_call_operand.hbm [shape: f32[1,256], index: 10, kind: input, shape index: {}]
  %s11 = inlined_call_operand.hbm [shape: bf16[256,256], index: 11, kind: input, shape index: {}]
  %s12 = inlined_call_operand.hbm [shape: f32[1,256], index: 12, kind: input, shape index: {}]
  %s13 = inlined_call_operand.hbm [shape: f32[1,256], index: 13, kind: input, shape index: {}]
  %s14 = inlined_call_operand.hbm [shape: f32[1,256], index: 14, kind: input, shape index: {}]
  %s15 = inlined_call_operand.hbm [shape: bf16[256,128], index: 15, kind: input, shape index: {}]
  %s16 = inlined_call_operand.hbm [shape: f32[1,128], index: 16, kind: input, shape index: {}]
  %s17 = inlined_call_operand.hbm [shape: f32[2,2,128], index: 17, kind: output, shape index: {}]
  %s18 = sld [smem:[#allocation0]]
  $region142: #{cnn_with_batch_forward.1} parent=0
    _
  %s20 = ssub.s32 1, %s18
  %s21 = scalar_select 0, %s20, %s18
  $region1: #{cnn_with_batch_forward.1} parent=0
    #allocation2 [shape = 'u8[1572864]{0}', space=vmem, size = 0x180000, scoped, tag = 'input window, operand 1, single buffered']
    #allocation3 [shape = 's32[1]{0}', space=sflag, size = 0x4, scoped, tag = 'scoped memory for cnn_with_batch_forward.1']
    #allocation4 [shape = 's32[1]{0}', space=sflag, size = 0x4, scoped, tag = 'scoped memory for cnn_with_batch_forward.1']
    #allocation5 [shape = 'u8[4096]{0}', space=vmem, size = 0x1000, scoped, tag = 'input window, operand 2, single buffered']
    #allocation6 [shape = 's32[1]{0}', space=sflag, size = 0x4, scoped, tag = 'scoped memory for cnn_with_batch_forward.1']
    #allocation7 [shape = 'u8[393216]{0}', space=vmem, size = 0x60000, scoped, tag = 'input window, operand 3, single buffered']
    #allocation8 [shape = 'u8[3072]{0}', space=vmem, size = 0xc00, scoped, tag = 'input window, operand 4, single buffered']
    #allocation9 [shape = 's32[1]{0}', space=sflag, size = 0x4, scoped, tag = 'scoped memory for cnn_with_batch_forward.1']
    #allocation10 [shape = 'u8[131072]{0}', space=vmem, size = 0x20000, scoped, tag = 'input window, operand 5, single buffered']
    #allocation11 [shape = 'u8[1024]{0}', space=vmem, size = 0x400, scoped, tag = 'input window, operand 6, single buffered']
    #allocation12 [shape = 's32[1]{0}', space=sflag, size = 0x4, scoped, tag = 'scoped memory for cnn_with_batch_forward.1']
    #allocation13 [shape = 'u8[1024]{0}', space=vmem, size = 0x400, scoped, tag = 'input window, operand 7, single buffered']
    #allocation14 [shape = 'u8[1024]{0}', space=vmem, size = 0x400, scoped, tag = 'input window, operand 8, single buffered']
    #allocation15 [shape = 's32[1]{0}', space=sflag, size = 0x4, scoped, tag = 'scoped memory for cnn_with_batch_forward.1']
    #allocation16 [shape = 'u8[131072]{0}', space=vmem, size = 0x20000, scoped, tag = 'input window, operand 9, single buffered']
    #allocation17 [shape = 'u8[1024]{0}', space=vmem, size = 0x400, scoped, tag = 'input window, operand 10, single buffered']
    #allocation18 [shape = 's32[1]{0}', space=sflag, size = 0x4, scoped, tag = 'scoped memory for cnn_with_batch_forward.1']
    #allocation19 [shape = 'u8[131072]{0}', space=vmem, size = 0x20000, scoped, tag = 'input window, operand 11, single buffered']
    #allocation20 [shape = 'u8[1024]{0}', space=vmem, size = 0x400, scoped, tag = 'input window, operand 12, single buffered']
    #allocation21 [shape = 's32[1]{0}', space=sflag, size = 0x4, scoped, tag = 'scoped memory for cnn_with_batch_forward.1']
    #allocation22 [shape = 'u8[1024]{0}', space=vmem, size = 0x400, scoped, tag = 'input window, operand 13, single buffered']
    #allocation23 [shape = 'u8[1024]{0}', space=vmem, size = 0x400, scoped, tag = 'input window, operand 14, single buffered']
    #allocation24 [shape = 's32[1]{0}', space=sflag, size = 0x4, scoped, tag = 'scoped memory for cnn_with_batch_forward.1']
    #allocation25 [shape = 'u8[65536]{0}', space=vmem, size = 0x10000, scoped, tag = 'input window, operand 15, single buffered']
    #allocation26 [shape = 'u8[512]{0}', space=vmem, size = 0x400, scoped, tag = 'input window, operand 16, single buffered']
    #allocation27 [shape = 's32[1]{0}', space=sflag, size = 0x4, scoped, tag = 'scoped memory for cnn_with_batch_forward.1']
    #allocation28 [shape = 'u8[2048]{0}', space=vmem, size = 0x800, scoped, tag = 'output window, operand 0, single buffered']
    %22 = vsyncpa [#allocation3], 0
    %23 = vsyncpa [#allocation6], 0
    %24 = vsyncpa [#allocation9], 0
    %25 = vsyncpa [#allocation12], 0
    %26 = vsyncpa [#allocation15], 0
    %27 = vsyncpa [#allocation18], 0
    %28 = vsyncpa [#allocation21], 0
    %29 = vsyncpa [#allocation24], 0
    %30 = vsyncpa [#allocation27], 0
    %31 = vsyncpa [#allocation4], 0
    // Predicated region
    $region2: #{cnn_with_batch_forward.1} parent=1 // pred_check
      _
    $region3: #{cnn_with_batch_forward.1} parent=1 // pred_check_branch
      %33 = sbr.rel (0) target = $region5
    $region4: #{cnn_with_batch_forward.1} parent=1 // pred_region
      _
    $region5: #{cnn_with_batch_forward.1} parent=1 // pred_fallthru
      _
    // Predicated region
    $region6: #{cnn_with_batch_forward.1} parent=1 // pred_check
      _
    $region7: #{cnn_with_batch_forward.1} parent=1 // pred_check_branch
      %35 = sbr.rel (0) target = $region9
    $region8: #{cnn_with_batch_forward.1} parent=1 // pred_region
      %s37 = ssub.s32 49152, 49152
      %38 = vsyncadd [#allocation3], %s37
      %s39 = sshll.u32 [#allocation2], 4
      %s40 = int_to_ptr.vmem [resolvable:$true] %s39
      %45 = dma.hbm_to_vmem [thread:$0]  %s1, 49152, %s40, [#allocation3], 512, 512, 32
    $region9: #{cnn_with_batch_forward.1} parent=1 // pred_fallthru
      _
    // Predicated region
    $region10: #{cnn_with_batch_forward.1} parent=1 // pred_check
      _
    $region11: #{cnn_with_batch_forward.1} parent=1 // pred_check_branch
      %47 = sbr.rel (0) target = $region13
    $region12: #{cnn_with_batch_forward.1} parent=1 // pred_region
      %s49 = ssub.s32 128, 128
      %50 = vsyncadd [#allocation6], %s49
      %s52 = sshll.u32 [#allocation5], 4
      %s53 = int_to_ptr.vmem [resolvable:$true] %s52
      %55 = dma.hbm_to_vmem [thread:$0]  %s2, 128, %s53, [#allocation6]
    $region13: #{cnn_with_batch_forward.1} parent=1 // pred_fallthru
      _
    // Predicated region
    $region14: #{cnn_with_batch_forward.1} parent=1 // pred_check
      _
    $region15: #{cnn_with_batch_forward.1} parent=1 // pred_check_branch
      %57 = sbr.rel (0) target = $region17
    $region16: #{cnn_with_batch_forward.1} parent=1 // pred_region
      %s59 = ssub.s32 12288, 12288
      %60 = vsyncadd [#allocation6], %s59
      %s61 = sshll.u32 [#allocation7], 4
      %s62 = int_to_ptr.vmem [resolvable:$true] %s61
      %67 = dma.hbm_to_vmem [thread:$0]  %s3, 12288, %s62, [#allocation6], 384, 384, 24
    $region17: #{cnn_with_batch_forward.1} parent=1 // pred_fallthru
      _
    // Predicated region
    $region18: #{cnn_with_batch_forward.1} parent=1 // pred_check
      _
    $region19: #{cnn_with_batch_forward.1} parent=1 // pred_check_branch
      %69 = sbr.rel (0) target = $region21
    $region20: #{cnn_with_batch_forward.1} parent=1 // pred_region
      %s71 = ssub.s32 96, 96
      %72 = vsyncadd [#allocation9], %s71
      %s74 = sshll.u32 [#allocation8], 4
      %s75 = int_to_ptr.vmem [resolvable:$true] %s74
      %77 = dma.hbm_to_vmem [thread:$0]  %s4, 96, %s75, [#allocation9]
    $region21: #{cnn_with_batch_forward.1} parent=1 // pred_fallthru
      _
    // Predicated region
    $region22: #{cnn_with_batch_forward.1} parent=1 // pred_check
      _
    $region23: #{cnn_with_batch_forward.1} parent=1 // pred_check_branch
      %79 = sbr.rel (0) target = $region25
    $region24: #{cnn_with_batch_forward.1} parent=1 // pred_region
      %s81 = ssub.s32 4096, 4096
      %82 = vsyncadd [#allocation9], %s81
      %s83 = sshll.u32 [#allocation10], 4
      %s84 = int_to_ptr.vmem [resolvable:$true] %s83
      %89 = dma.hbm_to_vmem [thread:$0]  %s5, 4096, %s84, [#allocation9], 128, 128, 8
    $region25: #{cnn_with_batch_forward.1} parent=1 // pred_fallthru
      _
    // Predicated region
    $region26: #{cnn_with_batch_forward.1} parent=1 // pred_check
      _
    $region27: #{cnn_with_batch_forward.1} parent=1 // pred_check_branch
      %91 = sbr.rel (0) target = $region29
    $region28: #{cnn_with_batch_forward.1} parent=1 // pred_region
      %s93 = ssub.s32 32, 32
      %94 = vsyncadd [#allocation12], %s93
      %s96 = sshll.u32 [#allocation11], 4
      %s97 = int_to_ptr.vmem [resolvable:$true] %s96
      %99 = dma.hbm_to_vmem [thread:$0]  %s6, 32, %s97, [#allocation12]
    $region29: #{cnn_with_batch_forward.1} parent=1 // pred_fallthru
      _
    // Predicated region
    $region30: #{cnn_with_batch_forward.1} parent=1 // pred_check
      _
    $region31: #{cnn_with_batch_forward.1} parent=1 // pred_check_branch
      %101 = sbr.rel (0) target = $region33
    $region32: #{cnn_with_batch_forward.1} parent=1 // pred_region
      %s103 = ssub.s32 32, 32
      %104 = vsyncadd [#allocation12], %s103
      %s106 = sshll.u32 [#allocation13], 4
      %s107 = int_to_ptr.vmem [resolvable:$true] %s106
      %109 = dma.hbm_to_vmem [thread:$0]  %s7, 32, %s107, [#allocation12]
    $region33: #{cnn_with_batch_forward.1} parent=1 // pred_fallthru
      _
    // Predicated region
    $region34: #{cnn_with_batch_forward.1} parent=1 // pred_check
      _
    $region35: #{cnn_with_batch_forward.1} parent=1 // pred_check_branch
      %111 = sbr.rel (0) target = $region37
    $region36: #{cnn_with_batch_forward.1} parent=1 // pred_region
      %s113 = ssub.s32 32, 32
      %114 = vsyncadd [#allocation15], %s113
      %s116 = sshll.u32 [#allocation14], 4
      %s117 = int_to_ptr.vmem [resolvable:$true] %s116
      %119 = dma.hbm_to_vmem [thread:$0]  %s8, 32, %s117, [#allocation15]
    $region37: #{cnn_with_batch_forward.1} parent=1 // pred_fallthru
      _
    // Predicated region
    $region38: #{cnn_with_batch_forward.1} parent=1 // pred_check
      _
    $region39: #{cnn_with_batch_forward.1} parent=1 // pred_check_branch
      %121 = sbr.rel (0) target = $region41
    $region40: #{cnn_with_batch_forward.1} parent=1 // pred_region
      %s123 = ssub.s32 4096, 4096
      %124 = vsyncadd [#allocation15], %s123
      %s125 = sshll.u32 [#allocation16], 4
      %s126 = int_to_ptr.vmem [resolvable:$true] %s125
      %131 = dma.hbm_to_vmem [thread:$0]  %s9, 4096, %s126, [#allocation15], 128, 128, 8
    $region41: #{cnn_with_batch_forward.1} parent=1 // pred_fallthru
      _
    // Predicated region
    $region42: #{cnn_with_batch_forward.1} parent=1 // pred_check
      _
    $region43: #{cnn_with_batch_forward.1} parent=1 // pred_check_branch
      %133 = sbr.rel (0) target = $region45
    $region44: #{cnn_with_batch_forward.1} parent=1 // pred_region
      %s135 = ssub.s32 32, 32
      %136 = vsyncadd [#allocation18], %s135
      %s138 = sshll.u32 [#allocation17], 4
      %s139 = int_to_ptr.vmem [resolvable:$true] %s138
      %141 = dma.hbm_to_vmem [thread:$0]  %s10, 32, %s139, [#allocation18]
    $region45: #{cnn_with_batch_forward.1} parent=1 // pred_fallthru
      _
    // Predicated region
    $region46: #{cnn_with_batch_forward.1} parent=1 // pred_check
      _
    $region47: #{cnn_with_batch_forward.1} parent=1 // pred_check_branch
      %143 = sbr.rel (0) target = $region49
    $region48: #{cnn_with_batch_forward.1} parent=1 // pred_region
      %s145 = ssub.s32 4096, 4096
      %146 = vsyncadd [#allocation18], %s145
      %s147 = sshll.u32 [#allocation19], 4
      %s148 = int_to_ptr.vmem [resolvable:$true] %s147
      %153 = dma.hbm_to_vmem [thread:$0]  %s11, 4096, %s148, [#allocation18], 128, 128, 8
    $region49: #{cnn_with_batch_forward.1} parent=1 // pred_fallthru
      _
    // Predicated region
    $region50: #{cnn_with_batch_forward.1} parent=1 // pred_check
      _
    $region51: #{cnn_with_batch_forward.1} parent=1 // pred_check_branch
      %155 = sbr.rel (0) target = $region53
    $region52: #{cnn_with_batch_forward.1} parent=1 // pred_region
      %s157 = ssub.s32 32, 32
      %158 = vsyncadd [#allocation21], %s157
      %s160 = sshll.u32 [#allocation20], 4
      %s161 = int_to_ptr.vmem [resolvable:$true] %s160
      %163 = dma.hbm_to_vmem [thread:$0]  %s12, 32, %s161, [#allocation21]
    $region53: #{cnn_with_batch_forward.1} parent=1 // pred_fallthru
      _
    // Predicated region
    $region54: #{cnn_with_batch_forward.1} parent=1 // pred_check
      _
    $region55: #{cnn_with_batch_forward.1} parent=1 // pred_check_branch
      %165 = sbr.rel (0) target = $region57
    $region56: #{cnn_with_batch_forward.1} parent=1 // pred_region
      %s167 = ssub.s32 32, 32
      %168 = vsyncadd [#allocation21], %s167
      %s170 = sshll.u32 [#allocation22], 4
      %s171 = int_to_ptr.vmem [resolvable:$true] %s170
      %173 = dma.hbm_to_vmem [thread:$0]  %s13, 32, %s171, [#allocation21]
    $region57: #{cnn_with_batch_forward.1} parent=1 // pred_fallthru
      _
    // Predicated region
    $region58: #{cnn_with_batch_forward.1} parent=1 // pred_check
      _
    $region59: #{cnn_with_batch_forward.1} parent=1 // pred_check_branch
      %175 = sbr.rel (0) target = $region61
    $region60: #{cnn_with_batch_forward.1} parent=1 // pred_region
      %s177 = ssub.s32 32, 32
      %178 = vsyncadd [#allocation24], %s177
      %s180 = sshll.u32 [#allocation23], 4
      %s181 = int_to_ptr.vmem [resolvable:$true] %s180
      %183 = dma.hbm_to_vmem [thread:$0]  %s14, 32, %s181, [#allocation24]
    $region61: #{cnn_with_batch_forward.1} parent=1 // pred_fallthru
      _
    // Predicated region
    $region62: #{cnn_with_batch_forward.1} parent=1 // pred_check
      _
    $region63: #{cnn_with_batch_forward.1} parent=1 // pred_check_branch
      %185 = sbr.rel (0) target = $region65
    $region64: #{cnn_with_batch_forward.1} parent=1 // pred_region
      %s187 = ssub.s32 2048, 2048
      %188 = vsyncadd [#allocation24], %s187
      %s189 = sshll.u32 [#allocation25], 4
      %s190 = int_to_ptr.vmem [resolvable:$true] %s189
      %195 = dma.hbm_to_vmem [thread:$0]  %s15, 2048, %s190, [#allocation24], 64, 64, 4
    $region65: #{cnn_with_batch_forward.1} parent=1 // pred_fallthru
      _
    // Predicated region
    $region66: #{cnn_with_batch_forward.1} parent=1 // pred_check
      _
    $region67: #{cnn_with_batch_forward.1} parent=1 // pred_check_branch
      %197 = sbr.rel (0) target = $region69
    $region68: #{cnn_with_batch_forward.1} parent=1 // pred_region
      %s199 = ssub.s32 16, 16
      %200 = vsyncadd [#allocation27], %s199
      %s202 = sshll.u32 [#allocation26], 4
      %s203 = int_to_ptr.vmem [resolvable:$true] %s202
      %205 = dma.hbm_to_vmem [thread:$0]  %s16, 16, %s203, [#allocation27]
    $region69: #{cnn_with_batch_forward.1} parent=1 // pred_fallthru
      _
    // Predicated region
    $region70: #{cnn_with_batch_forward.1} parent=1 // pred_check
      _
    $region71: #{cnn_with_batch_forward.1} parent=1 // pred_check_branch
      %207 = sbr.rel (0) target = $region73
    $region72: #{cnn_with_batch_forward.1} parent=1 // pred_region
      %208 = dma.done [#allocation3], 49152
    $region73: #{cnn_with_batch_forward.1} parent=1 // pred_fallthru
      _
    // Predicated region
    $region74: #{cnn_with_batch_forward.1} parent=1 // pred_check
      _
    $region75: #{cnn_with_batch_forward.1} parent=1 // pred_check_branch
      %210 = sbr.rel (0) target = $region77
    $region76: #{cnn_with_batch_forward.1} parent=1 // pred_region
      %211 = dma.done [#allocation6], 128
    $region77: #{cnn_with_batch_forward.1} parent=1 // pred_fallthru
      _
    // Predicated region
    $region78: #{cnn_with_batch_forward.1} parent=1 // pred_check
      _
    $region79: #{cnn_with_batch_forward.1} parent=1 // pred_check_branch
      %213 = sbr.rel (0) target = $region81
    $region80: #{cnn_with_batch_forward.1} parent=1 // pred_region
      %214 = dma.done [#allocation6], 12288
    $region81: #{cnn_with_batch_forward.1} parent=1 // pred_fallthru
      _
    // Predicated region
    $region82: #{cnn_with_batch_forward.1} parent=1 // pred_check
      _
    $region83: #{cnn_with_batch_forward.1} parent=1 // pred_check_branch
      %216 = sbr.rel (0) target = $region85
    $region84: #{cnn_with_batch_forward.1} parent=1 // pred_region
      %217 = dma.done [#allocation9], 96
    $region85: #{cnn_with_batch_forward.1} parent=1 // pred_fallthru
      _
    // Predicated region
    $region86: #{cnn_with_batch_forward.1} parent=1 // pred_check
      _
    $region87: #{cnn_with_batch_forward.1} parent=1 // pred_check_branch
      %219 = sbr.rel (0) target = $region89
    $region88: #{cnn_with_batch_forward.1} parent=1 // pred_region
      %220 = dma.done [#allocation9], 4096
    $region89: #{cnn_with_batch_forward.1} parent=1 // pred_fallthru
      _
    // Predicated region
    $region90: #{cnn_with_batch_forward.1} parent=1 // pred_check
      _
    $region91: #{cnn_with_batch_forward.1} parent=1 // pred_check_branch
      %222 = sbr.rel (0) target = $region93
    $region92: #{cnn_with_batch_forward.1} parent=1 // pred_region
      %223 = dma.done [#allocation12], 32
    $region93: #{cnn_with_batch_forward.1} parent=1 // pred_fallthru
      _
    // Predicated region
    $region94: #{cnn_with_batch_forward.1} parent=1 // pred_check
      _
    $region95: #{cnn_with_batch_forward.1} parent=1 // pred_check_branch
      %225 = sbr.rel (0) target = $region97
    $region96: #{cnn_with_batch_forward.1} parent=1 // pred_region
      %226 = dma.done [#allocation12], 32
    $region97: #{cnn_with_batch_forward.1} parent=1 // pred_fallthru
      _
    // Predicated region
    $region98: #{cnn_with_batch_forward.1} parent=1 // pred_check
      _
    $region99: #{cnn_with_batch_forward.1} parent=1 // pred_check_branch
      %228 = sbr.rel (0) target = $region101
    $region100: #{cnn_with_batch_forward.1} parent=1 // pred_region
      %229 = dma.done [#allocation15], 32
    $region101: #{cnn_with_batch_forward.1} parent=1 // pred_fallthru
      _
    // Predicated region
    $region102: #{cnn_with_batch_forward.1} parent=1 // pred_check
      _
    $region103: #{cnn_with_batch_forward.1} parent=1 // pred_check_branch
      %231 = sbr.rel (0) target = $region105
    $region104: #{cnn_with_batch_forward.1} parent=1 // pred_region
      %232 = dma.done [#allocation15], 4096
    $region105: #{cnn_with_batch_forward.1} parent=1 // pred_fallthru
      _
    // Predicated region
    $region106: #{cnn_with_batch_forward.1} parent=1 // pred_check
      _
    $region107: #{cnn_with_batch_forward.1} parent=1 // pred_check_branch
      %234 = sbr.rel (0) target = $region109
    $region108: #{cnn_with_batch_forward.1} parent=1 // pred_region
      %235 = dma.done [#allocation18], 32
    $region109: #{cnn_with_batch_forward.1} parent=1 // pred_fallthru
      _
    // Predicated region
    $region110: #{cnn_with_batch_forward.1} parent=1 // pred_check
      _
    $region111: #{cnn_with_batch_forward.1} parent=1 // pred_check_branch
      %237 = sbr.rel (0) target = $region113
    $region112: #{cnn_with_batch_forward.1} parent=1 // pred_region
      %238 = dma.done [#allocation18], 4096
    $region113: #{cnn_with_batch_forward.1} parent=1 // pred_fallthru
      _
    // Predicated region
    $region114: #{cnn_with_batch_forward.1} parent=1 // pred_check
      _
    $region115: #{cnn_with_batch_forward.1} parent=1 // pred_check_branch
      %240 = sbr.rel (0) target = $region117
    $region116: #{cnn_with_batch_forward.1} parent=1 // pred_region
      %241 = dma.done [#allocation21], 32
    $region117: #{cnn_with_batch_forward.1} parent=1 // pred_fallthru
      _
    // Predicated region
    $region118: #{cnn_with_batch_forward.1} parent=1 // pred_check
      _
    $region119: #{cnn_with_batch_forward.1} parent=1 // pred_check_branch
      %243 = sbr.rel (0) target = $region121
    $region120: #{cnn_with_batch_forward.1} parent=1 // pred_region
      %244 = dma.done [#allocation21], 32
    $region121: #{cnn_with_batch_forward.1} parent=1 // pred_fallthru
      _
    // Predicated region
    $region122: #{cnn_with_batch_forward.1} parent=1 // pred_check
      _
    $region123: #{cnn_with_batch_forward.1} parent=1 // pred_check_branch
      %246 = sbr.rel (0) target = $region125
    $region124: #{cnn_with_batch_forward.1} parent=1 // pred_region
      %247 = dma.done [#allocation24], 32
    $region125: #{cnn_with_batch_forward.1} parent=1 // pred_fallthru
      _
    // Predicated region
    $region126: #{cnn_with_batch_forward.1} parent=1 // pred_check
      _
    $region127: #{cnn_with_batch_forward.1} parent=1 // pred_check_branch
      %249 = sbr.rel (0) target = $region129
    $region128: #{cnn_with_batch_forward.1} parent=1 // pred_region
      %250 = dma.done [#allocation24], 2048
    $region129: #{cnn_with_batch_forward.1} parent=1 // pred_fallthru
      _
    // Predicated region
    $region130: #{cnn_with_batch_forward.1} parent=1 // pred_check
      _
    $region131: #{cnn_with_batch_forward.1} parent=1 // pred_check_branch
      %252 = sbr.rel (0) target = $region133
    $region132: #{cnn_with_batch_forward.1} parent=1 // pred_region
      %253 = dma.done [#allocation27], 16
    $region133: #{cnn_with_batch_forward.1} parent=1 // pred_fallthru
      _
    %v255 = vld [vmem:[%s0] sm:$0xff]
    %v256 = vld [vmem:[%s0 + $0x8] sm:$0xf]
    %v259 = vcombine.high %v255, %v255
    %v261 = vunpack.c.l.s4 1983009808
    %v262 = vunpack.c.0.s8 %v261
    %v263 = vlaneseq
    %v264 = vshrl.u32 %v263, 7
    %v265 = vsub.s32 %v262, %v264
    %v266 = vrot.slane %v255, %v265
    %v268 = vunpack.c.l.s4 1983009808
    %v269 = vunpack.c.0.s8 %v268
    %v270 = vlaneseq
    %v271 = vshrl.u32 %v270, 7
    %v272 = vsub.s32 %v269, %v271
    %v273 = vrot.slane %v259, %v272
    %v274 = vcombine.high %v266, %v266
    %v275 = vcombine.high %v273, %v273
    %v277 = vunpack.c.l.s4 1983009808
    %v278 = vunpack.c.0.s8 %v277
    %v279 = vlaneseq
    %v280 = vshrl.u32 %v279, 7
    %v281 = vsub.s32 %v278, %v280
    %v282 = vrot.slane %v256, %v281
    %v283 = vcombine.high %v282, %v282
    %v290 = vpack.c.bf16 %v266, %v266
    %v291 = vpack.c.bf16 %v274, %v274
    %v292 = vpack.c.bf16 %v273, %v273
    %v293 = vpack.c.bf16 %v275, %v275
    %v294 = vpack.c.bf16 %v282, %v282
    %v295 = vpack.c.bf16 %v283, %v283
    %v296 = vld [vmem:[#allocation2] sm:$0xff]
    %v297 = vld [vmem:[#allocation2 + $0x8] sm:$0xff]
    %v298 = vld [vmem:[#allocation2 + $0x10] sm:$0xff]
    %v299 = vld [vmem:[#allocation2 + $0x18] sm:$0xff]
    %v300 = vld [vmem:[#allocation2 + $0x20] sm:$0xff]
    %v301 = vld [vmem:[#allocation2 + $0x28] sm:$0xff]
    %v302 = vld [vmem:[#allocation2 + $0x30] sm:$0xff]
    %v303 = vld [vmem:[#allocation2 + $0x38] sm:$0xff]
    %v304 = vld [vmem:[#allocation2 + $0x40] sm:$0xff]
    %v305 = vld [vmem:[#allocation2 + $0x48] sm:$0xff]
    %v306 = vld [vmem:[#allocation2 + $0x50] sm:$0xff]
    %v307 = vld [vmem:[#allocation2 + $0x58] sm:$0xff]
    %v308 = vld [vmem:[#allocation2 + $0x60] sm:$0xff]
    %v309 = vld [vmem:[#allocation2 + $0x68] sm:$0xff]
    %v310 = vld [vmem:[#allocation2 + $0x70] sm:$0xff]
    %v311 = vld [vmem:[#allocation2 + $0x78] sm:$0xff]
    %v312 = vld [vmem:[#allocation2 + $0x80] sm:$0xff]
    %v313 = vld [vmem:[#allocation2 + $0x88] sm:$0xff]
    %v314 = vld [vmem:[#allocation2 + $0x90] sm:$0xff]
    %v315 = vld [vmem:[#allocation2 + $0x98] sm:$0xff]
    %v316 = vld [vmem:[#allocation2 + $0xa0] sm:$0xff]
    %v317 = vld [vmem:[#allocation2 + $0xa8] sm:$0xff]
    %v318 = vld [vmem:[#allocation2 + $0xb0] sm:$0xff]
    %v319 = vld [vmem:[#allocation2 + $0xb8] sm:$0xff]
    %v320 = vld [vmem:[#allocation2 + $0xc0] sm:$0xff]
    %v321 = vld [vmem:[#allocation2 + $0xc8] sm:$0xff]
    %v322 = vld [vmem:[#allocation2 + $0xd0] sm:$0xff]
    %v323 = vld [vmem:[#allocation2 + $0xd8] sm:$0xff]
    %v324 = vld [vmem:[#allocation2 + $0xe0] sm:$0xff]
    %v325 = vld [vmem:[#allocation2 + $0xe8] sm:$0xff]
    %v326 = vld [vmem:[#allocation2 + $0xf0] sm:$0xff]
    %v327 = vld [vmem:[#allocation2 + $0xf8] sm:$0xff]
    %v328 = vld [vmem:[#allocation2 + $0x100] sm:$0xff]
    %v329 = vld [vmem:[#allocation2 + $0x108] sm:$0xff]
    %v330 = vld [vmem:[#allocation2 + $0x110] sm:$0xff]
    %v331 = vld [vmem:[#allocation2 + $0x118] sm:$0xff]
    %v332 = vld [vmem:[#allocation2 + $0x120] sm:$0xff]
    %v333 = vld [vmem:[#allocation2 + $0x128] sm:$0xff]
    %v334 = vld [vmem:[#allocation2 + $0x130] sm:$0xff]
    %v335 = vld [vmem:[#allocation2 + $0x138] sm:$0xff]
    %v336 = vld [vmem:[#allocation2 + $0x140] sm:$0xff]
    %v337 = vld [vmem:[#allocation2 + $0x148] sm:$0xff]
    %v338 = vld [vmem:[#allocation2 + $0x150] sm:$0xff]
    %v339 = vld [vmem:[#allocation2 + $0x158] sm:$0xff]
    %v340 = vld [vmem:[#allocation2 + $0x160] sm:$0xff]
    %v341 = vld [vmem:[#allocation2 + $0x168] sm:$0xff]
    %v342 = vld [vmem:[#allocation2 + $0x170] sm:$0xff]
    %v343 = vld [vmem:[#allocation2 + $0x178] sm:$0xff]
    %v344 = vld [vmem:[#allocation2 + $0x180] sm:$0xff]
    %v345 = vld [vmem:[#allocation2 + $0x188] sm:$0xff]
    %v346 = vld [vmem:[#allocation2 + $0x190] sm:$0xff]
    %v347 = vld [vmem:[#allocation2 + $0x198] sm:$0xff]
    %v348 = vld [vmem:[#allocation2 + $0x1a0] sm:$0xff]
    %v349 = vld [vmem:[#allocation2 + $0x1a8] sm:$0xff]
    %v350 = vld [vmem:[#allocation2 + $0x1b0] sm:$0xff]
    %v351 = vld [vmem:[#allocation2 + $0x1b8] sm:$0xff]
    %v352 = vld [vmem:[#allocation2 + $0x1c0] sm:$0xff]
    %v353 = vld [vmem:[#allocation2 + $0x1c8] sm:$0xff]
    %v354 = vld [vmem:[#allocation2 + $0x1d0] sm:$0xff]
    %v355 = vld [vmem:[#allocation2 + $0x1d8] sm:$0xff]
    %v356 = vld [vmem:[#allocation2 + $0x1e0] sm:$0xff]
    %v357 = vld [vmem:[#allocation2 + $0x1e8] sm:$0xff]
    %v358 = vld [vmem:[#allocation2 + $0x1f0] sm:$0xff]
    %v359 = vld [vmem:[#allocation2 + $0x1f8] sm:$0xff]
    %v360 = vld [vmem:[#allocation2 + $0x200] sm:$0xff]
    %v361 = vld [vmem:[#allocation2 + $0x208] sm:$0xff]
    %v362 = vld [vmem:[#allocation2 + $0x210] sm:$0xff]
    %v363 = vld [vmem:[#allocation2 + $0x218] sm:$0xff]
    %v364 = vld [vmem:[#allocation2 + $0x220] sm:$0xff]
    %v365 = vld [vmem:[#allocation2 + $0x228] sm:$0xff]
    %v366 = vld [vmem:[#allocation2 + $0x230] sm:$0xff]
    %v367 = vld [vmem:[#allocation2 + $0x238] sm:$0xff]
    %v368 = vld [vmem:[#allocation2 + $0x240] sm:$0xff]
    %v369 = vld [vmem:[#allocation2 + $0x248] sm:$0xff]
    %v370 = vld [vmem:[#allocation2 + $0x250] sm:$0xff]
    %v371 = vld [vmem:[#allocation2 + $0x258] sm:$0xff]
    %v372 = vld [vmem:[#allocation2 + $0x260] sm:$0xff]
    %v373 = vld [vmem:[#allocation2 + $0x268] sm:$0xff]
    %v374 = vld [vmem:[#allocation2 + $0x270] sm:$0xff]
    %v375 = vld [vmem:[#allocation2 + $0x278] sm:$0xff]
    %v376 = vld [vmem:[#allocation2 + $0x280] sm:$0xff]
    %v377 = vld [vmem:[#allocation2 + $0x288] sm:$0xff]
    %v378 = vld [vmem:[#allocation2 + $0x290] sm:$0xff]
    %v379 = vld [vmem:[#allocation2 + $0x298] sm:$0xff]
    %v380 = vld [vmem:[#allocation2 + $0x2a0] sm:$0xff]
    %v381 = vld [vmem:[#allocation2 + $0x2a8] sm:$0xff]
    %v382 = vld [vmem:[#allocation2 + $0x2b0] sm:$0xff]
    %v383 = vld [vmem:[#allocation2 + $0x2b8] sm:$0xff]
    %v384 = vld [vmem:[#allocation2 + $0x2c0] sm:$0xff]
    %v385 = vld [vmem:[#allocation2 + $0x2c8] sm:$0xff]
    %v386 = vld [vmem:[#allocation2 + $0x2d0] sm:$0xff]
    %v387 = vld [vmem:[#allocation2 + $0x2d8] sm:$0xff]
    %v388 = vld [vmem:[#allocation2 + $0x2e0] sm:$0xff]
    %v389 = vld [vmem:[#allocation2 + $0x2e8] sm:$0xff]
    %v390 = vld [vmem:[#allocation2 + $0x2f0] sm:$0xff]
    %v391 = vld [vmem:[#allocation2 + $0x2f8] sm:$0xff]
    %v392 = vld [vmem:[#allocation2 + $0x300] sm:$0xff]
    %v393 = vld [vmem:[#allocation2 + $0x308] sm:$0xff]
    %v394 = vld [vmem:[#allocation2 + $0x310] sm:$0xff]
    %v395 = vld [vmem:[#allocation2 + $0x318] sm:$0xff]
    %v396 = vld [vmem:[#allocation2 + $0x320] sm:$0xff]
    %v397 = vld [vmem:[#allocation2 + $0x328] sm:$0xff]
    %v398 = vld [vmem:[#allocation2 + $0x330] sm:$0xff]
    %v399 = vld [vmem:[#allocation2 + $0x338] sm:$0xff]
    %v400 = vld [vmem:[#allocation2 + $0x340] sm:$0xff]
    %v401 = vld [vmem:[#allocation2 + $0x348] sm:$0xff]
    %v402 = vld [vmem:[#allocation2 + $0x350] sm:$0xff]
    %v403 = vld [vmem:[#allocation2 + $0x358] sm:$0xff]
    %v404 = vld [vmem:[#allocation2 + $0x360] sm:$0xff]
    %v405 = vld [vmem:[#allocation2 + $0x368] sm:$0xff]
    %v406 = vld [vmem:[#allocation2 + $0x370] sm:$0xff]
    %v407 = vld [vmem:[#allocation2 + $0x378] sm:$0xff]
    %v408 = vld [vmem:[#allocation2 + $0x380] sm:$0xff]
    %v409 = vld [vmem:[#allocation2 + $0x388] sm:$0xff]
    %v410 = vld [vmem:[#allocation2 + $0x390] sm:$0xff]
    %v411 = vld [vmem:[#allocation2 + $0x398] sm:$0xff]
    %v412 = vld [vmem:[#allocation2 + $0x3a0] sm:$0xff]
    %v413 = vld [vmem:[#allocation2 + $0x3a8] sm:$0xff]
    %v414 = vld [vmem:[#allocation2 + $0x3b0] sm:$0xff]
    %v415 = vld [vmem:[#allocation2 + $0x3b8] sm:$0xff]
    %v416 = vld [vmem:[#allocation2 + $0x3c0] sm:$0xff]
    %v417 = vld [vmem:[#allocation2 + $0x3c8] sm:$0xff]
    %v418 = vld [vmem:[#allocation2 + $0x3d0] sm:$0xff]
    %v419 = vld [vmem:[#allocation2 + $0x3d8] sm:$0xff]
    %v420 = vld [vmem:[#allocation2 + $0x3e0] sm:$0xff]
    %v421 = vld [vmem:[#allocation2 + $0x3e8] sm:$0xff]
    %v422 = vld [vmem:[#allocation2 + $0x3f0] sm:$0xff]
    %v423 = vld [vmem:[#allocation2 + $0x3f8] sm:$0xff]
    %v424 = vld [vmem:[#allocation2 + $0x400] sm:$0xff]
    %v425 = vld [vmem:[#allocation2 + $0x408] sm:$0xff]
    %v426 = vld [vmem:[#allocation2 + $0x410] sm:$0xff]
    %v427 = vld [vmem:[#allocation2 + $0x418] sm:$0xff]
    %v428 = vld [vmem:[#allocation2 + $0x420] sm:$0xff]
    %v429 = vld [vmem:[#allocation2 + $0x428] sm:$0xff]
    %v430 = vld [vmem:[#allocation2 + $0x430] sm:$0xff]
    %v431 = vld [vmem:[#allocation2 + $0x438] sm:$0xff]
    %v432 = vld [vmem:[#allocation2 + $0x440] sm:$0xff]
    %v433 = vld [vmem:[#allocation2 + $0x448] sm:$0xff]
    %v434 = vld [vmem:[#allocation2 + $0x450] sm:$0xff]
    %v435 = vld [vmem:[#allocation2 + $0x458] sm:$0xff]
    %v436 = vld [vmem:[#allocation2 + $0x460] sm:$0xff]
    %v437 = vld [vmem:[#allocation2 + $0x468] sm:$0xff]
    %v438 = vld [vmem:[#allocation2 + $0x470] sm:$0xff]
    %v439 = vld [vmem:[#allocation2 + $0x478] sm:$0xff]
    %v440 = vld [vmem:[#allocation2 + $0x480] sm:$0xff]
    %v441 = vld [vmem:[#allocation2 + $0x488] sm:$0xff]
    %v442 = vld [vmem:[#allocation2 + $0x490] sm:$0xff]
    %v443 = vld [vmem:[#allocation2 + $0x498] sm:$0xff]
    %v444 = vld [vmem:[#allocation2 + $0x4a0] sm:$0xff]
    %v445 = vld [vmem:[#allocation2 + $0x4a8] sm:$0xff]
    %v446 = vld [vmem:[#allocation2 + $0x4b0] sm:$0xff]
    %v447 = vld [vmem:[#allocation2 + $0x4b8] sm:$0xff]
    %v448 = vld [vmem:[#allocation2 + $0x4c0] sm:$0xff]
    %v449 = vld [vmem:[#allocation2 + $0x4c8] sm:$0xff]
    %v450 = vld [vmem:[#allocation2 + $0x4d0] sm:$0xff]
    %v451 = vld [vmem:[#allocation2 + $0x4d8] sm:$0xff]
    %v452 = vld [vmem:[#allocation2 + $0x4e0] sm:$0xff]
    %v453 = vld [vmem:[#allocation2 + $0x4e8] sm:$0xff]
    %v454 = vld [vmem:[#allocation2 + $0x4f0] sm:$0xff]
    %v455 = vld [vmem:[#allocation2 + $0x4f8] sm:$0xff]
    %v456 = vld [vmem:[#allocation2 + $0x500] sm:$0xff]
    %v457 = vld [vmem:[#allocation2 + $0x508] sm:$0xff]
    %v458 = vld [vmem:[#allocation2 + $0x510] sm:$0xff]
    %v459 = vld [vmem:[#allocation2 + $0x518] sm:$0xff]
    %v460 = vld [vmem:[#allocation2 + $0x520] sm:$0xff]
    %v461 = vld [vmem:[#allocation2 + $0x528] sm:$0xff]
    %v462 = vld [vmem:[#allocation2 + $0x530] sm:$0xff]
    %v463 = vld [vmem:[#allocation2 + $0x538] sm:$0xff]
    %v464 = vld [vmem:[#allocation2 + $0x540] sm:$0xff]
    %v465 = vld [vmem:[#allocation2 + $0x548] sm:$0xff]
    %v466 = vld [vmem:[#allocation2 + $0x550] sm:$0xff]
    %v467 = vld [vmem:[#allocation2 + $0x558] sm:$0xff]
    %v468 = vld [vmem:[#allocation2 + $0x560] sm:$0xff]
    %v469 = vld [vmem:[#allocation2 + $0x568] sm:$0xff]
    %v470 = vld [vmem:[#allocation2 + $0x570] sm:$0xff]
    %v471 = vld [vmem:[#allocation2 + $0x578] sm:$0xff]
    %v472 = vld [vmem:[#allocation2 + $0x580] sm:$0xff]
    %v473 = vld [vmem:[#allocation2 + $0x588] sm:$0xff]
    %v474 = vld [vmem:[#allocation2 + $0x590] sm:$0xff]
    %v475 = vld [vmem:[#allocation2 + $0x598] sm:$0xff]
    %v476 = vld [vmem:[#allocation2 + $0x5a0] sm:$0xff]
    %v477 = vld [vmem:[#allocation2 + $0x5a8] sm:$0xff]
    %v478 = vld [vmem:[#allocation2 + $0x5b0] sm:$0xff]
    %v479 = vld [vmem:[#allocation2 + $0x5b8] sm:$0xff]
    %v480 = vld [vmem:[#allocation2 + $0x5c0] sm:$0xff]
    %v481 = vld [vmem:[#allocation2 + $0x5c8] sm:$0xff]
    %v482 = vld [vmem:[#allocation2 + $0x5d0] sm:$0xff]
    %v483 = vld [vmem:[#allocation2 + $0x5d8] sm:$0xff]
    %v484 = vld [vmem:[#allocation2 + $0x5e0] sm:$0xff]
    %v485 = vld [vmem:[#allocation2 + $0x5e8] sm:$0xff]
    %v486 = vld [vmem:[#allocation2 + $0x5f0] sm:$0xff]
    %v487 = vld [vmem:[#allocation2 + $0x5f8] sm:$0xff]
    %v488 = vld [vmem:[#allocation2 + $0x600] sm:$0xff]
    %v489 = vld [vmem:[#allocation2 + $0x608] sm:$0xff]
    %v490 = vld [vmem:[#allocation2 + $0x610] sm:$0xff]
    %v491 = vld [vmem:[#allocation2 + $0x618] sm:$0xff]
    %v492 = vld [vmem:[#allocation2 + $0x620] sm:$0xff]
    %v493 = vld [vmem:[#allocation2 + $0x628] sm:$0xff]
    %v494 = vld [vmem:[#allocation2 + $0x630] sm:$0xff]
    %v495 = vld [vmem:[#allocation2 + $0x638] sm:$0xff]
    %v496 = vld [vmem:[#allocation2 + $0x640] sm:$0xff]
    %v497 = vld [vmem:[#allocation2 + $0x648] sm:$0xff]
    %v498 = vld [vmem:[#allocation2 + $0x650] sm:$0xff]
    %v499 = vld [vmem:[#allocation2 + $0x658] sm:$0xff]
    %v500 = vld [vmem:[#allocation2 + $0x660] sm:$0xff]
    %v501 = vld [vmem:[#allocation2 + $0x668] sm:$0xff]
    %v502 = vld [vmem:[#allocation2 + $0x670] sm:$0xff]
    %v503 = vld [vmem:[#allocation2 + $0x678] sm:$0xff]
    %v504 = vld [vmem:[#allocation2 + $0x680] sm:$0xff]
    %v505 = vld [vmem:[#allocation2 + $0x688] sm:$0xff]
    %v506 = vld [vmem:[#allocation2 + $0x690] sm:$0xff]
    %v507 = vld [vmem:[#allocation2 + $0x698] sm:$0xff]
    %v508 = vld [vmem:[#allocation2 + $0x6a0] sm:$0xff]
    %v509 = vld [vmem:[#allocation2 + $0x6a8] sm:$0xff]
    %v510 = vld [vmem:[#allocation2 + $0x6b0] sm:$0xff]
    %v511 = vld [vmem:[#allocation2 + $0x6b8] sm:$0xff]
    %v512 = vld [vmem:[#allocation2 + $0x6c0] sm:$0xff]
    %v513 = vld [vmem:[#allocation2 + $0x6c8] sm:$0xff]
    %v514 = vld [vmem:[#allocation2 + $0x6d0] sm:$0xff]
    %v515 = vld [vmem:[#allocation2 + $0x6d8] sm:$0xff]
    %v516 = vld [vmem:[#allocation2 + $0x6e0] sm:$0xff]
    %v517 = vld [vmem:[#allocation2 + $0x6e8] sm:$0xff]
    %v518 = vld [vmem:[#allocation2 + $0x6f0] sm:$0xff]
    %v519 = vld [vmem:[#allocation2 + $0x6f8] sm:$0xff]
    %v520 = vld [vmem:[#allocation2 + $0x700] sm:$0xff]
    %v521 = vld [vmem:[#allocation2 + $0x708] sm:$0xff]
    %v522 = vld [vmem:[#allocation2 + $0x710] sm:$0xff]
    %v523 = vld [vmem:[#allocation2 + $0x718] sm:$0xff]
    %v524 = vld [vmem:[#allocation2 + $0x720] sm:$0xff]
    %v525 = vld [vmem:[#allocation2 + $0x728] sm:$0xff]
    %v526 = vld [vmem:[#allocation2 + $0x730] sm:$0xff]
    %v527 = vld [vmem:[#allocation2 + $0x738] sm:$0xff]
    %v528 = vld [vmem:[#allocation2 + $0x740] sm:$0xff]
    %v529 = vld [vmem:[#allocation2 + $0x748] sm:$0xff]
    %v530 = vld [vmem:[#allocation2 + $0x750] sm:$0xff]
    %v531 = vld [vmem:[#allocation2 + $0x758] sm:$0xff]
    %v532 = vld [vmem:[#allocation2 + $0x760] sm:$0xff]
    %v533 = vld [vmem:[#allocation2 + $0x768] sm:$0xff]
    %v534 = vld [vmem:[#allocation2 + $0x770] sm:$0xff]
    %v535 = vld [vmem:[#allocation2 + $0x778] sm:$0xff]
    %v536 = vld [vmem:[#allocation2 + $0x780] sm:$0xff]
    %v537 = vld [vmem:[#allocation2 + $0x788] sm:$0xff]
    %v538 = vld [vmem:[#allocation2 + $0x790] sm:$0xff]
    %v539 = vld [vmem:[#allocation2 + $0x798] sm:$0xff]
    %v540 = vld [vmem:[#allocation2 + $0x7a0] sm:$0xff]
    %v541 = vld [vmem:[#allocation2 + $0x7a8] sm:$0xff]
    %v542 = vld [vmem:[#allocation2 + $0x7b0] sm:$0xff]
    %v543 = vld [vmem:[#allocation2 + $0x7b8] sm:$0xff]
    %v544 = vld [vmem:[#allocation2 + $0x7c0] sm:$0xff]
    %v545 = vld [vmem:[#allocation2 + $0x7c8] sm:$0xff]
    %v546 = vld [vmem:[#allocation2 + $0x7d0] sm:$0xff]
    %v547 = vld [vmem:[#allocation2 + $0x7d8] sm:$0xff]
    %v548 = vld [vmem:[#allocation2 + $0x7e0] sm:$0xff]
    %v549 = vld [vmem:[#allocation2 + $0x7e8] sm:$0xff]
    %v550 = vld [vmem:[#allocation2 + $0x7f0] sm:$0xff]
    %v551 = vld [vmem:[#allocation2 + $0x7f8] sm:$0xff]
    %v552 = vld [vmem:[#allocation2 + $0x800] sm:$0xff]
    %v553 = vld [vmem:[#allocation2 + $0x808] sm:$0xff]
    %v554 = vld [vmem:[#allocation2 + $0x810] sm:$0xff]
    %v555 = vld [vmem:[#allocation2 + $0x818] sm:$0xff]
    %v556 = vld [vmem:[#allocation2 + $0x820] sm:$0xff]
    %v557 = vld [vmem:[#allocation2 + $0x828] sm:$0xff]
    %v558 = vld [vmem:[#allocation2 + $0x830] sm:$0xff]
    %v559 = vld [vmem:[#allocation2 + $0x838] sm:$0xff]
    %v560 = vld [vmem:[#allocation2 + $0x840] sm:$0xff]
    %v561 = vld [vmem:[#allocation2 + $0x848] sm:$0xff]
    %v562 = vld [vmem:[#allocation2 + $0x850] sm:$0xff]
    %v563 = vld [vmem:[#allocation2 + $0x858] sm:$0xff]
    %v564 = vld [vmem:[#allocation2 + $0x860] sm:$0xff]
    %v565 = vld [vmem:[#allocation2 + $0x868] sm:$0xff]
    %v566 = vld [vmem:[#allocation2 + $0x870] sm:$0xff]
    %v567 = vld [vmem:[#allocation2 + $0x878] sm:$0xff]
    %v568 = vld [vmem:[#allocation2 + $0x880] sm:$0xff]
    %v569 = vld [vmem:[#allocation2 + $0x888] sm:$0xff]
    %v570 = vld [vmem:[#allocation2 + $0x890] sm:$0xff]
    %v571 = vld [vmem:[#allocation2 + $0x898] sm:$0xff]
    %v572 = vld [vmem:[#allocation2 + $0x8a0] sm:$0xff]
    %v573 = vld [vmem:[#allocation2 + $0x8a8] sm:$0xff]
    %v574 = vld [vmem:[#allocation2 + $0x8b0] sm:$0xff]
    %v575 = vld [vmem:[#allocation2 + $0x8b8] sm:$0xff]
    %v576 = vld [vmem:[#allocation2 + $0x8c0] sm:$0xff]
    %v577 = vld [vmem:[#allocation2 + $0x8c8] sm:$0xff]
    %v578 = vld [vmem:[#allocation2 + $0x8d0] sm:$0xff]
    %v579 = vld [vmem:[#allocation2 + $0x8d8] sm:$0xff]
    %v580 = vld [vmem:[#allocation2 + $0x8e0] sm:$0xff]
    %v581 = vld [vmem:[#allocation2 + $0x8e8] sm:$0xff]
    %v582 = vld [vmem:[#allocation2 + $0x8f0] sm:$0xff]
    %v583 = vld [vmem:[#allocation2 + $0x8f8] sm:$0xff]
    %v584 = vld [vmem:[#allocation2 + $0x900] sm:$0xff]
    %v585 = vld [vmem:[#allocation2 + $0x908] sm:$0xff]
    %v586 = vld [vmem:[#allocation2 + $0x910] sm:$0xff]
    %v587 = vld [vmem:[#allocation2 + $0x918] sm:$0xff]
    %v588 = vld [vmem:[#allocation2 + $0x920] sm:$0xff]
    %v589 = vld [vmem:[#allocation2 + $0x928] sm:$0xff]
    %v590 = vld [vmem:[#allocation2 + $0x930] sm:$0xff]
    %v591 = vld [vmem:[#allocation2 + $0x938] sm:$0xff]
    %v592 = vld [vmem:[#allocation2 + $0x940] sm:$0xff]
    %v593 = vld [vmem:[#allocation2 + $0x948] sm:$0xff]
    %v594 = vld [vmem:[#allocation2 + $0x950] sm:$0xff]
    %v595 = vld [vmem:[#allocation2 + $0x958] sm:$0xff]
    %v596 = vld [vmem:[#allocation2 + $0x960] sm:$0xff]
    %v597 = vld [vmem:[#allocation2 + $0x968] sm:$0xff]
    %v598 = vld [vmem:[#allocation2 + $0x970] sm:$0xff]
    %v599 = vld [vmem:[#allocation2 + $0x978] sm:$0xff]
    %v600 = vld [vmem:[#allocation2 + $0x980] sm:$0xff]
    %v601 = vld [vmem:[#allocation2 + $0x988] sm:$0xff]
    %v602 = vld [vmem:[#allocation2 + $0x990] sm:$0xff]
    %v603 = vld [vmem:[#allocation2 + $0x998] sm:$0xff]
    %v604 = vld [vmem:[#allocation2 + $0x9a0] sm:$0xff]
    %v605 = vld [vmem:[#allocation2 + $0x9a8] sm:$0xff]
    %v606 = vld [vmem:[#allocation2 + $0x9b0] sm:$0xff]
    %v607 = vld [vmem:[#allocation2 + $0x9b8] sm:$0xff]
    %v608 = vld [vmem:[#allocation2 + $0x9c0] sm:$0xff]
    %v609 = vld [vmem:[#allocation2 + $0x9c8] sm:$0xff]
    %v610 = vld [vmem:[#allocation2 + $0x9d0] sm:$0xff]
    %v611 = vld [vmem:[#allocation2 + $0x9d8] sm:$0xff]
    %v612 = vld [vmem:[#allocation2 + $0x9e0] sm:$0xff]
    %v613 = vld [vmem:[#allocation2 + $0x9e8] sm:$0xff]
    %v614 = vld [vmem:[#allocation2 + $0x9f0] sm:$0xff]
    %v615 = vld [vmem:[#allocation2 + $0x9f8] sm:$0xff]
    %v616 = vld [vmem:[#allocation2 + $0xa00] sm:$0xff]
    %v617 = vld [vmem:[#allocation2 + $0xa08] sm:$0xff]
    %v618 = vld [vmem:[#allocation2 + $0xa10] sm:$0xff]
    %v619 = vld [vmem:[#allocation2 + $0xa18] sm:$0xff]
    %v620 = vld [vmem:[#allocation2 + $0xa20] sm:$0xff]
    %v621 = vld [vmem:[#allocation2 + $0xa28] sm:$0xff]
    %v622 = vld [vmem:[#allocation2 + $0xa30] sm:$0xff]
    %v623 = vld [vmem:[#allocation2 + $0xa38] sm:$0xff]
    %v624 = vld [vmem:[#allocation2 + $0xa40] sm:$0xff]
    %v625 = vld [vmem:[#allocation2 + $0xa48] sm:$0xff]
    %v626 = vld [vmem:[#allocation2 + $0xa50] sm:$0xff]
    %v627 = vld [vmem:[#allocation2 + $0xa58] sm:$0xff]
    %v628 = vld [vmem:[#allocation2 + $0xa60] sm:$0xff]
    %v629 = vld [vmem:[#allocation2 + $0xa68] sm:$0xff]
    %v630 = vld [vmem:[#allocation2 + $0xa70] sm:$0xff]
    %v631 = vld [vmem:[#allocation2 + $0xa78] sm:$0xff]
    %v632 = vld [vmem:[#allocation2 + $0xa80] sm:$0xff]
    %v633 = vld [vmem:[#allocation2 + $0xa88] sm:$0xff]
    %v634 = vld [vmem:[#allocation2 + $0xa90] sm:$0xff]
    %v635 = vld [vmem:[#allocation2 + $0xa98] sm:$0xff]
    %v636 = vld [vmem:[#allocation2 + $0xaa0] sm:$0xff]
    %v637 = vld [vmem:[#allocation2 + $0xaa8] sm:$0xff]
    %v638 = vld [vmem:[#allocation2 + $0xab0] sm:$0xff]
    %v639 = vld [vmem:[#allocation2 + $0xab8] sm:$0xff]
    %v640 = vld [vmem:[#allocation2 + $0xac0] sm:$0xff]
    %v641 = vld [vmem:[#allocation2 + $0xac8] sm:$0xff]
    %v642 = vld [vmem:[#allocation2 + $0xad0] sm:$0xff]
    %v643 = vld [vmem:[#allocation2 + $0xad8] sm:$0xff]
    %v644 = vld [vmem:[#allocation2 + $0xae0] sm:$0xff]
    %v645 = vld [vmem:[#allocation2 + $0xae8] sm:$0xff]
    %v646 = vld [vmem:[#allocation2 + $0xaf0] sm:$0xff]
    %v647 = vld [vmem:[#allocation2 + $0xaf8] sm:$0xff]
    %v648 = vld [vmem:[#allocation2 + $0xb00] sm:$0xff]
    %v649 = vld [vmem:[#allocation2 + $0xb08] sm:$0xff]
    %v650 = vld [vmem:[#allocation2 + $0xb10] sm:$0xff]
    %v651 = vld [vmem:[#allocation2 + $0xb18] sm:$0xff]
    %v652 = vld [vmem:[#allocation2 + $0xb20] sm:$0xff]
    %v653 = vld [vmem:[#allocation2 + $0xb28] sm:$0xff]
    %v654 = vld [vmem:[#allocation2 + $0xb30] sm:$0xff]
    %v655 = vld [vmem:[#allocation2 + $0xb38] sm:$0xff]
    %v656 = vld [vmem:[#allocation2 + $0xb40] sm:$0xff]
    %v657 = vld [vmem:[#allocation2 + $0xb48] sm:$0xff]
    %v658 = vld [vmem:[#allocation2 + $0xb50] sm:$0xff]
    %v659 = vld [vmem:[#allocation2 + $0xb58] sm:$0xff]
    %v660 = vld [vmem:[#allocation2 + $0xb60] sm:$0xff]
    %v661 = vld [vmem:[#allocation2 + $0xb68] sm:$0xff]
    %v662 = vld [vmem:[#allocation2 + $0xb70] sm:$0xff]
    %v663 = vld [vmem:[#allocation2 + $0xb78] sm:$0xff]
    %v664 = vld [vmem:[#allocation2 + $0xb80] sm:$0xff]
    %v665 = vld [vmem:[#allocation2 + $0xb88] sm:$0xff]
    %v666 = vld [vmem:[#allocation2 + $0xb90] sm:$0xff]
    %v667 = vld [vmem:[#allocation2 + $0xb98] sm:$0xff]
    %v668 = vld [vmem:[#allocation2 + $0xba0] sm:$0xff]
    %v669 = vld [vmem:[#allocation2 + $0xba8] sm:$0xff]
    %v670 = vld [vmem:[#allocation2 + $0xbb0] sm:$0xff]
    %v671 = vld [vmem:[#allocation2 + $0xbb8] sm:$0xff]
    %v672 = vld [vmem:[#allocation2 + $0xbc0] sm:$0xff]
    %v673 = vld [vmem:[#allocation2 + $0xbc8] sm:$0xff]
    %v674 = vld [vmem:[#allocation2 + $0xbd0] sm:$0xff]
    %v675 = vld [vmem:[#allocation2 + $0xbd8] sm:$0xff]
    %v676 = vld [vmem:[#allocation2 + $0xbe0] sm:$0xff]
    %v677 = vld [vmem:[#allocation2 + $0xbe8] sm:$0xff]
    %v678 = vld [vmem:[#allocation2 + $0xbf0] sm:$0xff]
    %v679 = vld [vmem:[#allocation2 + $0xbf8] sm:$0xff]
    %v680 = vld [vmem:[#allocation5] sm:$0xff]
    %v682 = vlaneseq
    %v683 = vshrl.u32 %v682, 7
    %v684 = vsub.s32 0, %v683
    %v685 = vrot.slane %v680, %v684
    %v686 = vlaneseq
    %v687 = vshrl.u32 %v686, 7
    %v688 = vsub.s32 1, %v687
    %v689 = vrot.slane %v680, %v688
    %v690 = vlaneseq
    %v691 = vshrl.u32 %v690, 7
    %v692 = vsub.s32 2, %v691
    %v693 = vrot.slane %v680, %v692
    %v694 = vlaneseq
    %v695 = vshrl.u32 %v694, 7
    %v696 = vsub.s32 3, %v695
    %v697 = vrot.slane %v680, %v696
    %v698 = vlaneseq
    %v699 = vshrl.u32 %v698, 7
    %v700 = vsub.s32 4, %v699
    %v701 = vrot.slane %v680, %v700
    %v702 = vlaneseq
    %v703 = vshrl.u32 %v702, 7
    %v704 = vsub.s32 5, %v703
    %v705 = vrot.slane %v680, %v704
    %v706 = vlaneseq
    %v707 = vshrl.u32 %v706, 7
    %v708 = vsub.s32 6, %v707
    %v709 = vrot.slane %v680, %v708
    %v710 = vlaneseq
    %v711 = vshrl.u32 %v710, 7
    %v712 = vsub.s32 7, %v711
    %v713 = vrot.slane %v680, %v712
    %v1106 = vunpack.c.l.b16 %v296
    %v1107 = vunpack.c.h.b16 %v296
    %v1108 = vunpack.c.l.b16 %v297
    %v1109 = vunpack.c.h.b16 %v297
    %v1110 = vunpack.c.l.b16 %v298
    %v1111 = vunpack.c.h.b16 %v298
    %v1112 = vunpack.c.l.b16 %v299
    %v1113 = vunpack.c.h.b16 %v299
    %v1114 = vunpack.c.l.b16 %v300
    %v1115 = vunpack.c.h.b16 %v300
    %v1116 = vunpack.c.l.b16 %v301
    %v1117 = vunpack.c.h.b16 %v301
    %v1118 = vunpack.c.l.b16 %v302
    %v1119 = vunpack.c.h.b16 %v302
    %v1120 = vunpack.c.l.b16 %v303
    %v1121 = vunpack.c.h.b16 %v303
    %v1122 = vunpack.c.l.b16 %v304
    %v1123 = vunpack.c.h.b16 %v304
    %v1124 = vunpack.c.l.b16 %v305
    %v1125 = vunpack.c.h.b16 %v305
    %v1126 = vunpack.c.l.b16 %v306
    %v1127 = vunpack.c.h.b16 %v306
    %v1128 = vunpack.c.l.b16 %v307
    %v1129 = vunpack.c.h.b16 %v307
    %v1130 = vunpack.c.l.b16 %v308
    %v1131 = vunpack.c.h.b16 %v308
    %v1132 = vunpack.c.l.b16 %v309
    %v1133 = vunpack.c.h.b16 %v309
    %v1134 = vunpack.c.l.b16 %v310
    %v1135 = vunpack.c.h.b16 %v310
    %v1136 = vunpack.c.l.b16 %v311
    %v1137 = vunpack.c.h.b16 %v311
    %v1138 = vunpack.c.l.b16 %v312
    %v1139 = vunpack.c.h.b16 %v312
    %v1140 = vunpack.c.l.b16 %v313
    %v1141 = vunpack.c.h.b16 %v313
    %v1142 = vunpack.c.l.b16 %v314
    %v1143 = vunpack.c.h.b16 %v314
    %v1144 = vunpack.c.l.b16 %v315
    %v1145 = vunpack.c.h.b16 %v315
    %v1146 = vunpack.c.l.b16 %v316
    %v1147 = vunpack.c.h.b16 %v316
    %v1148 = vunpack.c.l.b16 %v317
    %v1149 = vunpack.c.h.b16 %v317
    %v1150 = vunpack.c.l.b16 %v318
    %v1151 = vunpack.c.h.b16 %v318
    %v1152 = vunpack.c.l.b16 %v319
    %v1153 = vunpack.c.h.b16 %v319
    %v1154 = vunpack.c.l.b16 %v320
    %v1155 = vunpack.c.h.b16 %v320
    %v1156 = vunpack.c.l.b16 %v321
    %v1157 = vunpack.c.h.b16 %v321
    %v1158 = vunpack.c.l.b16 %v322
    %v1159 = vunpack.c.h.b16 %v322
    %v1160 = vunpack.c.l.b16 %v323
    %v1161 = vunpack.c.h.b16 %v323
    %v1162 = vunpack.c.l.b16 %v324
    %v1163 = vunpack.c.h.b16 %v324
    %v1164 = vunpack.c.l.b16 %v325
    %v1165 = vunpack.c.h.b16 %v325
    %v1166 = vunpack.c.l.b16 %v326
    %v1167 = vunpack.c.h.b16 %v326
    %v1168 = vunpack.c.l.b16 %v327
    %v1169 = vunpack.c.h.b16 %v327
    %v1170 = vunpack.c.l.b16 %v328
    %v1171 = vunpack.c.h.b16 %v328
    %v1172 = vunpack.c.l.b16 %v329
    %v1173 = vunpack.c.h.b16 %v329
    %v1174 = vunpack.c.l.b16 %v330
    %v1175 = vunpack.c.h.b16 %v330
    %v1176 = vunpack.c.l.b16 %v331
    %v1177 = vunpack.c.h.b16 %v331
    %v1178 = vunpack.c.l.b16 %v332
    %v1179 = vunpack.c.h.b16 %v332
    %v1180 = vunpack.c.l.b16 %v333
    %v1181 = vunpack.c.h.b16 %v333
    %v1182 = vunpack.c.l.b16 %v334
    %v1183 = vunpack.c.h.b16 %v334
    %v1184 = vunpack.c.l.b16 %v335
    %v1185 = vunpack.c.h.b16 %v335
    %v1186 = vunpack.c.l.b16 %v336
    %v1187 = vunpack.c.h.b16 %v336
    %v1188 = vunpack.c.l.b16 %v337
    %v1189 = vunpack.c.h.b16 %v337
    %v1190 = vunpack.c.l.b16 %v338
    %v1191 = vunpack.c.h.b16 %v338
    %v1192 = vunpack.c.l.b16 %v339
    %v1193 = vunpack.c.h.b16 %v339
    %v1194 = vunpack.c.l.b16 %v340
    %v1195 = vunpack.c.h.b16 %v340
    %v1196 = vunpack.c.l.b16 %v341
    %v1197 = vunpack.c.h.b16 %v341
    %v1198 = vunpack.c.l.b16 %v342
    %v1199 = vunpack.c.h.b16 %v342
    %v1200 = vunpack.c.l.b16 %v343
    %v1201 = vunpack.c.h.b16 %v343
    %v1202 = vunpack.c.l.b16 %v344
    %v1203 = vunpack.c.h.b16 %v344
    %v1204 = vunpack.c.l.b16 %v345
    %v1205 = vunpack.c.h.b16 %v345
    %v1206 = vunpack.c.l.b16 %v346
    %v1207 = vunpack.c.h.b16 %v346
    %v1208 = vunpack.c.l.b16 %v347
    %v1209 = vunpack.c.h.b16 %v347
    %v1210 = vunpack.c.l.b16 %v348
    %v1211 = vunpack.c.h.b16 %v348
    %v1212 = vunpack.c.l.b16 %v349
    %v1213 = vunpack.c.h.b16 %v349
    %v1214 = vunpack.c.l.b16 %v350
    %v1215 = vunpack.c.h.b16 %v350
    %v1216 = vunpack.c.l.b16 %v351
    %v1217 = vunpack.c.h.b16 %v351
    %v1218 = vunpack.c.l.b16 %v352
    %v1219 = vunpack.c.h.b16 %v352
    %v1220 = vunpack.c.l.b16 %v353
    %v1221 = vunpack.c.h.b16 %v353
    %v1222 = vunpack.c.l.b16 %v354
    %v1223 = vunpack.c.h.b16 %v354
    %v1224 = vunpack.c.l.b16 %v355
    %v1225 = vunpack.c.h.b16 %v355
    %v1226 = vunpack.c.l.b16 %v356
    %v1227 = vunpack.c.h.b16 %v356
    %v1228 = vunpack.c.l.b16 %v357
    %v1229 = vunpack.c.h.b16 %v357
    %v1230 = vunpack.c.l.b16 %v358
    %v1231 = vunpack.c.h.b16 %v358
    %v1232 = vunpack.c.l.b16 %v359
    %v1233 = vunpack.c.h.b16 %v359
    %v1234 = vunpack.c.l.b16 %v360
    %v1235 = vunpack.c.h.b16 %v360
    %v1236 = vunpack.c.l.b16 %v361
    %v1237 = vunpack.c.h.b16 %v361
    %v1238 = vunpack.c.l.b16 %v362
    %v1239 = vunpack.c.h.b16 %v362
    %v1240 = vunpack.c.l.b16 %v363
    %v1241 = vunpack.c.h.b16 %v363
    %v1242 = vunpack.c.l.b16 %v364
    %v1243 = vunpack.c.h.b16 %v364
    %v1244 = vunpack.c.l.b16 %v365
    %v1245 = vunpack.c.h.b16 %v365
    %v1246 = vunpack.c.l.b16 %v366
    %v1247 = vunpack.c.h.b16 %v366
    %v1248 = vunpack.c.l.b16 %v367
    %v1249 = vunpack.c.h.b16 %v367
    %v1250 = vunpack.c.l.b16 %v368
    %v1251 = vunpack.c.h.b16 %v368
    %v1252 = vunpack.c.l.b16 %v369
    %v1253 = vunpack.c.h.b16 %v369
    %v1254 = vunpack.c.l.b16 %v370
    %v1255 = vunpack.c.h.b16 %v370
    %v1256 = vunpack.c.l.b16 %v371
    %v1257 = vunpack.c.h.b16 %v371
    %v1258 = vunpack.c.l.b16 %v372
    %v1259 = vunpack.c.h.b16 %v372
    %v1260 = vunpack.c.l.b16 %v373
    %v1261 = vunpack.c.h.b16 %v373
    %v1262 = vunpack.c.l.b16 %v374
    %v1263 = vunpack.c.h.b16 %v374
    %v1264 = vunpack.c.l.b16 %v375
    %v1265 = vunpack.c.h.b16 %v375
    %v1266 = vunpack.c.l.b16 %v376
    %v1267 = vunpack.c.h.b16 %v376
    %v1268 = vunpack.c.l.b16 %v377
    %v1269 = vunpack.c.h.b16 %v377
    %v1270 = vunpack.c.l.b16 %v378
    %v1271 = vunpack.c.h.b16 %v378
    %v1272 = vunpack.c.l.b16 %v379
    %v1273 = vunpack.c.h.b16 %v379
    %v1274 = vunpack.c.l.b16 %v380
    %v1275 = vunpack.c.h.b16 %v380
    %v1276 = vunpack.c.l.b16 %v381
    %v1277 = vunpack.c.h.b16 %v381
    %v1278 = vunpack.c.l.b16 %v382
    %v1279 = vunpack.c.h.b16 %v382
    %v1280 = vunpack.c.l.b16 %v383
    %v1281 = vunpack.c.h.b16 %v383
    %v1282 = vunpack.c.l.b16 %v384
    %v1283 = vunpack.c.h.b16 %v384
    %v1284 = vunpack.c.l.b16 %v385
    %v1285 = vunpack.c.h.b16 %v385
    %v1286 = vunpack.c.l.b16 %v386
    %v1287 = vunpack.c.h.b16 %v386
    %v1288 = vunpack.c.l.b16 %v387
    %v1289 = vunpack.c.h.b16 %v387
    %v1290 = vunpack.c.l.b16 %v388
    %v1291 = vunpack.c.h.b16 %v388
    %v1292 = vunpack.c.l.b16 %v389
    %v1293 = vunpack.c.h.b16 %v389
    %v1294 = vunpack.c.l.b16 %v390
    %v1295 = vunpack.c.h.b16 %v390
    %v1296 = vunpack.c.l.b16 %v391
    %v1297 = vunpack.c.h.b16 %v391
    %v1298 = vunpack.c.l.b16 %v392
    %v1299 = vunpack.c.h.b16 %v392
    %v1300 = vunpack.c.l.b16 %v393
    %v1301 = vunpack.c.h.b16 %v393
    %v1302 = vunpack.c.l.b16 %v394
    %v1303 = vunpack.c.h.b16 %v394
    %v1304 = vunpack.c.l.b16 %v395
    %v1305 = vunpack.c.h.b16 %v395
    %v1306 = vunpack.c.l.b16 %v396
    %v1307 = vunpack.c.h.b16 %v396
    %v1308 = vunpack.c.l.b16 %v397
    %v1309 = vunpack.c.h.b16 %v397
    %v1310 = vunpack.c.l.b16 %v398
    %v1311 = vunpack.c.h.b16 %v398
    %v1312 = vunpack.c.l.b16 %v399
    %v1313 = vunpack.c.h.b16 %v399
    %v1314 = vunpack.c.l.b16 %v400
    %v1315 = vunpack.c.h.b16 %v400
    %v1316 = vunpack.c.l.b16 %v401
    %v1317 = vunpack.c.h.b16 %v401
    %v1318 = vunpack.c.l.b16 %v402
    %v1319 = vunpack.c.h.b16 %v402
    %v1320 = vunpack.c.l.b16 %v403
    %v1321 = vunpack.c.h.b16 %v403
    %v1322 = vunpack.c.l.b16 %v404
    %v1323 = vunpack.c.h.b16 %v404
    %v1324 = vunpack.c.l.b16 %v405
    %v1325 = vunpack.c.h.b16 %v405
    %v1326 = vunpack.c.l.b16 %v406
    %v1327 = vunpack.c.h.b16 %v406
    %v1328 = vunpack.c.l.b16 %v407
    %v1329 = vunpack.c.h.b16 %v407
    %v1330 = vunpack.c.l.b16 %v408
    %v1331 = vunpack.c.h.b16 %v408
    %v1332 = vunpack.c.l.b16 %v409
    %v1333 = vunpack.c.h.b16 %v409
    %v1334 = vunpack.c.l.b16 %v410
    %v1335 = vunpack.c.h.b16 %v410
    %v1336 = vunpack.c.l.b16 %v411
    %v1337 = vunpack.c.h.b16 %v411
    %v1338 = vunpack.c.l.b16 %v412
    %v1339 = vunpack.c.h.b16 %v412
    %v1340 = vunpack.c.l.b16 %v413
    %v1341 = vunpack.c.h.b16 %v413
    %v1342 = vunpack.c.l.b16 %v414
    %v1343 = vunpack.c.h.b16 %v414
    %v1344 = vunpack.c.l.b16 %v415
    %v1345 = vunpack.c.h.b16 %v415
    %v1346 = vunpack.c.l.b16 %v416
    %v1347 = vunpack.c.h.b16 %v416
    %v1348 = vunpack.c.l.b16 %v417
    %v1349 = vunpack.c.h.b16 %v417
    %v1350 = vunpack.c.l.b16 %v418
    %v1351 = vunpack.c.h.b16 %v418
    %v1352 = vunpack.c.l.b16 %v419
    %v1353 = vunpack.c.h.b16 %v419
    %v1354 = vunpack.c.l.b16 %v420
    %v1355 = vunpack.c.h.b16 %v420
    %v1356 = vunpack.c.l.b16 %v421
    %v1357 = vunpack.c.h.b16 %v421
    %v1358 = vunpack.c.l.b16 %v422
    %v1359 = vunpack.c.h.b16 %v422
    %v1360 = vunpack.c.l.b16 %v423
    %v1361 = vunpack.c.h.b16 %v423
    %v1362 = vunpack.c.l.b16 %v424
    %v1363 = vunpack.c.h.b16 %v424
    %v1364 = vunpack.c.l.b16 %v425
    %v1365 = vunpack.c.h.b16 %v425
    %v1366 = vunpack.c.l.b16 %v426
    %v1367 = vunpack.c.h.b16 %v426
    %v1368 = vunpack.c.l.b16 %v427
    %v1369 = vunpack.c.h.b16 %v427
    %v1370 = vunpack.c.l.b16 %v428
    %v1371 = vunpack.c.h.b16 %v428
    %v1372 = vunpack.c.l.b16 %v429
    %v1373 = vunpack.c.h.b16 %v429
    %v1374 = vunpack.c.l.b16 %v430
    %v1375 = vunpack.c.h.b16 %v430
    %v1376 = vunpack.c.l.b16 %v431
    %v1377 = vunpack.c.h.b16 %v431
    %v1378 = vunpack.c.l.b16 %v432
    %v1379 = vunpack.c.h.b16 %v432
    %v1380 = vunpack.c.l.b16 %v433
    %v1381 = vunpack.c.h.b16 %v433
    %v1382 = vunpack.c.l.b16 %v434
    %v1383 = vunpack.c.h.b16 %v434
    %v1384 = vunpack.c.l.b16 %v435
    %v1385 = vunpack.c.h.b16 %v435
    %v1386 = vunpack.c.l.b16 %v436
    %v1387 = vunpack.c.h.b16 %v436
    %v1388 = vunpack.c.l.b16 %v437
    %v1389 = vunpack.c.h.b16 %v437
    %v1390 = vunpack.c.l.b16 %v438
    %v1391 = vunpack.c.h.b16 %v438
    %v1392 = vunpack.c.l.b16 %v439
    %v1393 = vunpack.c.h.b16 %v439
    %v1394 = vunpack.c.l.b16 %v440
    %v1395 = vunpack.c.h.b16 %v440
    %v1396 = vunpack.c.l.b16 %v441
    %v1397 = vunpack.c.h.b16 %v441
    %v1398 = vunpack.c.l.b16 %v442
    %v1399 = vunpack.c.h.b16 %v442
    %v1400 = vunpack.c.l.b16 %v443
    %v1401 = vunpack.c.h.b16 %v443
    %v1402 = vunpack.c.l.b16 %v444
    %v1403 = vunpack.c.h.b16 %v444
    %v1404 = vunpack.c.l.b16 %v445
    %v1405 = vunpack.c.h.b16 %v445
    %v1406 = vunpack.c.l.b16 %v446
    %v1407 = vunpack.c.h.b16 %v446
    %v1408 = vunpack.c.l.b16 %v447
    %v1409 = vunpack.c.h.b16 %v447
    %v1410 = vunpack.c.l.b16 %v448
    %v1411 = vunpack.c.h.b16 %v448
    %v1412 = vunpack.c.l.b16 %v449
    %v1413 = vunpack.c.h.b16 %v449
    %v1414 = vunpack.c.l.b16 %v450
    %v1415 = vunpack.c.h.b16 %v450
    %v1416 = vunpack.c.l.b16 %v451
    %v1417 = vunpack.c.h.b16 %v451
    %v1418 = vunpack.c.l.b16 %v452
    %v1419 = vunpack.c.h.b16 %v452
    %v1420 = vunpack.c.l.b16 %v453
    %v1421 = vunpack.c.h.b16 %v453
    %v1422 = vunpack.c.l.b16 %v454
    %v1423 = vunpack.c.h.b16 %v454
    %v1424 = vunpack.c.l.b16 %v455
    %v1425 = vunpack.c.h.b16 %v455
    %v1426 = vunpack.c.l.b16 %v456
    %v1427 = vunpack.c.h.b16 %v456
    %v1428 = vunpack.c.l.b16 %v457
    %v1429 = vunpack.c.h.b16 %v457
    %v1430 = vunpack.c.l.b16 %v458
    %v1431 = vunpack.c.h.b16 %v458
    %v1432 = vunpack.c.l.b16 %v459
    %v1433 = vunpack.c.h.b16 %v459
    %v1434 = vunpack.c.l.b16 %v460
    %v1435 = vunpack.c.h.b16 %v460
    %v1436 = vunpack.c.l.b16 %v461
    %v1437 = vunpack.c.h.b16 %v461
    %v1438 = vunpack.c.l.b16 %v462
    %v1439 = vunpack.c.h.b16 %v462
    %v1440 = vunpack.c.l.b16 %v463
    %v1441 = vunpack.c.h.b16 %v463
    %v1442 = vunpack.c.l.b16 %v464
    %v1443 = vunpack.c.h.b16 %v464
    %v1444 = vunpack.c.l.b16 %v465
    %v1445 = vunpack.c.h.b16 %v465
    %v1446 = vunpack.c.l.b16 %v466
    %v1447 = vunpack.c.h.b16 %v466
    %v1448 = vunpack.c.l.b16 %v467
    %v1449 = vunpack.c.h.b16 %v467
    %v1450 = vunpack.c.l.b16 %v468
    %v1451 = vunpack.c.h.b16 %v468
    %v1452 = vunpack.c.l.b16 %v469
    %v1453 = vunpack.c.h.b16 %v469
    %v1454 = vunpack.c.l.b16 %v470
    %v1455 = vunpack.c.h.b16 %v470
    %v1456 = vunpack.c.l.b16 %v471
    %v1457 = vunpack.c.h.b16 %v471
    %v1458 = vunpack.c.l.b16 %v472
    %v1459 = vunpack.c.h.b16 %v472
    %v1460 = vunpack.c.l.b16 %v473
    %v1461 = vunpack.c.h.b16 %v473
    %v1462 = vunpack.c.l.b16 %v474
    %v1463 = vunpack.c.h.b16 %v474
    %v1464 = vunpack.c.l.b16 %v475
    %v1465 = vunpack.c.h.b16 %v475
    %v1466 = vunpack.c.l.b16 %v476
    %v1467 = vunpack.c.h.b16 %v476
    %v1468 = vunpack.c.l.b16 %v477
    %v1469 = vunpack.c.h.b16 %v477
    %v1470 = vunpack.c.l.b16 %v478
    %v1471 = vunpack.c.h.b16 %v478
    %v1472 = vunpack.c.l.b16 %v479
    %v1473 = vunpack.c.h.b16 %v479
    %v1474 = vunpack.c.l.b16 %v480
    %v1475 = vunpack.c.h.b16 %v480
    %v1476 = vunpack.c.l.b16 %v481
    %v1477 = vunpack.c.h.b16 %v481
    %v1478 = vunpack.c.l.b16 %v482
    %v1479 = vunpack.c.h.b16 %v482
    %v1480 = vunpack.c.l.b16 %v483
    %v1481 = vunpack.c.h.b16 %v483
    %v1482 = vunpack.c.l.b16 %v484
    %v1483 = vunpack.c.h.b16 %v484
    %v1484 = vunpack.c.l.b16 %v485
    %v1485 = vunpack.c.h.b16 %v485
    %v1486 = vunpack.c.l.b16 %v486
    %v1487 = vunpack.c.h.b16 %v486
    %v1488 = vunpack.c.l.b16 %v487
    %v1489 = vunpack.c.h.b16 %v487
    %v1490 = vunpack.c.l.b16 %v488
    %v1491 = vunpack.c.h.b16 %v488
    %v1492 = vunpack.c.l.b16 %v489
    %v1493 = vunpack.c.h.b16 %v489
    %v1494 = vunpack.c.l.b16 %v490
    %v1495 = vunpack.c.h.b16 %v490
    %v1496 = vunpack.c.l.b16 %v491
    %v1497 = vunpack.c.h.b16 %v491
    %v1498 = vunpack.c.l.b16 %v492
    %v1499 = vunpack.c.h.b16 %v492
    %v1500 = vunpack.c.l.b16 %v493
    %v1501 = vunpack.c.h.b16 %v493
    %v1502 = vunpack.c.l.b16 %v494
    %v1503 = vunpack.c.h.b16 %v494
    %v1504 = vunpack.c.l.b16 %v495
    %v1505 = vunpack.c.h.b16 %v495
    %v1506 = vunpack.c.l.b16 %v496
    %v1507 = vunpack.c.h.b16 %v496
    %v1508 = vunpack.c.l.b16 %v497
    %v1509 = vunpack.c.h.b16 %v497
    %v1510 = vunpack.c.l.b16 %v498
    %v1511 = vunpack.c.h.b16 %v498
    %v1512 = vunpack.c.l.b16 %v499
    %v1513 = vunpack.c.h.b16 %v499
    %v1514 = vunpack.c.l.b16 %v500
    %v1515 = vunpack.c.h.b16 %v500
    %v1516 = vunpack.c.l.b16 %v501
    %v1517 = vunpack.c.h.b16 %v501
    %v1518 = vunpack.c.l.b16 %v502
    %v1519 = vunpack.c.h.b16 %v502
    %v1520 = vunpack.c.l.b16 %v503
    %v1521 = vunpack.c.h.b16 %v503
    %v1522 = vunpack.c.l.b16 %v504
    %v1523 = vunpack.c.h.b16 %v504
    %v1524 = vunpack.c.l.b16 %v505
    %v1525 = vunpack.c.h.b16 %v505
    %v1526 = vunpack.c.l.b16 %v506
    %v1527 = vunpack.c.h.b16 %v506
    %v1528 = vunpack.c.l.b16 %v507
    %v1529 = vunpack.c.h.b16 %v507
    %v1530 = vunpack.c.l.b16 %v508
    %v1531 = vunpack.c.h.b16 %v508
    %v1532 = vunpack.c.l.b16 %v509
    %v1533 = vunpack.c.h.b16 %v509
    %v1534 = vunpack.c.l.b16 %v510
    %v1535 = vunpack.c.h.b16 %v510
    %v1536 = vunpack.c.l.b16 %v511
    %v1537 = vunpack.c.h.b16 %v511
    %v1538 = vunpack.c.l.b16 %v512
    %v1539 = vunpack.c.h.b16 %v512
    %v1540 = vunpack.c.l.b16 %v513
    %v1541 = vunpack.c.h.b16 %v513
    %v1542 = vunpack.c.l.b16 %v514
    %v1543 = vunpack.c.h.b16 %v514
    %v1544 = vunpack.c.l.b16 %v515
    %v1545 = vunpack.c.h.b16 %v515
    %v1546 = vunpack.c.l.b16 %v516
    %v1547 = vunpack.c.h.b16 %v516
    %v1548 = vunpack.c.l.b16 %v517
    %v1549 = vunpack.c.h.b16 %v517
    %v1550 = vunpack.c.l.b16 %v518
    %v1551 = vunpack.c.h.b16 %v518
    %v1552 = vunpack.c.l.b16 %v519
    %v1553 = vunpack.c.h.b16 %v519
    %v1554 = vunpack.c.l.b16 %v520
    %v1555 = vunpack.c.h.b16 %v520
    %v1556 = vunpack.c.l.b16 %v521
    %v1557 = vunpack.c.h.b16 %v521
    %v1558 = vunpack.c.l.b16 %v522
    %v1559 = vunpack.c.h.b16 %v522
    %v1560 = vunpack.c.l.b16 %v523
    %v1561 = vunpack.c.h.b16 %v523
    %v1562 = vunpack.c.l.b16 %v524
    %v1563 = vunpack.c.h.b16 %v524
    %v1564 = vunpack.c.l.b16 %v525
    %v1565 = vunpack.c.h.b16 %v525
    %v1566 = vunpack.c.l.b16 %v526
    %v1567 = vunpack.c.h.b16 %v526
    %v1568 = vunpack.c.l.b16 %v527
    %v1569 = vunpack.c.h.b16 %v527
    %v1570 = vunpack.c.l.b16 %v528
    %v1571 = vunpack.c.h.b16 %v528
    %v1572 = vunpack.c.l.b16 %v529
    %v1573 = vunpack.c.h.b16 %v529
    %v1574 = vunpack.c.l.b16 %v530
    %v1575 = vunpack.c.h.b16 %v530
    %v1576 = vunpack.c.l.b16 %v531
    %v1577 = vunpack.c.h.b16 %v531
    %v1578 = vunpack.c.l.b16 %v532
    %v1579 = vunpack.c.h.b16 %v532
    %v1580 = vunpack.c.l.b16 %v533
    %v1581 = vunpack.c.h.b16 %v533
    %v1582 = vunpack.c.l.b16 %v534
    %v1583 = vunpack.c.h.b16 %v534
    %v1584 = vunpack.c.l.b16 %v535
    %v1585 = vunpack.c.h.b16 %v535
    %v1586 = vunpack.c.l.b16 %v536
    %v1587 = vunpack.c.h.b16 %v536
    %v1588 = vunpack.c.l.b16 %v537
    %v1589 = vunpack.c.h.b16 %v537
    %v1590 = vunpack.c.l.b16 %v538
    %v1591 = vunpack.c.h.b16 %v538
    %v1592 = vunpack.c.l.b16 %v539
    %v1593 = vunpack.c.h.b16 %v539
    %v1594 = vunpack.c.l.b16 %v540
    %v1595 = vunpack.c.h.b16 %v540
    %v1596 = vunpack.c.l.b16 %v541
    %v1597 = vunpack.c.h.b16 %v541
    %v1598 = vunpack.c.l.b16 %v542
    %v1599 = vunpack.c.h.b16 %v542
    %v1600 = vunpack.c.l.b16 %v543
    %v1601 = vunpack.c.h.b16 %v543
    %v1602 = vunpack.c.l.b16 %v544
    %v1603 = vunpack.c.h.b16 %v544
    %v1604 = vunpack.c.l.b16 %v545
    %v1605 = vunpack.c.h.b16 %v545
    %v1606 = vunpack.c.l.b16 %v546
    %v1607 = vunpack.c.h.b16 %v546
    %v1608 = vunpack.c.l.b16 %v547
    %v1609 = vunpack.c.h.b16 %v547
    %v1610 = vunpack.c.l.b16 %v548
    %v1611 = vunpack.c.h.b16 %v548
    %v1612 = vunpack.c.l.b16 %v549
    %v1613 = vunpack.c.h.b16 %v549
    %v1614 = vunpack.c.l.b16 %v550
    %v1615 = vunpack.c.h.b16 %v550
    %v1616 = vunpack.c.l.b16 %v551
    %v1617 = vunpack.c.h.b16 %v551
    %v1618 = vunpack.c.l.b16 %v552
    %v1619 = vunpack.c.h.b16 %v552
    %v1620 = vunpack.c.l.b16 %v553
    %v1621 = vunpack.c.h.b16 %v553
    %v1622 = vunpack.c.l.b16 %v554
    %v1623 = vunpack.c.h.b16 %v554
    %v1624 = vunpack.c.l.b16 %v555
    %v1625 = vunpack.c.h.b16 %v555
    %v1626 = vunpack.c.l.b16 %v556
    %v1627 = vunpack.c.h.b16 %v556
    %v1628 = vunpack.c.l.b16 %v557
    %v1629 = vunpack.c.h.b16 %v557
    %v1630 = vunpack.c.l.b16 %v558
    %v1631 = vunpack.c.h.b16 %v558
    %v1632 = vunpack.c.l.b16 %v559
    %v1633 = vunpack.c.h.b16 %v559
    %v1634 = vunpack.c.l.b16 %v560
    %v1635 = vunpack.c.h.b16 %v560
    %v1636 = vunpack.c.l.b16 %v561
    %v1637 = vunpack.c.h.b16 %v561
    %v1638 = vunpack.c.l.b16 %v562
    %v1639 = vunpack.c.h.b16 %v562
    %v1640 = vunpack.c.l.b16 %v563
    %v1641 = vunpack.c.h.b16 %v563
    %v1642 = vunpack.c.l.b16 %v564
    %v1643 = vunpack.c.h.b16 %v564
    %v1644 = vunpack.c.l.b16 %v565
    %v1645 = vunpack.c.h.b16 %v565
    %v1646 = vunpack.c.l.b16 %v566
    %v1647 = vunpack.c.h.b16 %v566
    %v1648 = vunpack.c.l.b16 %v567
    %v1649 = vunpack.c.h.b16 %v567
    %v1650 = vunpack.c.l.b16 %v568
    %v1651 = vunpack.c.h.b16 %v568
    %v1652 = vunpack.c.l.b16 %v569
    %v1653 = vunpack.c.h.b16 %v569
    %v1654 = vunpack.c.l.b16 %v570
    %v1655 = vunpack.c.h.b16 %v570
    %v1656 = vunpack.c.l.b16 %v571
    %v1657 = vunpack.c.h.b16 %v571
    %v1658 = vunpack.c.l.b16 %v572
    %v1659 = vunpack.c.h.b16 %v572
    %v1660 = vunpack.c.l.b16 %v573
    %v1661 = vunpack.c.h.b16 %v573
    %v1662 = vunpack.c.l.b16 %v574
    %v1663 = vunpack.c.h.b16 %v574
    %v1664 = vunpack.c.l.b16 %v575
    %v1665 = vunpack.c.h.b16 %v575
    %v1666 = vunpack.c.l.b16 %v576
    %v1667 = vunpack.c.h.b16 %v576
    %v1668 = vunpack.c.l.b16 %v577
    %v1669 = vunpack.c.h.b16 %v577
    %v1670 = vunpack.c.l.b16 %v578
    %v1671 = vunpack.c.h.b16 %v578
    %v1672 = vunpack.c.l.b16 %v579
    %v1673 = vunpack.c.h.b16 %v579
    %v1674 = vunpack.c.l.b16 %v580
    %v1675 = vunpack.c.h.b16 %v580
    %v1676 = vunpack.c.l.b16 %v581
    %v1677 = vunpack.c.h.b16 %v581
    %v1678 = vunpack.c.l.b16 %v582
    %v1679 = vunpack.c.h.b16 %v582
    %v1680 = vunpack.c.l.b16 %v583
    %v1681 = vunpack.c.h.b16 %v583
    %v1682 = vunpack.c.l.b16 %v584
    %v1683 = vunpack.c.h.b16 %v584
    %v1684 = vunpack.c.l.b16 %v585
    %v1685 = vunpack.c.h.b16 %v585
    %v1686 = vunpack.c.l.b16 %v586
    %v1687 = vunpack.c.h.b16 %v586
    %v1688 = vunpack.c.l.b16 %v587
    %v1689 = vunpack.c.h.b16 %v587
    %v1690 = vunpack.c.l.b16 %v588
    %v1691 = vunpack.c.h.b16 %v588
    %v1692 = vunpack.c.l.b16 %v589
    %v1693 = vunpack.c.h.b16 %v589
    %v1694 = vunpack.c.l.b16 %v590
    %v1695 = vunpack.c.h.b16 %v590
    %v1696 = vunpack.c.l.b16 %v591
    %v1697 = vunpack.c.h.b16 %v591
    %v1698 = vunpack.c.l.b16 %v592
    %v1699 = vunpack.c.h.b16 %v592
    %v1700 = vunpack.c.l.b16 %v593
    %v1701 = vunpack.c.h.b16 %v593
    %v1702 = vunpack.c.l.b16 %v594
    %v1703 = vunpack.c.h.b16 %v594
    %v1704 = vunpack.c.l.b16 %v595
    %v1705 = vunpack.c.h.b16 %v595
    %v1706 = vunpack.c.l.b16 %v596
    %v1707 = vunpack.c.h.b16 %v596
    %v1708 = vunpack.c.l.b16 %v597
    %v1709 = vunpack.c.h.b16 %v597
    %v1710 = vunpack.c.l.b16 %v598
    %v1711 = vunpack.c.h.b16 %v598
    %v1712 = vunpack.c.l.b16 %v599
    %v1713 = vunpack.c.h.b16 %v599
    %v1714 = vunpack.c.l.b16 %v600
    %v1715 = vunpack.c.h.b16 %v600
    %v1716 = vunpack.c.l.b16 %v601
    %v1717 = vunpack.c.h.b16 %v601
    %v1718 = vunpack.c.l.b16 %v602
    %v1719 = vunpack.c.h.b16 %v602
    %v1720 = vunpack.c.l.b16 %v603
    %v1721 = vunpack.c.h.b16 %v603
    %v1722 = vunpack.c.l.b16 %v604
    %v1723 = vunpack.c.h.b16 %v604
    %v1724 = vunpack.c.l.b16 %v605
    %v1725 = vunpack.c.h.b16 %v605
    %v1726 = vunpack.c.l.b16 %v606
    %v1727 = vunpack.c.h.b16 %v606
    %v1728 = vunpack.c.l.b16 %v607
    %v1729 = vunpack.c.h.b16 %v607
    %v1730 = vunpack.c.l.b16 %v608
    %v1731 = vunpack.c.h.b16 %v608
    %v1732 = vunpack.c.l.b16 %v609
    %v1733 = vunpack.c.h.b16 %v609
    %v1734 = vunpack.c.l.b16 %v610
    %v1735 = vunpack.c.h.b16 %v610
    %v1736 = vunpack.c.l.b16 %v611
    %v1737 = vunpack.c.h.b16 %v611
    %v1738 = vunpack.c.l.b16 %v612
    %v1739 = vunpack.c.h.b16 %v612
    %v1740 = vunpack.c.l.b16 %v613
    %v1741 = vunpack.c.h.b16 %v613
    %v1742 = vunpack.c.l.b16 %v614
    %v1743 = vunpack.c.h.b16 %v614
    %v1744 = vunpack.c.l.b16 %v615
    %v1745 = vunpack.c.h.b16 %v615
    %v1746 = vunpack.c.l.b16 %v616
    %v1747 = vunpack.c.h.b16 %v616
    %v1748 = vunpack.c.l.b16 %v617
    %v1749 = vunpack.c.h.b16 %v617
    %v1750 = vunpack.c.l.b16 %v618
    %v1751 = vunpack.c.h.b16 %v618
    %v1752 = vunpack.c.l.b16 %v619
    %v1753 = vunpack.c.h.b16 %v619
    %v1754 = vunpack.c.l.b16 %v620
    %v1755 = vunpack.c.h.b16 %v620
    %v1756 = vunpack.c.l.b16 %v621
    %v1757 = vunpack.c.h.b16 %v621
    %v1758 = vunpack.c.l.b16 %v622
    %v1759 = vunpack.c.h.b16 %v622
    %v1760 = vunpack.c.l.b16 %v623
    %v1761 = vunpack.c.h.b16 %v623
    %v1762 = vunpack.c.l.b16 %v624
    %v1763 = vunpack.c.h.b16 %v624
    %v1764 = vunpack.c.l.b16 %v625
    %v1765 = vunpack.c.h.b16 %v625
    %v1766 = vunpack.c.l.b16 %v626
    %v1767 = vunpack.c.h.b16 %v626
    %v1768 = vunpack.c.l.b16 %v627
    %v1769 = vunpack.c.h.b16 %v627
    %v1770 = vunpack.c.l.b16 %v628
    %v1771 = vunpack.c.h.b16 %v628
    %v1772 = vunpack.c.l.b16 %v629
    %v1773 = vunpack.c.h.b16 %v629
    %v1774 = vunpack.c.l.b16 %v630
    %v1775 = vunpack.c.h.b16 %v630
    %v1776 = vunpack.c.l.b16 %v631
    %v1777 = vunpack.c.h.b16 %v631
    %v1778 = vunpack.c.l.b16 %v632
    %v1779 = vunpack.c.h.b16 %v632
    %v1780 = vunpack.c.l.b16 %v633
    %v1781 = vunpack.c.h.b16 %v633
    %v1782 = vunpack.c.l.b16 %v634
    %v1783 = vunpack.c.h.b16 %v634
    %v1784 = vunpack.c.l.b16 %v635
    %v1785 = vunpack.c.h.b16 %v635
    %v1786 = vunpack.c.l.b16 %v636
    %v1787 = vunpack.c.h.b16 %v636
    %v1788 = vunpack.c.l.b16 %v637
    %v1789 = vunpack.c.h.b16 %v637
    %v1790 = vunpack.c.l.b16 %v638
    %v1791 = vunpack.c.h.b16 %v638
    %v1792 = vunpack.c.l.b16 %v639
    %v1793 = vunpack.c.h.b16 %v639
    %v1794 = vunpack.c.l.b16 %v640
    %v1795 = vunpack.c.h.b16 %v640
    %v1796 = vunpack.c.l.b16 %v641
    %v1797 = vunpack.c.h.b16 %v641
    %v1798 = vunpack.c.l.b16 %v642
    %v1799 = vunpack.c.h.b16 %v642
    %v1800 = vunpack.c.l.b16 %v643
    %v1801 = vunpack.c.h.b16 %v643
    %v1802 = vunpack.c.l.b16 %v644
    %v1803 = vunpack.c.h.b16 %v644
    %v1804 = vunpack.c.l.b16 %v645
    %v1805 = vunpack.c.h.b16 %v645
    %v1806 = vunpack.c.l.b16 %v646
    %v1807 = vunpack.c.h.b16 %v646
    %v1808 = vunpack.c.l.b16 %v647
    %v1809 = vunpack.c.h.b16 %v647
    %v1810 = vunpack.c.l.b16 %v648
    %v1811 = vunpack.c.h.b16 %v648
    %v1812 = vunpack.c.l.b16 %v649
    %v1813 = vunpack.c.h.b16 %v649
    %v1814 = vunpack.c.l.b16 %v650
    %v1815 = vunpack.c.h.b16 %v650
    %v1816 = vunpack.c.l.b16 %v651
    %v1817 = vunpack.c.h.b16 %v651
    %v1818 = vunpack.c.l.b16 %v652
    %v1819 = vunpack.c.h.b16 %v652
    %v1820 = vunpack.c.l.b16 %v653
    %v1821 = vunpack.c.h.b16 %v653
    %v1822 = vunpack.c.l.b16 %v654
    %v1823 = vunpack.c.h.b16 %v654
    %v1824 = vunpack.c.l.b16 %v655
    %v1825 = vunpack.c.h.b16 %v655
    %v1826 = vunpack.c.l.b16 %v656
    %v1827 = vunpack.c.h.b16 %v656
    %v1828 = vunpack.c.l.b16 %v657
    %v1829 = vunpack.c.h.b16 %v657
    %v1830 = vunpack.c.l.b16 %v658
    %v1831 = vunpack.c.h.b16 %v658
    %v1832 = vunpack.c.l.b16 %v659
    %v1833 = vunpack.c.h.b16 %v659
    %v1834 = vunpack.c.l.b16 %v660
    %v1835 = vunpack.c.h.b16 %v660
    %v1836 = vunpack.c.l.b16 %v661
    %v1837 = vunpack.c.h.b16 %v661
    %v1838 = vunpack.c.l.b16 %v662
    %v1839 = vunpack.c.h.b16 %v662
    %v1840 = vunpack.c.l.b16 %v663
    %v1841 = vunpack.c.h.b16 %v663
    %v1842 = vunpack.c.l.b16 %v664
    %v1843 = vunpack.c.h.b16 %v664
    %v1844 = vunpack.c.l.b16 %v665
    %v1845 = vunpack.c.h.b16 %v665
    %v1846 = vunpack.c.l.b16 %v666
    %v1847 = vunpack.c.h.b16 %v666
    %v1848 = vunpack.c.l.b16 %v667
    %v1849 = vunpack.c.h.b16 %v667
    %v1850 = vunpack.c.l.b16 %v668
    %v1851 = vunpack.c.h.b16 %v668
    %v1852 = vunpack.c.l.b16 %v669
    %v1853 = vunpack.c.h.b16 %v669
    %v1854 = vunpack.c.l.b16 %v670
    %v1855 = vunpack.c.h.b16 %v670
    %v1856 = vunpack.c.l.b16 %v671
    %v1857 = vunpack.c.h.b16 %v671
    %v1858 = vunpack.c.l.b16 %v672
    %v1859 = vunpack.c.h.b16 %v672
    %v1860 = vunpack.c.l.b16 %v673
    %v1861 = vunpack.c.h.b16 %v673
    %v1862 = vunpack.c.l.b16 %v674
    %v1863 = vunpack.c.h.b16 %v674
    %v1864 = vunpack.c.l.b16 %v675
    %v1865 = vunpack.c.h.b16 %v675
    %v1866 = vunpack.c.l.b16 %v676
    %v1867 = vunpack.c.h.b16 %v676
    %v1868 = vunpack.c.l.b16 %v677
    %v1869 = vunpack.c.h.b16 %v677
    %v1870 = vunpack.c.l.b16 %v678
    %v1871 = vunpack.c.h.b16 %v678
    %v1872 = vunpack.c.l.b16 %v679
    %v1873 = vunpack.c.h.b16 %v679
    %v1874 = vpack.c.b16 %v1114, %v1106
    %v1875 = vpack.c.b16 %v1115, %v1107
    %v1876 = vpack.c.b16 %v1116, %v1108
    %v1877 = vpack.c.b16 %v1117, %v1109
    %v1878 = vpack.c.b16 %v1118, %v1110
    %v1879 = vpack.c.b16 %v1119, %v1111
    %v1880 = vpack.c.b16 %v1120, %v1112
    %v1881 = vpack.c.b16 %v1121, %v1113
    %v1882 = vpack.c.b16 %v1130, %v1122
    %v1883 = vpack.c.b16 %v1131, %v1123
    %v1884 = vpack.c.b16 %v1132, %v1124
    %v1885 = vpack.c.b16 %v1133, %v1125
    %v1886 = vpack.c.b16 %v1134, %v1126
    %v1887 = vpack.c.b16 %v1135, %v1127
    %v1888 = vpack.c.b16 %v1136, %v1128
    %v1889 = vpack.c.b16 %v1137, %v1129
    %v1890 = vpack.c.b16 %v1146, %v1138
    %v1891 = vpack.c.b16 %v1147, %v1139
    %v1892 = vpack.c.b16 %v1148, %v1140
    %v1893 = vpack.c.b16 %v1149, %v1141
    %v1894 = vpack.c.b16 %v1150, %v1142
    %v1895 = vpack.c.b16 %v1151, %v1143
    %v1896 = vpack.c.b16 %v1152, %v1144
    %v1897 = vpack.c.b16 %v1153, %v1145
    %v1898 = vpack.c.b16 %v1162, %v1154
    %v1899 = vpack.c.b16 %v1163, %v1155
    %v1900 = vpack.c.b16 %v1164, %v1156
    %v1901 = vpack.c.b16 %v1165, %v1157
    %v1902 = vpack.c.b16 %v1166, %v1158
    %v1903 = vpack.c.b16 %v1167, %v1159
    %v1904 = vpack.c.b16 %v1168, %v1160
    %v1905 = vpack.c.b16 %v1169, %v1161
    %v1906 = vpack.c.b16 %v1178, %v1170
    %v1907 = vpack.c.b16 %v1179, %v1171
    %v1908 = vpack.c.b16 %v1180, %v1172
    %v1909 = vpack.c.b16 %v1181, %v1173
    %v1910 = vpack.c.b16 %v1182, %v1174
    %v1911 = vpack.c.b16 %v1183, %v1175
    %v1912 = vpack.c.b16 %v1184, %v1176
    %v1913 = vpack.c.b16 %v1185, %v1177
    %v1914 = vpack.c.b16 %v1194, %v1186
    %v1915 = vpack.c.b16 %v1195, %v1187
    %v1916 = vpack.c.b16 %v1196, %v1188
    %v1917 = vpack.c.b16 %v1197, %v1189
    %v1918 = vpack.c.b16 %v1198, %v1190
    %v1919 = vpack.c.b16 %v1199, %v1191
    %v1920 = vpack.c.b16 %v1200, %v1192
    %v1921 = vpack.c.b16 %v1201, %v1193
    %v1922 = vpack.c.b16 %v1210, %v1202
    %v1923 = vpack.c.b16 %v1211, %v1203
    %v1924 = vpack.c.b16 %v1212, %v1204
    %v1925 = vpack.c.b16 %v1213, %v1205
    %v1926 = vpack.c.b16 %v1214, %v1206
    %v1927 = vpack.c.b16 %v1215, %v1207
    %v1928 = vpack.c.b16 %v1216, %v1208
    %v1929 = vpack.c.b16 %v1217, %v1209
    %v1930 = vpack.c.b16 %v1226, %v1218
    %v1931 = vpack.c.b16 %v1227, %v1219
    %v1932 = vpack.c.b16 %v1228, %v1220
    %v1933 = vpack.c.b16 %v1229, %v1221
    %v1934 = vpack.c.b16 %v1230, %v1222
    %v1935 = vpack.c.b16 %v1231, %v1223
    %v1936 = vpack.c.b16 %v1232, %v1224
    %v1937 = vpack.c.b16 %v1233, %v1225
    %v1938 = vpack.c.b16 %v1242, %v1234
    %v1939 = vpack.c.b16 %v1243, %v1235
    %v1940 = vpack.c.b16 %v1244, %v1236
    %v1941 = vpack.c.b16 %v1245, %v1237
    %v1942 = vpack.c.b16 %v1246, %v1238
    %v1943 = vpack.c.b16 %v1247, %v1239
    %v1944 = vpack.c.b16 %v1248, %v1240
    %v1945 = vpack.c.b16 %v1249, %v1241
    %v1946 = vpack.c.b16 %v1258, %v1250
    %v1947 = vpack.c.b16 %v1259, %v1251
    %v1948 = vpack.c.b16 %v1260, %v1252
    %v1949 = vpack.c.b16 %v1261, %v1253
    %v1950 = vpack.c.b16 %v1262, %v1254
    %v1951 = vpack.c.b16 %v1263, %v1255
    %v1952 = vpack.c.b16 %v1264, %v1256
    %v1953 = vpack.c.b16 %v1265, %v1257
    %v1954 = vpack.c.b16 %v1274, %v1266
    %v1955 = vpack.c.b16 %v1275, %v1267
    %v1956 = vpack.c.b16 %v1276, %v1268
    %v1957 = vpack.c.b16 %v1277, %v1269
    %v1958 = vpack.c.b16 %v1278, %v1270
    %v1959 = vpack.c.b16 %v1279, %v1271
    %v1960 = vpack.c.b16 %v1280, %v1272
    %v1961 = vpack.c.b16 %v1281, %v1273
    %v1962 = vpack.c.b16 %v1290, %v1282
    %v1963 = vpack.c.b16 %v1291, %v1283
    %v1964 = vpack.c.b16 %v1292, %v1284
    %v1965 = vpack.c.b16 %v1293, %v1285
    %v1966 = vpack.c.b16 %v1294, %v1286
    %v1967 = vpack.c.b16 %v1295, %v1287
    %v1968 = vpack.c.b16 %v1296, %v1288
    %v1969 = vpack.c.b16 %v1297, %v1289
    %v1970 = vpack.c.b16 %v1306, %v1298
    %v1971 = vpack.c.b16 %v1307, %v1299
    %v1972 = vpack.c.b16 %v1308, %v1300
    %v1973 = vpack.c.b16 %v1309, %v1301
    %v1974 = vpack.c.b16 %v1310, %v1302
    %v1975 = vpack.c.b16 %v1311, %v1303
    %v1976 = vpack.c.b16 %v1312, %v1304
    %v1977 = vpack.c.b16 %v1313, %v1305
    %v1978 = vpack.c.b16 %v1322, %v1314
    %v1979 = vpack.c.b16 %v1323, %v1315
    %v1980 = vpack.c.b16 %v1324, %v1316
    %v1981 = vpack.c.b16 %v1325, %v1317
    %v1982 = vpack.c.b16 %v1326, %v1318
    %v1983 = vpack.c.b16 %v1327, %v1319
    %v1984 = vpack.c.b16 %v1328, %v1320
    %v1985 = vpack.c.b16 %v1329, %v1321
    %v1986 = vpack.c.b16 %v1338, %v1330
    %v1987 = vpack.c.b16 %v1339, %v1331
    %v1988 = vpack.c.b16 %v1340, %v1332
    %v1989 = vpack.c.b16 %v1341, %v1333
    %v1990 = vpack.c.b16 %v1342, %v1334
    %v1991 = vpack.c.b16 %v1343, %v1335
    %v1992 = vpack.c.b16 %v1344, %v1336
    %v1993 = vpack.c.b16 %v1345, %v1337
    %v1994 = vpack.c.b16 %v1354, %v1346
    %v1995 = vpack.c.b16 %v1355, %v1347
    %v1996 = vpack.c.b16 %v1356, %v1348
    %v1997 = vpack.c.b16 %v1357, %v1349
    %v1998 = vpack.c.b16 %v1358, %v1350
    %v1999 = vpack.c.b16 %v1359, %v1351
    %v2000 = vpack.c.b16 %v1360, %v1352
    %v2001 = vpack.c.b16 %v1361, %v1353
    %v2002 = vpack.c.b16 %v1370, %v1362
    %v2003 = vpack.c.b16 %v1371, %v1363
    %v2004 = vpack.c.b16 %v1372, %v1364
    %v2005 = vpack.c.b16 %v1373, %v1365
    %v2006 = vpack.c.b16 %v1374, %v1366
    %v2007 = vpack.c.b16 %v1375, %v1367
    %v2008 = vpack.c.b16 %v1376, %v1368
    %v2009 = vpack.c.b16 %v1377, %v1369
    %v2010 = vpack.c.b16 %v1386, %v1378
    %v2011 = vpack.c.b16 %v1387, %v1379
    %v2012 = vpack.c.b16 %v1388, %v1380
    %v2013 = vpack.c.b16 %v1389, %v1381
    %v2014 = vpack.c.b16 %v1390, %v1382
    %v2015 = vpack.c.b16 %v1391, %v1383
    %v2016 = vpack.c.b16 %v1392, %v1384
    %v2017 = vpack.c.b16 %v1393, %v1385
    %v2018 = vpack.c.b16 %v1402, %v1394
    %v2019 = vpack.c.b16 %v1403, %v1395
    %v2020 = vpack.c.b16 %v1404, %v1396
    %v2021 = vpack.c.b16 %v1405, %v1397
    %v2022 = vpack.c.b16 %v1406, %v1398
    %v2023 = vpack.c.b16 %v1407, %v1399
    %v2024 = vpack.c.b16 %v1408, %v1400
    %v2025 = vpack.c.b16 %v1409, %v1401
    %v2026 = vpack.c.b16 %v1418, %v1410
    %v2027 = vpack.c.b16 %v1419, %v1411
    %v2028 = vpack.c.b16 %v1420, %v1412
    %v2029 = vpack.c.b16 %v1421, %v1413
    %v2030 = vpack.c.b16 %v1422, %v1414
    %v2031 = vpack.c.b16 %v1423, %v1415
    %v2032 = vpack.c.b16 %v1424, %v1416
    %v2033 = vpack.c.b16 %v1425, %v1417
    %v2034 = vpack.c.b16 %v1434, %v1426
    %v2035 = vpack.c.b16 %v1435, %v1427
    %v2036 = vpack.c.b16 %v1436, %v1428
    %v2037 = vpack.c.b16 %v1437, %v1429
    %v2038 = vpack.c.b16 %v1438, %v1430
    %v2039 = vpack.c.b16 %v1439, %v1431
    %v2040 = vpack.c.b16 %v1440, %v1432
    %v2041 = vpack.c.b16 %v1441, %v1433
    %v2042 = vpack.c.b16 %v1450, %v1442
    %v2043 = vpack.c.b16 %v1451, %v1443
    %v2044 = vpack.c.b16 %v1452, %v1444
    %v2045 = vpack.c.b16 %v1453, %v1445
    %v2046 = vpack.c.b16 %v1454, %v1446
    %v2047 = vpack.c.b16 %v1455, %v1447
    %v2048 = vpack.c.b16 %v1456, %v1448
    %v2049 = vpack.c.b16 %v1457, %v1449
    %v2050 = vpack.c.b16 %v1466, %v1458
    %v2051 = vpack.c.b16 %v1467, %v1459
    %v2052 = vpack.c.b16 %v1468, %v1460
    %v2053 = vpack.c.b16 %v1469, %v1461
    %v2054 = vpack.c.b16 %v1470, %v1462
    %v2055 = vpack.c.b16 %v1471, %v1463
    %v2056 = vpack.c.b16 %v1472, %v1464
    %v2057 = vpack.c.b16 %v1473, %v1465
    %v2058 = vpack.c.b16 %v1482, %v1474
    %v2059 = vpack.c.b16 %v1483, %v1475
    %v2060 = vpack.c.b16 %v1484, %v1476
    %v2061 = vpack.c.b16 %v1485, %v1477
    %v2062 = vpack.c.b16 %v1486, %v1478
    %v2063 = vpack.c.b16 %v1487, %v1479
    %v2064 = vpack.c.b16 %v1488, %v1480
    %v2065 = vpack.c.b16 %v1489, %v1481
    %v2066 = vpack.c.b16 %v1498, %v1490
    %v2067 = vpack.c.b16 %v1499, %v1491
    %v2068 = vpack.c.b16 %v1500, %v1492
    %v2069 = vpack.c.b16 %v1501, %v1493
    %v2070 = vpack.c.b16 %v1502, %v1494
    %v2071 = vpack.c.b16 %v1503, %v1495
    %v2072 = vpack.c.b16 %v1504, %v1496
    %v2073 = vpack.c.b16 %v1505, %v1497
    %v2074 = vpack.c.b16 %v1514, %v1506
    %v2075 = vpack.c.b16 %v1515, %v1507
    %v2076 = vpack.c.b16 %v1516, %v1508
    %v2077 = vpack.c.b16 %v1517, %v1509
    %v2078 = vpack.c.b16 %v1518, %v1510
    %v2079 = vpack.c.b16 %v1519, %v1511
    %v2080 = vpack.c.b16 %v1520, %v1512
    %v2081 = vpack.c.b16 %v1521, %v1513
    %v2082 = vpack.c.b16 %v1530, %v1522
    %v2083 = vpack.c.b16 %v1531, %v1523
    %v2084 = vpack.c.b16 %v1532, %v1524
    %v2085 = vpack.c.b16 %v1533, %v1525
    %v2086 = vpack.c.b16 %v1534, %v1526
    %v2087 = vpack.c.b16 %v1535, %v1527
    %v2088 = vpack.c.b16 %v1536, %v1528
    %v2089 = vpack.c.b16 %v1537, %v1529
    %v2090 = vpack.c.b16 %v1546, %v1538
    %v2091 = vpack.c.b16 %v1547, %v1539
    %v2092 = vpack.c.b16 %v1548, %v1540
    %v2093 = vpack.c.b16 %v1549, %v1541
    %v2094 = vpack.c.b16 %v1550, %v1542
    %v2095 = vpack.c.b16 %v1551, %v1543
    %v2096 = vpack.c.b16 %v1552, %v1544
    %v2097 = vpack.c.b16 %v1553, %v1545
    %v2098 = vpack.c.b16 %v1562, %v1554
    %v2099 = vpack.c.b16 %v1563, %v1555
    %v2100 = vpack.c.b16 %v1564, %v1556
    %v2101 = vpack.c.b16 %v1565, %v1557
    %v2102 = vpack.c.b16 %v1566, %v1558
    %v2103 = vpack.c.b16 %v1567, %v1559
    %v2104 = vpack.c.b16 %v1568, %v1560
    %v2105 = vpack.c.b16 %v1569, %v1561
    %v2106 = vpack.c.b16 %v1578, %v1570
    %v2107 = vpack.c.b16 %v1579, %v1571
    %v2108 = vpack.c.b16 %v1580, %v1572
    %v2109 = vpack.c.b16 %v1581, %v1573
    %v2110 = vpack.c.b16 %v1582, %v1574
    %v2111 = vpack.c.b16 %v1583, %v1575
    %v2112 = vpack.c.b16 %v1584, %v1576
    %v2113 = vpack.c.b16 %v1585, %v1577
    %v2114 = vpack.c.b16 %v1594, %v1586
    %v2115 = vpack.c.b16 %v1595, %v1587
    %v2116 = vpack.c.b16 %v1596, %v1588
    %v2117 = vpack.c.b16 %v1597, %v1589
    %v2118 = vpack.c.b16 %v1598, %v1590
    %v2119 = vpack.c.b16 %v1599, %v1591
    %v2120 = vpack.c.b16 %v1600, %v1592
    %v2121 = vpack.c.b16 %v1601, %v1593
    %v2122 = vpack.c.b16 %v1610, %v1602
    %v2123 = vpack.c.b16 %v1611, %v1603
    %v2124 = vpack.c.b16 %v1612, %v1604
    %v2125 = vpack.c.b16 %v1613, %v1605
    %v2126 = vpack.c.b16 %v1614, %v1606
    %v2127 = vpack.c.b16 %v1615, %v1607
    %v2128 = vpack.c.b16 %v1616, %v1608
    %v2129 = vpack.c.b16 %v1617, %v1609
    %v2130 = vpack.c.b16 %v1626, %v1618
    %v2131 = vpack.c.b16 %v1627, %v1619
    %v2132 = vpack.c.b16 %v1628, %v1620
    %v2133 = vpack.c.b16 %v1629, %v1621
    %v2134 = vpack.c.b16 %v1630, %v1622
    %v2135 = vpack.c.b16 %v1631, %v1623
    %v2136 = vpack.c.b16 %v1632, %v1624
    %v2137 = vpack.c.b16 %v1633, %v1625
    %v2138 = vpack.c.b16 %v1642, %v1634
    %v2139 = vpack.c.b16 %v1643, %v1635
    %v2140 = vpack.c.b16 %v1644, %v1636
    %v2141 = vpack.c.b16 %v1645, %v1637
    %v2142 = vpack.c.b16 %v1646, %v1638
    %v2143 = vpack.c.b16 %v1647, %v1639
    %v2144 = vpack.c.b16 %v1648, %v1640
    %v2145 = vpack.c.b16 %v1649, %v1641
    %v2146 = vpack.c.b16 %v1658, %v1650
    %v2147 = vpack.c.b16 %v1659, %v1651
    %v2148 = vpack.c.b16 %v1660, %v1652
    %v2149 = vpack.c.b16 %v1661, %v1653
    %v2150 = vpack.c.b16 %v1662, %v1654
    %v2151 = vpack.c.b16 %v1663, %v1655
    %v2152 = vpack.c.b16 %v1664, %v1656
    %v2153 = vpack.c.b16 %v1665, %v1657
    %v2154 = vpack.c.b16 %v1674, %v1666
    %v2155 = vpack.c.b16 %v1675, %v1667
    %v2156 = vpack.c.b16 %v1676, %v1668
    %v2157 = vpack.c.b16 %v1677, %v1669
    %v2158 = vpack.c.b16 %v1678, %v1670
    %v2159 = vpack.c.b16 %v1679, %v1671
    %v2160 = vpack.c.b16 %v1680, %v1672
    %v2161 = vpack.c.b16 %v1681, %v1673
    %v2162 = vpack.c.b16 %v1690, %v1682
    %v2163 = vpack.c.b16 %v1691, %v1683
    %v2164 = vpack.c.b16 %v1692, %v1684
    %v2165 = vpack.c.b16 %v1693, %v1685
    %v2166 = vpack.c.b16 %v1694, %v1686
    %v2167 = vpack.c.b16 %v1695, %v1687
    %v2168 = vpack.c.b16 %v1696, %v1688
    %v2169 = vpack.c.b16 %v1697, %v1689
    %v2170 = vpack.c.b16 %v1706, %v1698
    %v2171 = vpack.c.b16 %v1707, %v1699
    %v2172 = vpack.c.b16 %v1708, %v1700
    %v2173 = vpack.c.b16 %v1709, %v1701
    %v2174 = vpack.c.b16 %v1710, %v1702
    %v2175 = vpack.c.b16 %v1711, %v1703
    %v2176 = vpack.c.b16 %v1712, %v1704
    %v2177 = vpack.c.b16 %v1713, %v1705
    %v2178 = vpack.c.b16 %v1722, %v1714
    %v2179 = vpack.c.b16 %v1723, %v1715
    %v2180 = vpack.c.b16 %v1724, %v1716
    %v2181 = vpack.c.b16 %v1725, %v1717
    %v2182 = vpack.c.b16 %v1726, %v1718
    %v2183 = vpack.c.b16 %v1727, %v1719
    %v2184 = vpack.c.b16 %v1728, %v1720
    %v2185 = vpack.c.b16 %v1729, %v1721
    %v2186 = vpack.c.b16 %v1738, %v1730
    %v2187 = vpack.c.b16 %v1739, %v1731
    %v2188 = vpack.c.b16 %v1740, %v1732
    %v2189 = vpack.c.b16 %v1741, %v1733
    %v2190 = vpack.c.b16 %v1742, %v1734
    %v2191 = vpack.c.b16 %v1743, %v1735
    %v2192 = vpack.c.b16 %v1744, %v1736
    %v2193 = vpack.c.b16 %v1745, %v1737
    %v2194 = vpack.c.b16 %v1754, %v1746
    %v2195 = vpack.c.b16 %v1755, %v1747
    %v2196 = vpack.c.b16 %v1756, %v1748
    %v2197 = vpack.c.b16 %v1757, %v1749
    %v2198 = vpack.c.b16 %v1758, %v1750
    %v2199 = vpack.c.b16 %v1759, %v1751
    %v2200 = vpack.c.b16 %v1760, %v1752
    %v2201 = vpack.c.b16 %v1761, %v1753
    %v2202 = vpack.c.b16 %v1770, %v1762
    %v2203 = vpack.c.b16 %v1771, %v1763
    %v2204 = vpack.c.b16 %v1772, %v1764
    %v2205 = vpack.c.b16 %v1773, %v1765
    %v2206 = vpack.c.b16 %v1774, %v1766
    %v2207 = vpack.c.b16 %v1775, %v1767
    %v2208 = vpack.c.b16 %v1776, %v1768
    %v2209 = vpack.c.b16 %v1777, %v1769
    %v2210 = vpack.c.b16 %v1786, %v1778
    %v2211 = vpack.c.b16 %v1787, %v1779
    %v2212 = vpack.c.b16 %v1788, %v1780
    %v2213 = vpack.c.b16 %v1789, %v1781
    %v2214 = vpack.c.b16 %v1790, %v1782
    %v2215 = vpack.c.b16 %v1791, %v1783
    %v2216 = vpack.c.b16 %v1792, %v1784
    %v2217 = vpack.c.b16 %v1793, %v1785
    %v2218 = vpack.c.b16 %v1802, %v1794
    %v2219 = vpack.c.b16 %v1803, %v1795
    %v2220 = vpack.c.b16 %v1804, %v1796
    %v2221 = vpack.c.b16 %v1805, %v1797
    %v2222 = vpack.c.b16 %v1806, %v1798
    %v2223 = vpack.c.b16 %v1807, %v1799
    %v2224 = vpack.c.b16 %v1808, %v1800
    %v2225 = vpack.c.b16 %v1809, %v1801
    %v2226 = vpack.c.b16 %v1818, %v1810
    %v2227 = vpack.c.b16 %v1819, %v1811
    %v2228 = vpack.c.b16 %v1820, %v1812
    %v2229 = vpack.c.b16 %v1821, %v1813
    %v2230 = vpack.c.b16 %v1822, %v1814
    %v2231 = vpack.c.b16 %v1823, %v1815
    %v2232 = vpack.c.b16 %v1824, %v1816
    %v2233 = vpack.c.b16 %v1825, %v1817
    %v2234 = vpack.c.b16 %v1834, %v1826
    %v2235 = vpack.c.b16 %v1835, %v1827
    %v2236 = vpack.c.b16 %v1836, %v1828
    %v2237 = vpack.c.b16 %v1837, %v1829
    %v2238 = vpack.c.b16 %v1838, %v1830
    %v2239 = vpack.c.b16 %v1839, %v1831
    %v2240 = vpack.c.b16 %v1840, %v1832
    %v2241 = vpack.c.b16 %v1841, %v1833
    %v2242 = vpack.c.b16 %v1850, %v1842
    %v2243 = vpack.c.b16 %v1851, %v1843
    %v2244 = vpack.c.b16 %v1852, %v1844
    %v2245 = vpack.c.b16 %v1853, %v1845
    %v2246 = vpack.c.b16 %v1854, %v1846
    %v2247 = vpack.c.b16 %v1855, %v1847
    %v2248 = vpack.c.b16 %v1856, %v1848
    %v2249 = vpack.c.b16 %v1857, %v1849
    %v2250 = vpack.c.b16 %v1866, %v1858
    %v2251 = vpack.c.b16 %v1867, %v1859
    %v2252 = vpack.c.b16 %v1868, %v1860
    %v2253 = vpack.c.b16 %v1869, %v1861
    %v2254 = vpack.c.b16 %v1870, %v1862
    %v2255 = vpack.c.b16 %v1871, %v1863
    %v2256 = vpack.c.b16 %v1872, %v1864
    %v2257 = vpack.c.b16 %v1873, %v1865
    %2642 = vmatprep.subr.bf16.mxu0 %v1931
    %2643 = vmatpush1.bf16.msra.mxu0 %v1930
    %2644 = vmatprep.subr.bf16.mxu0 %v1923
    %2645 = vmatpush1.bf16.msra.mxu0 %v1922
    %2646 = vmatprep.subr.bf16.mxu0 %v1915
    %2647 = vmatpush1.bf16.msra.mxu0 %v1914
    %2648 = vmatprep.subr.bf16.mxu0 %v1907
    %2649 = vmatpush1.bf16.msra.mxu0 %v1906
    %2650 = vmatprep.subr.bf16.mxu0 %v1899
    %2651 = vmatpush1.bf16.msra.mxu0 %v1898
    %2652 = vmatprep.subr.bf16.mxu0 %v1891
    %2653 = vmatpush1.bf16.msra.mxu0 %v1890
    %2654 = vmatprep.subr.bf16.mxu0 %v1883
    %2655 = vmatpush1.bf16.msra.mxu0 %v1882
    %2656 = vmatprep.subr.bf16.mxu0 %v1875
    %2657 = vmatpush1.bf16.msra.mxu0 %v1874
    %2658 = vmatprep.subr.bf16.mxu0 %v1995
    %2659 = vmatpush2.bf16.msra.mxu0 %v1994
    %2660 = vmatprep.subr.bf16.mxu0 %v1987
    %2661 = vmatpush2.bf16.msra.mxu0 %v1986
    %2662 = vmatprep.subr.bf16.mxu0 %v1979
    %2663 = vmatpush2.bf16.msra.mxu0 %v1978
    %2664 = vmatprep.subr.bf16.mxu0 %v1971
    %2665 = vmatpush2.bf16.msra.mxu0 %v1970
    %2666 = vmatprep.subr.bf16.mxu0 %v1963
    %2667 = vmatpush2.bf16.msra.mxu0 %v1962
    %2668 = vmatprep.subr.bf16.mxu0 %v1955
    %2669 = vmatpush2.bf16.msra.mxu0 %v1954
    %2670 = vmatprep.subr.bf16.mxu0 %v1947
    %2671 = vmatpush2.bf16.msra.mxu0 %v1946
    %2672 = vmatprep.subr.bf16.mxu0 %v1939
    %2673 = vmatpush2.bf16.msra.mxu0 %v1938
    %2674 = vmatprep.mubr.bf16.mxu0 %v291
    %2675 = vmatmul.mubr.bf16.gmra.mxu0 %v290
    %v2676 = vpop.f32.mrf.mxu0
    %v2677 = vadd.f32 %v685, %v2676
    %v2678 = vpop.f32.mrf.mxu0
    %v2679 = vadd.f32 %v689, %v2678
    %v2680 = vpop.f32.mrf.mxu0
    %v2681 = vpop.f32.mrf.mxu0
    %2682 = vdwg.mxu0
    %2683 = vmatprep.subr.bf16.mxu0 %v2059
    %2684 = vmatpush1.bf16.msra.mxu0 %v2058
    %2685 = vmatprep.subr.bf16.mxu0 %v2051
    %2686 = vmatpush1.bf16.msra.mxu0 %v2050
    %2687 = vmatprep.subr.bf16.mxu0 %v2043
    %2688 = vmatpush1.bf16.msra.mxu0 %v2042
    %2689 = vmatprep.subr.bf16.mxu0 %v2035
    %2690 = vmatpush1.bf16.msra.mxu0 %v2034
    %2691 = vmatprep.subr.bf16.mxu0 %v2027
    %2692 = vmatpush1.bf16.msra.mxu0 %v2026
    %2693 = vmatprep.subr.bf16.mxu0 %v2019
    %2694 = vmatpush1.bf16.msra.mxu0 %v2018
    %2695 = vmatprep.subr.bf16.mxu0 %v2011
    %2696 = vmatpush1.bf16.msra.mxu0 %v2010
    %2697 = vmatprep.subr.bf16.mxu0 %v2003
    %2698 = vmatpush1.bf16.msra.mxu0 %v2002
    %2699 = vmatprep.subr.bf16.mxu0 %v2123
    %2700 = vmatpush2.bf16.msra.mxu0 %v2122
    %2701 = vmatprep.subr.bf16.mxu0 %v2115
    %2702 = vmatpush2.bf16.msra.mxu0 %v2114
    %2703 = vmatprep.subr.bf16.mxu0 %v2107
    %2704 = vmatpush2.bf16.msra.mxu0 %v2106
    %2705 = vmatprep.subr.bf16.mxu0 %v2099
    %2706 = vmatpush2.bf16.msra.mxu0 %v2098
    %2707 = vmatprep.subr.bf16.mxu0 %v2091
    %2708 = vmatpush2.bf16.msra.mxu0 %v2090
    %2709 = vmatprep.subr.bf16.mxu0 %v2083
    %2710 = vmatpush2.bf16.msra.mxu0 %v2082
    %2711 = vmatprep.subr.bf16.mxu0 %v2075
    %2712 = vmatpush2.bf16.msra.mxu0 %v2074
    %2713 = vmatprep.subr.bf16.mxu0 %v2067
    %2714 = vmatpush2.bf16.msra.mxu0 %v2066
    %2715 = vmatprep.mubr.bf16.mxu0 %v293
    %2716 = vmatmul.mubr.bf16.gmra.mxu0 %v292
    %v2717 = vpop.f32.mrf.mxu0
    %v2718 = vadd.f32 %v2677, %v2717
    %v2719 = vpop.f32.mrf.mxu0
    %v2720 = vadd.f32 %v2679, %v2719
    %v2721 = vpop.f32.mrf.mxu0
    %v2722 = vpop.f32.mrf.mxu0
    %2723 = vdwg.mxu0
    %2724 = vmatprep.subr.bf16.mxu0 %v2187
    %2725 = vmatpush1.bf16.msra.mxu0 %v2186
    %2726 = vmatprep.subr.bf16.mxu0 %v2179
    %2727 = vmatpush1.bf16.msra.mxu0 %v2178
    %2728 = vmatprep.subr.bf16.mxu0 %v2171
    %2729 = vmatpush1.bf16.msra.mxu0 %v2170
    %2730 = vmatprep.subr.bf16.mxu0 %v2163
    %2731 = vmatpush1.bf16.msra.mxu0 %v2162
    %2732 = vmatprep.subr.bf16.mxu0 %v2155
    %2733 = vmatpush1.bf16.msra.mxu0 %v2154
    %2734 = vmatprep.subr.bf16.mxu0 %v2147
    %2735 = vmatpush1.bf16.msra.mxu0 %v2146
    %2736 = vmatprep.subr.bf16.mxu0 %v2139
    %2737 = vmatpush1.bf16.msra.mxu0 %v2138
    %2738 = vmatprep.subr.bf16.mxu0 %v2131
    %2739 = vmatpush1.bf16.msra.mxu0 %v2130
    %2740 = vmatprep.subr.bf16.mxu0 %v2251
    %2741 = vmatpush2.bf16.msra.mxu0 %v2250
    %2742 = vmatprep.subr.bf16.mxu0 %v2243
    %2743 = vmatpush2.bf16.msra.mxu0 %v2242
    %2744 = vmatprep.subr.bf16.mxu0 %v2235
    %2745 = vmatpush2.bf16.msra.mxu0 %v2234
    %2746 = vmatprep.subr.bf16.mxu0 %v2227
    %2747 = vmatpush2.bf16.msra.mxu0 %v2226
    %2748 = vmatprep.subr.bf16.mxu0 %v2219
    %2749 = vmatpush2.bf16.msra.mxu0 %v2218
    %2750 = vmatprep.subr.bf16.mxu0 %v2211
    %2751 = vmatpush2.bf16.msra.mxu0 %v2210
    %2752 = vmatprep.subr.bf16.mxu0 %v2203
    %2753 = vmatpush2.bf16.msra.mxu0 %v2202
    %2754 = vmatprep.subr.bf16.mxu0 %v2195
    %2755 = vmatpush2.bf16.msra.mxu0 %v2194
    %2756 = vmatprep.mubr.bf16.mxu0 %v295
    %2757 = vmatmul.mubr.bf16.gmra.mxu0 %v294
    %v2758 = vpop.f32.mrf.mxu0
    %v2759 = vadd.f32 %v2718, %v2758
    %v2760 = vpop.f32.mrf.mxu0
    %v2761 = vadd.f32 %v2720, %v2760
    %v2762 = vpop.f32.mrf.mxu0
    %v2763 = vpop.f32.mrf.mxu0
    %2764 = vdwg.mxu0
    %2765 = vmatprep.subr.bf16.mxu0 %v1933
    %2766 = vmatpush1.bf16.msra.mxu0 %v1932
    %2767 = vmatprep.subr.bf16.mxu0 %v1925
    %2768 = vmatpush1.bf16.msra.mxu0 %v1924
    %2769 = vmatprep.subr.bf16.mxu0 %v1917
    %2770 = vmatpush1.bf16.msra.mxu0 %v1916
    %2771 = vmatprep.subr.bf16.mxu0 %v1909
    %2772 = vmatpush1.bf16.msra.mxu0 %v1908
    %2773 = vmatprep.subr.bf16.mxu0 %v1901
    %2774 = vmatpush1.bf16.msra.mxu0 %v1900
    %2775 = vmatprep.subr.bf16.mxu0 %v1893
    %2776 = vmatpush1.bf16.msra.mxu0 %v1892
    %2777 = vmatprep.subr.bf16.mxu0 %v1885
    %2778 = vmatpush1.bf16.msra.mxu0 %v1884
    %2779 = vmatprep.subr.bf16.mxu0 %v1877
    %2780 = vmatpush1.bf16.msra.mxu0 %v1876
    %2781 = vmatprep.subr.bf16.mxu0 %v1997
    %2782 = vmatpush2.bf16.msra.mxu0 %v1996
    %2783 = vmatprep.subr.bf16.mxu0 %v1989
    %2784 = vmatpush2.bf16.msra.mxu0 %v1988
    %2785 = vmatprep.subr.bf16.mxu0 %v1981
    %2786 = vmatpush2.bf16.msra.mxu0 %v1980
    %2787 = vmatprep.subr.bf16.mxu0 %v1973
    %2788 = vmatpush2.bf16.msra.mxu0 %v1972
    %2789 = vmatprep.subr.bf16.mxu0 %v1965
    %2790 = vmatpush2.bf16.msra.mxu0 %v1964
    %2791 = vmatprep.subr.bf16.mxu0 %v1957
    %2792 = vmatpush2.bf16.msra.mxu0 %v1956
    %2793 = vmatprep.subr.bf16.mxu0 %v1949
    %2794 = vmatpush2.bf16.msra.mxu0 %v1948
    %2795 = vmatprep.subr.bf16.mxu0 %v1941
    %2796 = vmatpush2.bf16.msra.mxu0 %v1940
    %2797 = vmatprep.mubr.bf16.mxu0 %v291
    %2798 = vmatmul.mubr.bf16.gmra.mxu0 %v290
    %v2799 = vpop.f32.mrf.mxu0
    %v2800 = vadd.f32 %v693, %v2799
    %v2801 = vpop.f32.mrf.mxu0
    %v2802 = vadd.f32 %v697, %v2801
    %v2803 = vpop.f32.mrf.mxu0
    %v2804 = vpop.f32.mrf.mxu0
    %2805 = vdwg.mxu0
    %2806 = vmatprep.subr.bf16.mxu0 %v2061
    %2807 = vmatpush1.bf16.msra.mxu0 %v2060
    %2808 = vmatprep.subr.bf16.mxu0 %v2053
    %2809 = vmatpush1.bf16.msra.mxu0 %v2052
    %2810 = vmatprep.subr.bf16.mxu0 %v2045
    %2811 = vmatpush1.bf16.msra.mxu0 %v2044
    %2812 = vmatprep.subr.bf16.mxu0 %v2037
    %2813 = vmatpush1.bf16.msra.mxu0 %v2036
    %2814 = vmatprep.subr.bf16.mxu0 %v2029
    %2815 = vmatpush1.bf16.msra.mxu0 %v2028
    %2816 = vmatprep.subr.bf16.mxu0 %v2021
    %2817 = vmatpush1.bf16.msra.mxu0 %v2020
    %2818 = vmatprep.subr.bf16.mxu0 %v2013
    %2819 = vmatpush1.bf16.msra.mxu0 %v2012
    %2820 = vmatprep.subr.bf16.mxu0 %v2005
    %2821 = vmatpush1.bf16.msra.mxu0 %v2004
    %2822 = vmatprep.subr.bf16.mxu0 %v2125
    %2823 = vmatpush2.bf16.msra.mxu0 %v2124
    %2824 = vmatprep.subr.bf16.mxu0 %v2117
    %2825 = vmatpush2.bf16.msra.mxu0 %v2116
    %2826 = vmatprep.subr.bf16.mxu0 %v2109
    %2827 = vmatpush2.bf16.msra.mxu0 %v2108
    %2828 = vmatprep.subr.bf16.mxu0 %v2101
    %2829 = vmatpush2.bf16.msra.mxu0 %v2100
    %2830 = vmatprep.subr.bf16.mxu0 %v2093
    %2831 = vmatpush2.bf16.msra.mxu0 %v2092
    %2832 = vmatprep.subr.bf16.mxu0 %v2085
    %2833 = vmatpush2.bf16.msra.mxu0 %v2084
    %2834 = vmatprep.subr.bf16.mxu0 %v2077
    %2835 = vmatpush2.bf16.msra.mxu0 %v2076
    %2836 = vmatprep.subr.bf16.mxu0 %v2069
    %2837 = vmatpush2.bf16.msra.mxu0 %v2068
    %2838 = vmatprep.mubr.bf16.mxu0 %v293
    %2839 = vmatmul.mubr.bf16.gmra.mxu0 %v292
    %v2840 = vpop.f32.mrf.mxu0
    %v2841 = vadd.f32 %v2800, %v2840
    %v2842 = vpop.f32.mrf.mxu0
    %v2843 = vadd.f32 %v2802, %v2842
    %v2844 = vpop.f32.mrf.mxu0
    %v2845 = vpop.f32.mrf.mxu0
    %2846 = vdwg.mxu0
    %2847 = vmatprep.subr.bf16.mxu0 %v2189
    %2848 = vmatpush1.bf16.msra.mxu0 %v2188
    %2849 = vmatprep.subr.bf16.mxu0 %v2181
    %2850 = vmatpush1.bf16.msra.mxu0 %v2180
    %2851 = vmatprep.subr.bf16.mxu0 %v2173
    %2852 = vmatpush1.bf16.msra.mxu0 %v2172
    %2853 = vmatprep.subr.bf16.mxu0 %v2165
    %2854 = vmatpush1.bf16.msra.mxu0 %v2164
    %2855 = vmatprep.subr.bf16.mxu0 %v2157
    %2856 = vmatpush1.bf16.msra.mxu0 %v2156
    %2857 = vmatprep.subr.bf16.mxu0 %v2149
    %2858 = vmatpush1.bf16.msra.mxu0 %v2148
    %2859 = vmatprep.subr.bf16.mxu0 %v2141
    %2860 = vmatpush1.bf16.msra.mxu0 %v2140
    %2861 = vmatprep.subr.bf16.mxu0 %v2133
    %2862 = vmatpush1.bf16.msra.mxu0 %v2132
    %2863 = vmatprep.subr.bf16.mxu0 %v2253
    %2864 = vmatpush2.bf16.msra.mxu0 %v2252
    %2865 = vmatprep.subr.bf16.mxu0 %v2245
    %2866 = vmatpush2.bf16.msra.mxu0 %v2244
    %2867 = vmatprep.subr.bf16.mxu0 %v2237
    %2868 = vmatpush2.bf16.msra.mxu0 %v2236
    %2869 = vmatprep.subr.bf16.mxu0 %v2229
    %2870 = vmatpush2.bf16.msra.mxu0 %v2228
    %2871 = vmatprep.subr.bf16.mxu0 %v2221
    %2872 = vmatpush2.bf16.msra.mxu0 %v2220
    %2873 = vmatprep.subr.bf16.mxu0 %v2213
    %2874 = vmatpush2.bf16.msra.mxu0 %v2212
    %2875 = vmatprep.subr.bf16.mxu0 %v2205
    %2876 = vmatpush2.bf16.msra.mxu0 %v2204
    %2877 = vmatprep.subr.bf16.mxu0 %v2197
    %2878 = vmatpush2.bf16.msra.mxu0 %v2196
    %2879 = vmatprep.mubr.bf16.mxu0 %v295
    %2880 = vmatmul.mubr.bf16.gmra.mxu0 %v294
    %v2881 = vpop.f32.mrf.mxu0
    %v2882 = vadd.f32 %v2841, %v2881
    %v2883 = vpop.f32.mrf.mxu0
    %v2884 = vadd.f32 %v2843, %v2883
    %v2885 = vpop.f32.mrf.mxu0
    %v2886 = vpop.f32.mrf.mxu0
    %2887 = vdwg.mxu0
    %2888 = vmatprep.subr.bf16.mxu0 %v1935
    %2889 = vmatpush1.bf16.msra.mxu0 %v1934
    %2890 = vmatprep.subr.bf16.mxu0 %v1927
    %2891 = vmatpush1.bf16.msra.mxu0 %v1926
    %2892 = vmatprep.subr.bf16.mxu0 %v1919
    %2893 = vmatpush1.bf16.msra.mxu0 %v1918
    %2894 = vmatprep.subr.bf16.mxu0 %v1911
    %2895 = vmatpush1.bf16.msra.mxu0 %v1910
    %2896 = vmatprep.subr.bf16.mxu0 %v1903
    %2897 = vmatpush1.bf16.msra.mxu0 %v1902
    %2898 = vmatprep.subr.bf16.mxu0 %v1895
    %2899 = vmatpush1.bf16.msra.mxu0 %v1894
    %2900 = vmatprep.subr.bf16.mxu0 %v1887
    %2901 = vmatpush1.bf16.msra.mxu0 %v1886
    %2902 = vmatprep.subr.bf16.mxu0 %v1879
    %2903 = vmatpush1.bf16.msra.mxu0 %v1878
    %2904 = vmatprep.subr.bf16.mxu0 %v1999
    %2905 = vmatpush2.bf16.msra.mxu0 %v1998
    %2906 = vmatprep.subr.bf16.mxu0 %v1991
    %2907 = vmatpush2.bf16.msra.mxu0 %v1990
    %2908 = vmatprep.subr.bf16.mxu0 %v1983
    %2909 = vmatpush2.bf16.msra.mxu0 %v1982
    %2910 = vmatprep.subr.bf16.mxu0 %v1975
    %2911 = vmatpush2.bf16.msra.mxu0 %v1974
    %2912 = vmatprep.subr.bf16.mxu0 %v1967
    %2913 = vmatpush2.bf16.msra.mxu0 %v1966
    %2914 = vmatprep.subr.bf16.mxu0 %v1959
    %2915 = vmatpush2.bf16.msra.mxu0 %v1958
    %2916 = vmatprep.subr.bf16.mxu0 %v1951
    %2917 = vmatpush2.bf16.msra.mxu0 %v1950
    %2918 = vmatprep.subr.bf16.mxu0 %v1943
    %2919 = vmatpush2.bf16.msra.mxu0 %v1942
    %2920 = vmatprep.mubr.bf16.mxu0 %v291
    %2921 = vmatmul.mubr.bf16.gmra.mxu0 %v290
    %v2922 = vpop.f32.mrf.mxu0
    %v2923 = vadd.f32 %v701, %v2922
    %v2924 = vpop.f32.mrf.mxu0
    %v2925 = vadd.f32 %v705, %v2924
    %v2926 = vpop.f32.mrf.mxu0
    %v2927 = vpop.f32.mrf.mxu0
    %2928 = vdwg.mxu0
    %2929 = vmatprep.subr.bf16.mxu0 %v2063
    %2930 = vmatpush1.bf16.msra.mxu0 %v2062
    %2931 = vmatprep.subr.bf16.mxu0 %v2055
    %2932 = vmatpush1.bf16.msra.mxu0 %v2054
    %2933 = vmatprep.subr.bf16.mxu0 %v2047
    %2934 = vmatpush1.bf16.msra.mxu0 %v2046
    %2935 = vmatprep.subr.bf16.mxu0 %v2039
    %2936 = vmatpush1.bf16.msra.mxu0 %v2038
    %2937 = vmatprep.subr.bf16.mxu0 %v2031
    %2938 = vmatpush1.bf16.msra.mxu0 %v2030
    %2939 = vmatprep.subr.bf16.mxu0 %v2023
    %2940 = vmatpush1.bf16.msra.mxu0 %v2022
    %2941 = vmatprep.subr.bf16.mxu0 %v2015
    %2942 = vmatpush1.bf16.msra.mxu0 %v2014
    %2943 = vmatprep.subr.bf16.mxu0 %v2007
    %2944 = vmatpush1.bf16.msra.mxu0 %v2006
    %2945 = vmatprep.subr.bf16.mxu0 %v2127
    %2946 = vmatpush2.bf16.msra.mxu0 %v2126
    %2947 = vmatprep.subr.bf16.mxu0 %v2119
    %2948 = vmatpush2.bf16.msra.mxu0 %v2118
    %2949 = vmatprep.subr.bf16.mxu0 %v2111
    %2950 = vmatpush2.bf16.msra.mxu0 %v2110
    %2951 = vmatprep.subr.bf16.mxu0 %v2103
    %2952 = vmatpush2.bf16.msra.mxu0 %v2102
    %2953 = vmatprep.subr.bf16.mxu0 %v2095
    %2954 = vmatpush2.bf16.msra.mxu0 %v2094
    %2955 = vmatprep.subr.bf16.mxu0 %v2087
    %2956 = vmatpush2.bf16.msra.mxu0 %v2086
    %2957 = vmatprep.subr.bf16.mxu0 %v2079
    %2958 = vmatpush2.bf16.msra.mxu0 %v2078
    %2959 = vmatprep.subr.bf16.mxu0 %v2071
    %2960 = vmatpush2.bf16.msra.mxu0 %v2070
    %2961 = vmatprep.mubr.bf16.mxu0 %v293
    %2962 = vmatmul.mubr.bf16.gmra.mxu0 %v292
    %v2963 = vpop.f32.mrf.mxu0
    %v2964 = vadd.f32 %v2923, %v2963
    %v2965 = vpop.f32.mrf.mxu0
    %v2966 = vadd.f32 %v2925, %v2965
    %v2967 = vpop.f32.mrf.mxu0
    %v2968 = vpop.f32.mrf.mxu0
    %2969 = vdwg.mxu0
    %2970 = vmatprep.subr.bf16.mxu0 %v2191
    %2971 = vmatpush1.bf16.msra.mxu0 %v2190
    %2972 = vmatprep.subr.bf16.mxu0 %v2183
    %2973 = vmatpush1.bf16.msra.mxu0 %v2182
    %2974 = vmatprep.subr.bf16.mxu0 %v2175
    %2975 = vmatpush1.bf16.msra.mxu0 %v2174
    %2976 = vmatprep.subr.bf16.mxu0 %v2167
    %2977 = vmatpush1.bf16.msra.mxu0 %v2166
    %2978 = vmatprep.subr.bf16.mxu0 %v2159
    %2979 = vmatpush1.bf16.msra.mxu0 %v2158
    %2980 = vmatprep.subr.bf16.mxu0 %v2151
    %2981 = vmatpush1.bf16.msra.mxu0 %v2150
    %2982 = vmatprep.subr.bf16.mxu0 %v2143
    %2983 = vmatpush1.bf16.msra.mxu0 %v2142
    %2984 = vmatprep.subr.bf16.mxu0 %v2135
    %2985 = vmatpush1.bf16.msra.mxu0 %v2134
    %2986 = vmatprep.subr.bf16.mxu0 %v2255
    %2987 = vmatpush2.bf16.msra.mxu0 %v2254
    %2988 = vmatprep.subr.bf16.mxu0 %v2247
    %2989 = vmatpush2.bf16.msra.mxu0 %v2246
    %2990 = vmatprep.subr.bf16.mxu0 %v2239
    %2991 = vmatpush2.bf16.msra.mxu0 %v2238
    %2992 = vmatprep.subr.bf16.mxu0 %v2231
    %2993 = vmatpush2.bf16.msra.mxu0 %v2230
    %2994 = vmatprep.subr.bf16.mxu0 %v2223
    %2995 = vmatpush2.bf16.msra.mxu0 %v2222
    %2996 = vmatprep.subr.bf16.mxu0 %v2215
    %2997 = vmatpush2.bf16.msra.mxu0 %v2214
    %2998 = vmatprep.subr.bf16.mxu0 %v2207
    %2999 = vmatpush2.bf16.msra.mxu0 %v2206
    %3000 = vmatprep.subr.bf16.mxu0 %v2199
    %3001 = vmatpush2.bf16.msra.mxu0 %v2198
    %3002 = vmatprep.mubr.bf16.mxu0 %v295
    %3003 = vmatmul.mubr.bf16.gmra.mxu0 %v294
    %v3004 = vpop.f32.mrf.mxu0
    %v3005 = vadd.f32 %v2964, %v3004
    %v3006 = vpop.f32.mrf.mxu0
    %v3007 = vadd.f32 %v2966, %v3006
    %v3008 = vpop.f32.mrf.mxu0
    %v3009 = vpop.f32.mrf.mxu0
    %3010 = vdwg.mxu0
    %3011 = vmatprep.subr.bf16.mxu0 %v1937
    %3012 = vmatpush1.bf16.msra.mxu0 %v1936
    %3013 = vmatprep.subr.bf16.mxu0 %v1929
    %3014 = vmatpush1.bf16.msra.mxu0 %v1928
    %3015 = vmatprep.subr.bf16.mxu0 %v1921
    %3016 = vmatpush1.bf16.msra.mxu0 %v1920
    %3017 = vmatprep.subr.bf16.mxu0 %v1913
    %3018 = vmatpush1.bf16.msra.mxu0 %v1912
    %3019 = vmatprep.subr.bf16.mxu0 %v1905
    %3020 = vmatpush1.bf16.msra.mxu0 %v1904
    %3021 = vmatprep.subr.bf16.mxu0 %v1897
    %3022 = vmatpush1.bf16.msra.mxu0 %v1896
    %3023 = vmatprep.subr.bf16.mxu0 %v1889
    %3024 = vmatpush1.bf16.msra.mxu0 %v1888
    %3025 = vmatprep.subr.bf16.mxu0 %v1881
    %3026 = vmatpush1.bf16.msra.mxu0 %v1880
    %3027 = vmatprep.subr.bf16.mxu0 %v2001
    %3028 = vmatpush2.bf16.msra.mxu0 %v2000
    %3029 = vmatprep.subr.bf16.mxu0 %v1993
    %3030 = vmatpush2.bf16.msra.mxu0 %v1992
    %3031 = vmatprep.subr.bf16.mxu0 %v1985
    %3032 = vmatpush2.bf16.msra.mxu0 %v1984
    %3033 = vmatprep.subr.bf16.mxu0 %v1977
    %3034 = vmatpush2.bf16.msra.mxu0 %v1976
    %3035 = vmatprep.subr.bf16.mxu0 %v1969
    %3036 = vmatpush2.bf16.msra.mxu0 %v1968
    %3037 = vmatprep.subr.bf16.mxu0 %v1961
    %3038 = vmatpush2.bf16.msra.mxu0 %v1960
    %3039 = vmatprep.subr.bf16.mxu0 %v1953
    %3040 = vmatpush2.bf16.msra.mxu0 %v1952
    %3041 = vmatprep.subr.bf16.mxu0 %v1945
    %3042 = vmatpush2.bf16.msra.mxu0 %v1944
    %3043 = vmatprep.mubr.bf16.mxu0 %v291
    %3044 = vmatmul.mubr.bf16.gmra.mxu0 %v290
    %v3045 = vpop.f32.mrf.mxu0
    %v3046 = vadd.f32 %v709, %v3045
    %v3047 = vpop.f32.mrf.mxu0
    %v3048 = vadd.f32 %v713, %v3047
    %v3049 = vpop.f32.mrf.mxu0
    %v3050 = vpop.f32.mrf.mxu0
    %3051 = vdwg.mxu0
    %3052 = vmatprep.subr.bf16.mxu0 %v2065
    %3053 = vmatpush1.bf16.msra.mxu0 %v2064
    %3054 = vmatprep.subr.bf16.mxu0 %v2057
    %3055 = vmatpush1.bf16.msra.mxu0 %v2056
    %3056 = vmatprep.subr.bf16.mxu0 %v2049
    %3057 = vmatpush1.bf16.msra.mxu0 %v2048
    %3058 = vmatprep.subr.bf16.mxu0 %v2041
    %3059 = vmatpush1.bf16.msra.mxu0 %v2040
    %3060 = vmatprep.subr.bf16.mxu0 %v2033
    %3061 = vmatpush1.bf16.msra.mxu0 %v2032
    %3062 = vmatprep.subr.bf16.mxu0 %v2025
    %3063 = vmatpush1.bf16.msra.mxu0 %v2024
    %3064 = vmatprep.subr.bf16.mxu0 %v2017
    %3065 = vmatpush1.bf16.msra.mxu0 %v2016
    %3066 = vmatprep.subr.bf16.mxu0 %v2009
    %3067 = vmatpush1.bf16.msra.mxu0 %v2008
    %3068 = vmatprep.subr.bf16.mxu0 %v2129
    %3069 = vmatpush2.bf16.msra.mxu0 %v2128
    %3070 = vmatprep.subr.bf16.mxu0 %v2121
    %3071 = vmatpush2.bf16.msra.mxu0 %v2120
    %3072 = vmatprep.subr.bf16.mxu0 %v2113
    %3073 = vmatpush2.bf16.msra.mxu0 %v2112
    %3074 = vmatprep.subr.bf16.mxu0 %v2105
    %3075 = vmatpush2.bf16.msra.mxu0 %v2104
    %3076 = vmatprep.subr.bf16.mxu0 %v2097
    %3077 = vmatpush2.bf16.msra.mxu0 %v2096
    %3078 = vmatprep.subr.bf16.mxu0 %v2089
    %3079 = vmatpush2.bf16.msra.mxu0 %v2088
    %3080 = vmatprep.subr.bf16.mxu0 %v2081
    %3081 = vmatpush2.bf16.msra.mxu0 %v2080
    %3082 = vmatprep.subr.bf16.mxu0 %v2073
    %3083 = vmatpush2.bf16.msra.mxu0 %v2072
    %3084 = vmatprep.mubr.bf16.mxu0 %v293
    %3085 = vmatmul.mubr.bf16.gmra.mxu0 %v292
    %v3086 = vpop.f32.mrf.mxu0
    %v3087 = vadd.f32 %v3046, %v3086
    %v3088 = vpop.f32.mrf.mxu0
    %v3089 = vadd.f32 %v3048, %v3088
    %v3090 = vpop.f32.mrf.mxu0
    %v3091 = vpop.f32.mrf.mxu0
    %3092 = vdwg.mxu0
    %3093 = vmatprep.subr.bf16.mxu0 %v2193
    %3094 = vmatpush1.bf16.msra.mxu0 %v2192
    %3095 = vmatprep.subr.bf16.mxu0 %v2185
    %3096 = vmatpush1.bf16.msra.mxu0 %v2184
    %3097 = vmatprep.subr.bf16.mxu0 %v2177
    %3098 = vmatpush1.bf16.msra.mxu0 %v2176
    %3099 = vmatprep.subr.bf16.mxu0 %v2169
    %3100 = vmatpush1.bf16.msra.mxu0 %v2168
    %3101 = vmatprep.subr.bf16.mxu0 %v2161
    %3102 = vmatpush1.bf16.msra.mxu0 %v2160
    %3103 = vmatprep.subr.bf16.mxu0 %v2153
    %3104 = vmatpush1.bf16.msra.mxu0 %v2152
    %3105 = vmatprep.subr.bf16.mxu0 %v2145
    %3106 = vmatpush1.bf16.msra.mxu0 %v2144
    %3107 = vmatprep.subr.bf16.mxu0 %v2137
    %3108 = vmatpush1.bf16.msra.mxu0 %v2136
    %3109 = vmatprep.subr.bf16.mxu0 %v2257
    %3110 = vmatpush2.bf16.msra.mxu0 %v2256
    %3111 = vmatprep.subr.bf16.mxu0 %v2249
    %3112 = vmatpush2.bf16.msra.mxu0 %v2248
    %3113 = vmatprep.subr.bf16.mxu0 %v2241
    %3114 = vmatpush2.bf16.msra.mxu0 %v2240
    %3115 = vmatprep.subr.bf16.mxu0 %v2233
    %3116 = vmatpush2.bf16.msra.mxu0 %v2232
    %3117 = vmatprep.subr.bf16.mxu0 %v2225
    %3118 = vmatpush2.bf16.msra.mxu0 %v2224
    %3119 = vmatprep.subr.bf16.mxu0 %v2217
    %3120 = vmatpush2.bf16.msra.mxu0 %v2216
    %3121 = vmatprep.subr.bf16.mxu0 %v2209
    %3122 = vmatpush2.bf16.msra.mxu0 %v2208
    %3123 = vmatprep.subr.bf16.mxu0 %v2201
    %3124 = vmatpush2.bf16.msra.mxu0 %v2200
    %3125 = vmatprep.mubr.bf16.mxu0 %v295
    %3126 = vmatmul.mubr.bf16.gmra.mxu0 %v294
    %v3127 = vpop.f32.mrf.mxu0
    %v3128 = vadd.f32 %v3087, %v3127
    %v3129 = vpop.f32.mrf.mxu0
    %v3130 = vadd.f32 %v3089, %v3129
    %v3131 = vpop.f32.mrf.mxu0
    %v3132 = vpop.f32.mrf.mxu0
    %3133 = vdwg.mxu0
    %v3134 = vmax.f32 %v2759, 0.0
    %v3135 = vmax.f32 %v2761, 0.0
    %v3136 = vmax.f32 %v2882, 0.0
    %v3137 = vmax.f32 %v2884, 0.0
    %v3138 = vmax.f32 %v3005, 0.0
    %v3139 = vmax.f32 %v3007, 0.0
    %v3140 = vmax.f32 %v3128, 0.0
    %v3141 = vmax.f32 %v3130, 0.0
    %v3142 = vmax.f32 %v3134, %v3136
    %v3143 = vmax.f32 %v3135, %v3137
    %v3144 = vmax.f32 %v3138, %v3140
    %v3145 = vmax.f32 %v3139, %v3141
    %v3146 = vmax.f32 %v3142, %v3144
    %v3147 = vmax.f32 %v3143, %v3145
    %v3148 = vpack.c.bf16 %v3146, %v3146
    %v3149 = vpack.c.bf16 %v3147, %v3147
    %v3150 = vld [vmem:[#allocation7] sm:$0xff]
    %v3151 = vld [vmem:[#allocation7 + $0x8] sm:$0xff]
    %v3152 = vld [vmem:[#allocation7 + $0x10] sm:$0xff]
    %v3153 = vld [vmem:[#allocation7 + $0x18] sm:$0xff]
    %v3154 = vld [vmem:[#allocation7 + $0x20] sm:$0xff]
    %v3155 = vld [vmem:[#allocation7 + $0x28] sm:$0xff]
    %v3156 = vld [vmem:[#allocation7 + $0x30] sm:$0xff]
    %v3157 = vld [vmem:[#allocation7 + $0x38] sm:$0xff]
    %v3158 = vld [vmem:[#allocation7 + $0x40] sm:$0xff]
    %v3159 = vld [vmem:[#allocation7 + $0x48] sm:$0xff]
    %v3160 = vld [vmem:[#allocation7 + $0x50] sm:$0xff]
    %v3161 = vld [vmem:[#allocation7 + $0x58] sm:$0xff]
    %v3162 = vld [vmem:[#allocation7 + $0x60] sm:$0xff]
    %v3163 = vld [vmem:[#allocation7 + $0x68] sm:$0xff]
    %v3164 = vld [vmem:[#allocation7 + $0x70] sm:$0xff]
    %v3165 = vld [vmem:[#allocation7 + $0x78] sm:$0xff]
    %v3166 = vld [vmem:[#allocation7 + $0x80] sm:$0xff]
    %v3167 = vld [vmem:[#allocation7 + $0x88] sm:$0xff]
    %v3168 = vld [vmem:[#allocation7 + $0x90] sm:$0xff]
    %v3169 = vld [vmem:[#allocation7 + $0x98] sm:$0xff]
    %v3170 = vld [vmem:[#allocation7 + $0xa0] sm:$0xff]
    %v3171 = vld [vmem:[#allocation7 + $0xa8] sm:$0xff]
    %v3172 = vld [vmem:[#allocation7 + $0xb0] sm:$0xff]
    %v3173 = vld [vmem:[#allocation7 + $0xb8] sm:$0xff]
    %v3174 = vld [vmem:[#allocation7 + $0xc0] sm:$0xff]
    %v3175 = vld [vmem:[#allocation7 + $0xc8] sm:$0xff]
    %v3176 = vld [vmem:[#allocation7 + $0xd0] sm:$0xff]
    %v3177 = vld [vmem:[#allocation7 + $0xd8] sm:$0xff]
    %v3178 = vld [vmem:[#allocation7 + $0xe0] sm:$0xff]
    %v3179 = vld [vmem:[#allocation7 + $0xe8] sm:$0xff]
    %v3180 = vld [vmem:[#allocation7 + $0xf0] sm:$0xff]
    %v3181 = vld [vmem:[#allocation7 + $0xf8] sm:$0xff]
    %v3182 = vld [vmem:[#allocation7 + $0x100] sm:$0xff]
    %v3183 = vld [vmem:[#allocation7 + $0x108] sm:$0xff]
    %v3184 = vld [vmem:[#allocation7 + $0x110] sm:$0xff]
    %v3185 = vld [vmem:[#allocation7 + $0x118] sm:$0xff]
    %v3186 = vld [vmem:[#allocation7 + $0x120] sm:$0xff]
    %v3187 = vld [vmem:[#allocation7 + $0x128] sm:$0xff]
    %v3188 = vld [vmem:[#allocation7 + $0x130] sm:$0xff]
    %v3189 = vld [vmem:[#allocation7 + $0x138] sm:$0xff]
    %v3190 = vld [vmem:[#allocation7 + $0x140] sm:$0xff]
    %v3191 = vld [vmem:[#allocation7 + $0x148] sm:$0xff]
    %v3192 = vld [vmem:[#allocation7 + $0x150] sm:$0xff]
    %v3193 = vld [vmem:[#allocation7 + $0x158] sm:$0xff]
    %v3194 = vld [vmem:[#allocation7 + $0x160] sm:$0xff]
    %v3195 = vld [vmem:[#allocation7 + $0x168] sm:$0xff]
    %v3196 = vld [vmem:[#allocation7 + $0x170] sm:$0xff]
    %v3197 = vld [vmem:[#allocation7 + $0x178] sm:$0xff]
    %v3198 = vld [vmem:[#allocation7 + $0x180] sm:$0xff]
    %v3199 = vld [vmem:[#allocation7 + $0x188] sm:$0xff]
    %v3200 = vld [vmem:[#allocation7 + $0x190] sm:$0xff]
    %v3201 = vld [vmem:[#allocation7 + $0x198] sm:$0xff]
    %v3202 = vld [vmem:[#allocation7 + $0x1a0] sm:$0xff]
    %v3203 = vld [vmem:[#allocation7 + $0x1a8] sm:$0xff]
    %v3204 = vld [vmem:[#allocation7 + $0x1b0] sm:$0xff]
    %v3205 = vld [vmem:[#allocation7 + $0x1b8] sm:$0xff]
    %v3206 = vld [vmem:[#allocation7 + $0x1c0] sm:$0xff]
    %v3207 = vld [vmem:[#allocation7 + $0x1c8] sm:$0xff]
    %v3208 = vld [vmem:[#allocation7 + $0x1d0] sm:$0xff]
    %v3209 = vld [vmem:[#allocation7 + $0x1d8] sm:$0xff]
    %v3210 = vld [vmem:[#allocation7 + $0x1e0] sm:$0xff]
    %v3211 = vld [vmem:[#allocation7 + $0x1e8] sm:$0xff]
    %v3212 = vld [vmem:[#allocation7 + $0x1f0] sm:$0xff]
    %v3213 = vld [vmem:[#allocation7 + $0x1f8] sm:$0xff]
    %v3214 = vld [vmem:[#allocation7 + $0x200] sm:$0xff]
    %v3215 = vld [vmem:[#allocation7 + $0x208] sm:$0xff]
    %v3216 = vld [vmem:[#allocation7 + $0x210] sm:$0xff]
    %v3217 = vld [vmem:[#allocation7 + $0x218] sm:$0xff]
    %v3218 = vld [vmem:[#allocation7 + $0x220] sm:$0xff]
    %v3219 = vld [vmem:[#allocation7 + $0x228] sm:$0xff]
    %v3220 = vld [vmem:[#allocation7 + $0x230] sm:$0xff]
    %v3221 = vld [vmem:[#allocation7 + $0x238] sm:$0xff]
    %v3222 = vld [vmem:[#allocation7 + $0x240] sm:$0xff]
    %v3223 = vld [vmem:[#allocation7 + $0x248] sm:$0xff]
    %v3224 = vld [vmem:[#allocation7 + $0x250] sm:$0xff]
    %v3225 = vld [vmem:[#allocation7 + $0x258] sm:$0xff]
    %v3226 = vld [vmem:[#allocation7 + $0x260] sm:$0xff]
    %v3227 = vld [vmem:[#allocation7 + $0x268] sm:$0xff]
    %v3228 = vld [vmem:[#allocation7 + $0x270] sm:$0xff]
    %v3229 = vld [vmem:[#allocation7 + $0x278] sm:$0xff]
    %v3230 = vld [vmem:[#allocation7 + $0x280] sm:$0xff]
    %v3231 = vld [vmem:[#allocation7 + $0x288] sm:$0xff]
    %v3232 = vld [vmem:[#allocation7 + $0x290] sm:$0xff]
    %v3233 = vld [vmem:[#allocation7 + $0x298] sm:$0xff]
    %v3234 = vld [vmem:[#allocation7 + $0x2a0] sm:$0xff]
    %v3235 = vld [vmem:[#allocation7 + $0x2a8] sm:$0xff]
    %v3236 = vld [vmem:[#allocation7 + $0x2b0] sm:$0xff]
    %v3237 = vld [vmem:[#allocation7 + $0x2b8] sm:$0xff]
    %v3238 = vld [vmem:[#allocation7 + $0x2c0] sm:$0xff]
    %v3239 = vld [vmem:[#allocation7 + $0x2c8] sm:$0xff]
    %v3240 = vld [vmem:[#allocation7 + $0x2d0] sm:$0xff]
    %v3241 = vld [vmem:[#allocation7 + $0x2d8] sm:$0xff]
    %v3242 = vld [vmem:[#allocation7 + $0x2e0] sm:$0xff]
    %v3243 = vld [vmem:[#allocation7 + $0x2e8] sm:$0xff]
    %v3244 = vld [vmem:[#allocation7 + $0x2f0] sm:$0xff]
    %v3245 = vld [vmem:[#allocation7 + $0x2f8] sm:$0xff]
    %v3246 = vld [vmem:[#allocation8] sm:$0x3f]
    %v3248 = vlaneseq
    %v3249 = vshrl.u32 %v3248, 7
    %v3250 = vsub.s32 0, %v3249
    %v3251 = vrot.slane %v3246, %v3250
    %v3252 = vlaneseq
    %v3253 = vshrl.u32 %v3252, 7
    %v3254 = vsub.s32 1, %v3253
    %v3255 = vrot.slane %v3246, %v3254
    %v3256 = vlaneseq
    %v3257 = vshrl.u32 %v3256, 7
    %v3258 = vsub.s32 2, %v3257
    %v3259 = vrot.slane %v3246, %v3258
    %v3260 = vlaneseq
    %v3261 = vshrl.u32 %v3260, 7
    %v3262 = vsub.s32 3, %v3261
    %v3263 = vrot.slane %v3246, %v3262
    %v3264 = vlaneseq
    %v3265 = vshrl.u32 %v3264, 7
    %v3266 = vsub.s32 4, %v3265
    %v3267 = vrot.slane %v3246, %v3266
    %v3268 = vlaneseq
    %v3269 = vshrl.u32 %v3268, 7
    %v3270 = vsub.s32 5, %v3269
    %v3271 = vrot.slane %v3246, %v3270
    %v3374 = vunpack.c.l.b16 %v3150
    %v3375 = vunpack.c.h.b16 %v3150
    %v3376 = vunpack.c.l.b16 %v3151
    %v3377 = vunpack.c.h.b16 %v3151
    %v3378 = vunpack.c.l.b16 %v3152
    %v3379 = vunpack.c.h.b16 %v3152
    %v3380 = vunpack.c.l.b16 %v3153
    %v3381 = vunpack.c.h.b16 %v3153
    %v3382 = vunpack.c.l.b16 %v3154
    %v3383 = vunpack.c.h.b16 %v3154
    %v3384 = vunpack.c.l.b16 %v3155
    %v3385 = vunpack.c.h.b16 %v3155
    %v3386 = vunpack.c.l.b16 %v3156
    %v3387 = vunpack.c.h.b16 %v3156
    %v3388 = vunpack.c.l.b16 %v3157
    %v3389 = vunpack.c.h.b16 %v3157
    %v3390 = vunpack.c.l.b16 %v3158
    %v3391 = vunpack.c.h.b16 %v3158
    %v3392 = vunpack.c.l.b16 %v3159
    %v3393 = vunpack.c.h.b16 %v3159
    %v3394 = vunpack.c.l.b16 %v3160
    %v3395 = vunpack.c.h.b16 %v3160
    %v3396 = vunpack.c.l.b16 %v3161
    %v3397 = vunpack.c.h.b16 %v3161
    %v3398 = vunpack.c.l.b16 %v3162
    %v3399 = vunpack.c.h.b16 %v3162
    %v3400 = vunpack.c.l.b16 %v3163
    %v3401 = vunpack.c.h.b16 %v3163
    %v3402 = vunpack.c.l.b16 %v3164
    %v3403 = vunpack.c.h.b16 %v3164
    %v3404 = vunpack.c.l.b16 %v3165
    %v3405 = vunpack.c.h.b16 %v3165
    %v3406 = vunpack.c.l.b16 %v3166
    %v3407 = vunpack.c.h.b16 %v3166
    %v3408 = vunpack.c.l.b16 %v3167
    %v3409 = vunpack.c.h.b16 %v3167
    %v3410 = vunpack.c.l.b16 %v3168
    %v3411 = vunpack.c.h.b16 %v3168
    %v3412 = vunpack.c.l.b16 %v3169
    %v3413 = vunpack.c.h.b16 %v3169
    %v3414 = vunpack.c.l.b16 %v3170
    %v3415 = vunpack.c.h.b16 %v3170
    %v3416 = vunpack.c.l.b16 %v3171
    %v3417 = vunpack.c.h.b16 %v3171
    %v3418 = vunpack.c.l.b16 %v3172
    %v3419 = vunpack.c.h.b16 %v3172
    %v3420 = vunpack.c.l.b16 %v3173
    %v3421 = vunpack.c.h.b16 %v3173
    %v3422 = vunpack.c.l.b16 %v3174
    %v3423 = vunpack.c.h.b16 %v3174
    %v3424 = vunpack.c.l.b16 %v3175
    %v3425 = vunpack.c.h.b16 %v3175
    %v3426 = vunpack.c.l.b16 %v3176
    %v3427 = vunpack.c.h.b16 %v3176
    %v3428 = vunpack.c.l.b16 %v3177
    %v3429 = vunpack.c.h.b16 %v3177
    %v3430 = vunpack.c.l.b16 %v3178
    %v3431 = vunpack.c.h.b16 %v3178
    %v3432 = vunpack.c.l.b16 %v3179
    %v3433 = vunpack.c.h.b16 %v3179
    %v3434 = vunpack.c.l.b16 %v3180
    %v3435 = vunpack.c.h.b16 %v3180
    %v3436 = vunpack.c.l.b16 %v3181
    %v3437 = vunpack.c.h.b16 %v3181
    %v3438 = vunpack.c.l.b16 %v3182
    %v3439 = vunpack.c.h.b16 %v3182
    %v3440 = vunpack.c.l.b16 %v3183
    %v3441 = vunpack.c.h.b16 %v3183
    %v3442 = vunpack.c.l.b16 %v3184
    %v3443 = vunpack.c.h.b16 %v3184
    %v3444 = vunpack.c.l.b16 %v3185
    %v3445 = vunpack.c.h.b16 %v3185
    %v3446 = vunpack.c.l.b16 %v3186
    %v3447 = vunpack.c.h.b16 %v3186
    %v3448 = vunpack.c.l.b16 %v3187
    %v3449 = vunpack.c.h.b16 %v3187
    %v3450 = vunpack.c.l.b16 %v3188
    %v3451 = vunpack.c.h.b16 %v3188
    %v3452 = vunpack.c.l.b16 %v3189
    %v3453 = vunpack.c.h.b16 %v3189
    %v3454 = vunpack.c.l.b16 %v3190
    %v3455 = vunpack.c.h.b16 %v3190
    %v3456 = vunpack.c.l.b16 %v3191
    %v3457 = vunpack.c.h.b16 %v3191
    %v3458 = vunpack.c.l.b16 %v3192
    %v3459 = vunpack.c.h.b16 %v3192
    %v3460 = vunpack.c.l.b16 %v3193
    %v3461 = vunpack.c.h.b16 %v3193
    %v3462 = vunpack.c.l.b16 %v3194
    %v3463 = vunpack.c.h.b16 %v3194
    %v3464 = vunpack.c.l.b16 %v3195
    %v3465 = vunpack.c.h.b16 %v3195
    %v3466 = vunpack.c.l.b16 %v3196
    %v3467 = vunpack.c.h.b16 %v3196
    %v3468 = vunpack.c.l.b16 %v3197
    %v3469 = vunpack.c.h.b16 %v3197
    %v3470 = vunpack.c.l.b16 %v3198
    %v3471 = vunpack.c.h.b16 %v3198
    %v3472 = vunpack.c.l.b16 %v3199
    %v3473 = vunpack.c.h.b16 %v3199
    %v3474 = vunpack.c.l.b16 %v3200
    %v3475 = vunpack.c.h.b16 %v3200
    %v3476 = vunpack.c.l.b16 %v3201
    %v3477 = vunpack.c.h.b16 %v3201
    %v3478 = vunpack.c.l.b16 %v3202
    %v3479 = vunpack.c.h.b16 %v3202
    %v3480 = vunpack.c.l.b16 %v3203
    %v3481 = vunpack.c.h.b16 %v3203
    %v3482 = vunpack.c.l.b16 %v3204
    %v3483 = vunpack.c.h.b16 %v3204
    %v3484 = vunpack.c.l.b16 %v3205
    %v3485 = vunpack.c.h.b16 %v3205
    %v3486 = vunpack.c.l.b16 %v3206
    %v3487 = vunpack.c.h.b16 %v3206
    %v3488 = vunpack.c.l.b16 %v3207
    %v3489 = vunpack.c.h.b16 %v3207
    %v3490 = vunpack.c.l.b16 %v3208
    %v3491 = vunpack.c.h.b16 %v3208
    %v3492 = vunpack.c.l.b16 %v3209
    %v3493 = vunpack.c.h.b16 %v3209
    %v3494 = vunpack.c.l.b16 %v3210
    %v3495 = vunpack.c.h.b16 %v3210
    %v3496 = vunpack.c.l.b16 %v3211
    %v3497 = vunpack.c.h.b16 %v3211
    %v3498 = vunpack.c.l.b16 %v3212
    %v3499 = vunpack.c.h.b16 %v3212
    %v3500 = vunpack.c.l.b16 %v3213
    %v3501 = vunpack.c.h.b16 %v3213
    %v3502 = vunpack.c.l.b16 %v3214
    %v3503 = vunpack.c.h.b16 %v3214
    %v3504 = vunpack.c.l.b16 %v3215
    %v3505 = vunpack.c.h.b16 %v3215
    %v3506 = vunpack.c.l.b16 %v3216
    %v3507 = vunpack.c.h.b16 %v3216
    %v3508 = vunpack.c.l.b16 %v3217
    %v3509 = vunpack.c.h.b16 %v3217
    %v3510 = vunpack.c.l.b16 %v3218
    %v3511 = vunpack.c.h.b16 %v3218
    %v3512 = vunpack.c.l.b16 %v3219
    %v3513 = vunpack.c.h.b16 %v3219
    %v3514 = vunpack.c.l.b16 %v3220
    %v3515 = vunpack.c.h.b16 %v3220
    %v3516 = vunpack.c.l.b16 %v3221
    %v3517 = vunpack.c.h.b16 %v3221
    %v3518 = vunpack.c.l.b16 %v3222
    %v3519 = vunpack.c.h.b16 %v3222
    %v3520 = vunpack.c.l.b16 %v3223
    %v3521 = vunpack.c.h.b16 %v3223
    %v3522 = vunpack.c.l.b16 %v3224
    %v3523 = vunpack.c.h.b16 %v3224
    %v3524 = vunpack.c.l.b16 %v3225
    %v3525 = vunpack.c.h.b16 %v3225
    %v3526 = vunpack.c.l.b16 %v3226
    %v3527 = vunpack.c.h.b16 %v3226
    %v3528 = vunpack.c.l.b16 %v3227
    %v3529 = vunpack.c.h.b16 %v3227
    %v3530 = vunpack.c.l.b16 %v3228
    %v3531 = vunpack.c.h.b16 %v3228
    %v3532 = vunpack.c.l.b16 %v3229
    %v3533 = vunpack.c.h.b16 %v3229
    %v3534 = vunpack.c.l.b16 %v3230
    %v3535 = vunpack.c.h.b16 %v3230
    %v3536 = vunpack.c.l.b16 %v3231
    %v3537 = vunpack.c.h.b16 %v3231
    %v3538 = vunpack.c.l.b16 %v3232
    %v3539 = vunpack.c.h.b16 %v3232
    %v3540 = vunpack.c.l.b16 %v3233
    %v3541 = vunpack.c.h.b16 %v3233
    %v3542 = vunpack.c.l.b16 %v3234
    %v3543 = vunpack.c.h.b16 %v3234
    %v3544 = vunpack.c.l.b16 %v3235
    %v3545 = vunpack.c.h.b16 %v3235
    %v3546 = vunpack.c.l.b16 %v3236
    %v3547 = vunpack.c.h.b16 %v3236
    %v3548 = vunpack.c.l.b16 %v3237
    %v3549 = vunpack.c.h.b16 %v3237
    %v3550 = vunpack.c.l.b16 %v3238
    %v3551 = vunpack.c.h.b16 %v3238
    %v3552 = vunpack.c.l.b16 %v3239
    %v3553 = vunpack.c.h.b16 %v3239
    %v3554 = vunpack.c.l.b16 %v3240
    %v3555 = vunpack.c.h.b16 %v3240
    %v3556 = vunpack.c.l.b16 %v3241
    %v3557 = vunpack.c.h.b16 %v3241
    %v3558 = vunpack.c.l.b16 %v3242
    %v3559 = vunpack.c.h.b16 %v3242
    %v3560 = vunpack.c.l.b16 %v3243
    %v3561 = vunpack.c.h.b16 %v3243
    %v3562 = vunpack.c.l.b16 %v3244
    %v3563 = vunpack.c.h.b16 %v3244
    %v3564 = vunpack.c.l.b16 %v3245
    %v3565 = vunpack.c.h.b16 %v3245
    %v3566 = vpack.c.b16 %v3380, %v3374
    %v3567 = vpack.c.b16 %v3381, %v3375
    %v3568 = vpack.c.b16 %v3382, %v3376
    %v3569 = vpack.c.b16 %v3383, %v3377
    %v3570 = vpack.c.b16 %v3384, %v3378
    %v3571 = vpack.c.b16 %v3385, %v3379
    %v3572 = vpack.c.b16 %v3392, %v3386
    %v3573 = vpack.c.b16 %v3393, %v3387
    %v3574 = vpack.c.b16 %v3394, %v3388
    %v3575 = vpack.c.b16 %v3395, %v3389
    %v3576 = vpack.c.b16 %v3396, %v3390
    %v3577 = vpack.c.b16 %v3397, %v3391
    %v3578 = vpack.c.b16 %v3404, %v3398
    %v3579 = vpack.c.b16 %v3405, %v3399
    %v3580 = vpack.c.b16 %v3406, %v3400
    %v3581 = vpack.c.b16 %v3407, %v3401
    %v3582 = vpack.c.b16 %v3408, %v3402
    %v3583 = vpack.c.b16 %v3409, %v3403
    %v3584 = vpack.c.b16 %v3416, %v3410
    %v3585 = vpack.c.b16 %v3417, %v3411
    %v3586 = vpack.c.b16 %v3418, %v3412
    %v3587 = vpack.c.b16 %v3419, %v3413
    %v3588 = vpack.c.b16 %v3420, %v3414
    %v3589 = vpack.c.b16 %v3421, %v3415
    %v3590 = vpack.c.b16 %v3428, %v3422
    %v3591 = vpack.c.b16 %v3429, %v3423
    %v3592 = vpack.c.b16 %v3430, %v3424
    %v3593 = vpack.c.b16 %v3431, %v3425
    %v3594 = vpack.c.b16 %v3432, %v3426
    %v3595 = vpack.c.b16 %v3433, %v3427
    %v3596 = vpack.c.b16 %v3440, %v3434
    %v3597 = vpack.c.b16 %v3441, %v3435
    %v3598 = vpack.c.b16 %v3442, %v3436
    %v3599 = vpack.c.b16 %v3443, %v3437
    %v3600 = vpack.c.b16 %v3444, %v3438
    %v3601 = vpack.c.b16 %v3445, %v3439
    %v3602 = vpack.c.b16 %v3452, %v3446
    %v3603 = vpack.c.b16 %v3453, %v3447
    %v3604 = vpack.c.b16 %v3454, %v3448
    %v3605 = vpack.c.b16 %v3455, %v3449
    %v3606 = vpack.c.b16 %v3456, %v3450
    %v3607 = vpack.c.b16 %v3457, %v3451
    %v3608 = vpack.c.b16 %v3464, %v3458
    %v3609 = vpack.c.b16 %v3465, %v3459
    %v3610 = vpack.c.b16 %v3466, %v3460
    %v3611 = vpack.c.b16 %v3467, %v3461
    %v3612 = vpack.c.b16 %v3468, %v3462
    %v3613 = vpack.c.b16 %v3469, %v3463
    %v3614 = vpack.c.b16 %v3476, %v3470
    %v3615 = vpack.c.b16 %v3477, %v3471
    %v3616 = vpack.c.b16 %v3478, %v3472
    %v3617 = vpack.c.b16 %v3479, %v3473
    %v3618 = vpack.c.b16 %v3480, %v3474
    %v3619 = vpack.c.b16 %v3481, %v3475
    %v3620 = vpack.c.b16 %v3488, %v3482
    %v3621 = vpack.c.b16 %v3489, %v3483
    %v3622 = vpack.c.b16 %v3490, %v3484
    %v3623 = vpack.c.b16 %v3491, %v3485
    %v3624 = vpack.c.b16 %v3492, %v3486
    %v3625 = vpack.c.b16 %v3493, %v3487
    %v3626 = vpack.c.b16 %v3500, %v3494
    %v3627 = vpack.c.b16 %v3501, %v3495
    %v3628 = vpack.c.b16 %v3502, %v3496
    %v3629 = vpack.c.b16 %v3503, %v3497
    %v3630 = vpack.c.b16 %v3504, %v3498
    %v3631 = vpack.c.b16 %v3505, %v3499
    %v3632 = vpack.c.b16 %v3512, %v3506
    %v3633 = vpack.c.b16 %v3513, %v3507
    %v3634 = vpack.c.b16 %v3514, %v3508
    %v3635 = vpack.c.b16 %v3515, %v3509
    %v3636 = vpack.c.b16 %v3516, %v3510
    %v3637 = vpack.c.b16 %v3517, %v3511
    %v3638 = vpack.c.b16 %v3524, %v3518
    %v3639 = vpack.c.b16 %v3525, %v3519
    %v3640 = vpack.c.b16 %v3526, %v3520
    %v3641 = vpack.c.b16 %v3527, %v3521
    %v3642 = vpack.c.b16 %v3528, %v3522
    %v3643 = vpack.c.b16 %v3529, %v3523
    %v3644 = vpack.c.b16 %v3536, %v3530
    %v3645 = vpack.c.b16 %v3537, %v3531
    %v3646 = vpack.c.b16 %v3538, %v3532
    %v3647 = vpack.c.b16 %v3539, %v3533
    %v3648 = vpack.c.b16 %v3540, %v3534
    %v3649 = vpack.c.b16 %v3541, %v3535
    %v3650 = vpack.c.b16 %v3548, %v3542
    %v3651 = vpack.c.b16 %v3549, %v3543
    %v3652 = vpack.c.b16 %v3550, %v3544
    %v3653 = vpack.c.b16 %v3551, %v3545
    %v3654 = vpack.c.b16 %v3552, %v3546
    %v3655 = vpack.c.b16 %v3553, %v3547
    %v3656 = vpack.c.b16 %v3560, %v3554
    %v3657 = vpack.c.b16 %v3561, %v3555
    %v3658 = vpack.c.b16 %v3562, %v3556
    %v3659 = vpack.c.b16 %v3563, %v3557
    %v3660 = vpack.c.b16 %v3564, %v3558
    %v3661 = vpack.c.b16 %v3565, %v3559
    %3758 = vmatprep.subr.bf16.mxu0 %v3609
    %3759 = vmatpush1.bf16.msra.mxu0 %v3608
    %3760 = vmatprep.subr.bf16.mxu0 %v3603
    %3761 = vmatpush1.bf16.msra.mxu0 %v3602
    %3762 = vmatprep.subr.bf16.mxu0 %v3597
    %3763 = vmatpush1.bf16.msra.mxu0 %v3596
    %3764 = vmatprep.subr.bf16.mxu0 %v3591
    %3765 = vmatpush1.bf16.msra.mxu0 %v3590
    %3766 = vmatprep.subr.bf16.mxu0 %v3585
    %3767 = vmatpush1.bf16.msra.mxu0 %v3584
    %3768 = vmatprep.subr.bf16.mxu0 %v3579
    %3769 = vmatpush1.bf16.msra.mxu0 %v3578
    %3770 = vmatprep.subr.bf16.mxu0 %v3573
    %3771 = vmatpush1.bf16.msra.mxu0 %v3572
    %3772 = vmatprep.subr.bf16.mxu0 %v3567
    %3773 = vmatpush1.bf16.msra.mxu0 %v3566
    %3774 = vmatprep.subr.bf16.mxu0 %v3657
    %3775 = vmatpush2.bf16.msra.mxu0 %v3656
    %3776 = vmatprep.subr.bf16.mxu0 %v3651
    %3777 = vmatpush2.bf16.msra.mxu0 %v3650
    %3778 = vmatprep.subr.bf16.mxu0 %v3645
    %3779 = vmatpush2.bf16.msra.mxu0 %v3644
    %3780 = vmatprep.subr.bf16.mxu0 %v3639
    %3781 = vmatpush2.bf16.msra.mxu0 %v3638
    %3782 = vmatprep.subr.bf16.mxu0 %v3633
    %3783 = vmatpush2.bf16.msra.mxu0 %v3632
    %3784 = vmatprep.subr.bf16.mxu0 %v3627
    %3785 = vmatpush2.bf16.msra.mxu0 %v3626
    %3786 = vmatprep.subr.bf16.mxu0 %v3621
    %3787 = vmatpush2.bf16.msra.mxu0 %v3620
    %3788 = vmatprep.subr.bf16.mxu0 %v3615
    %3789 = vmatpush2.bf16.msra.mxu0 %v3614
    %3790 = vmatprep.mubr.bf16.mxu0 %v3149
    %3791 = vmatmul.mubr.bf16.gmra.mxu0 %v3148
    %v3792 = vpop.f32.mrf.mxu0
    %v3793 = vadd.f32 %v3251, %v3792
    %v3794 = vpop.f32.mrf.mxu0
    %v3795 = vadd.f32 %v3255, %v3794
    %v3796 = vpop.f32.mrf.mxu0
    %v3797 = vpop.f32.mrf.mxu0
    %3798 = vdwg.mxu0
    %3799 = vmatprep.subr.bf16.mxu0 %v3611
    %3800 = vmatpush1.bf16.msra.mxu0 %v3610
    %3801 = vmatprep.subr.bf16.mxu0 %v3605
    %3802 = vmatpush1.bf16.msra.mxu0 %v3604
    %3803 = vmatprep.subr.bf16.mxu0 %v3599
    %3804 = vmatpush1.bf16.msra.mxu0 %v3598
    %3805 = vmatprep.subr.bf16.mxu0 %v3593
    %3806 = vmatpush1.bf16.msra.mxu0 %v3592
    %3807 = vmatprep.subr.bf16.mxu0 %v3587
    %3808 = vmatpush1.bf16.msra.mxu0 %v3586
    %3809 = vmatprep.subr.bf16.mxu0 %v3581
    %3810 = vmatpush1.bf16.msra.mxu0 %v3580
    %3811 = vmatprep.subr.bf16.mxu0 %v3575
    %3812 = vmatpush1.bf16.msra.mxu0 %v3574
    %3813 = vmatprep.subr.bf16.mxu0 %v3569
    %3814 = vmatpush1.bf16.msra.mxu0 %v3568
    %3815 = vmatprep.subr.bf16.mxu0 %v3659
    %3816 = vmatpush2.bf16.msra.mxu0 %v3658
    %3817 = vmatprep.subr.bf16.mxu0 %v3653
    %3818 = vmatpush2.bf16.msra.mxu0 %v3652
    %3819 = vmatprep.subr.bf16.mxu0 %v3647
    %3820 = vmatpush2.bf16.msra.mxu0 %v3646
    %3821 = vmatprep.subr.bf16.mxu0 %v3641
    %3822 = vmatpush2.bf16.msra.mxu0 %v3640
    %3823 = vmatprep.subr.bf16.mxu0 %v3635
    %3824 = vmatpush2.bf16.msra.mxu0 %v3634
    %3825 = vmatprep.subr.bf16.mxu0 %v3629
    %3826 = vmatpush2.bf16.msra.mxu0 %v3628
    %3827 = vmatprep.subr.bf16.mxu0 %v3623
    %3828 = vmatpush2.bf16.msra.mxu0 %v3622
    %3829 = vmatprep.subr.bf16.mxu0 %v3617
    %3830 = vmatpush2.bf16.msra.mxu0 %v3616
    %3831 = vmatprep.mubr.bf16.mxu0 %v3149
    %3832 = vmatmul.mubr.bf16.gmra.mxu0 %v3148
    %v3833 = vpop.f32.mrf.mxu0
    %v3834 = vadd.f32 %v3259, %v3833
    %v3835 = vpop.f32.mrf.mxu0
    %v3836 = vadd.f32 %v3263, %v3835
    %v3837 = vpop.f32.mrf.mxu0
    %v3838 = vpop.f32.mrf.mxu0
    %3839 = vdwg.mxu0
    %3840 = vmatprep.subr.bf16.mxu0 %v3613
    %3841 = vmatpush1.bf16.msra.mxu0 %v3612
    %3842 = vmatprep.subr.bf16.mxu0 %v3607
    %3843 = vmatpush1.bf16.msra.mxu0 %v3606
    %3844 = vmatprep.subr.bf16.mxu0 %v3601
    %3845 = vmatpush1.bf16.msra.mxu0 %v3600
    %3846 = vmatprep.subr.bf16.mxu0 %v3595
    %3847 = vmatpush1.bf16.msra.mxu0 %v3594
    %3848 = vmatprep.subr.bf16.mxu0 %v3589
    %3849 = vmatpush1.bf16.msra.mxu0 %v3588
    %3850 = vmatprep.subr.bf16.mxu0 %v3583
    %3851 = vmatpush1.bf16.msra.mxu0 %v3582
    %3852 = vmatprep.subr.bf16.mxu0 %v3577
    %3853 = vmatpush1.bf16.msra.mxu0 %v3576
    %3854 = vmatprep.subr.bf16.mxu0 %v3571
    %3855 = vmatpush1.bf16.msra.mxu0 %v3570
    %3856 = vmatprep.subr.bf16.mxu0 %v3661
    %3857 = vmatpush2.bf16.msra.mxu0 %v3660
    %3858 = vmatprep.subr.bf16.mxu0 %v3655
    %3859 = vmatpush2.bf16.msra.mxu0 %v3654
    %3860 = vmatprep.subr.bf16.mxu0 %v3649
    %3861 = vmatpush2.bf16.msra.mxu0 %v3648
    %3862 = vmatprep.subr.bf16.mxu0 %v3643
    %3863 = vmatpush2.bf16.msra.mxu0 %v3642
    %3864 = vmatprep.subr.bf16.mxu0 %v3637
    %3865 = vmatpush2.bf16.msra.mxu0 %v3636
    %3866 = vmatprep.subr.bf16.mxu0 %v3631
    %3867 = vmatpush2.bf16.msra.mxu0 %v3630
    %3868 = vmatprep.subr.bf16.mxu0 %v3625
    %3869 = vmatpush2.bf16.msra.mxu0 %v3624
    %3870 = vmatprep.subr.bf16.mxu0 %v3619
    %3871 = vmatpush2.bf16.msra.mxu0 %v3618
    %3872 = vmatprep.mubr.bf16.mxu0 %v3149
    %3873 = vmatmul.mubr.bf16.gmra.mxu0 %v3148
    %v3874 = vpop.f32.mrf.mxu0
    %v3875 = vadd.f32 %v3267, %v3874
    %v3876 = vpop.f32.mrf.mxu0
    %v3877 = vadd.f32 %v3271, %v3876
    %v3878 = vpop.f32.mrf.mxu0
    %v3879 = vpop.f32.mrf.mxu0
    %3880 = vdwg.mxu0
    %3881 = vmatprep.subr.mxu0 0.0
    %3882 = vmatpush1.xpose.msra.mxu0 0.0
    %3883 = vmatprep.subr.mxu0 0.0
    %3884 = vmatpush1.xpose.msra.mxu0 0.0
    %3885 = vmatprep.subr.mxu0 0.0
    %3886 = vmatpush1.xpose.msra.mxu0 0.0
    %3887 = vmatprep.subr.mxu0 0.0
    %3888 = vmatpush1.xpose.msra.mxu0 0.0
    %3889 = vmatprep.subr.mxu0 0.0
    %3890 = vmatpush1.xpose.msra.mxu0 0.0
    %3891 = vmatprep.subr.mxu0 0.0
    %3892 = vmatpush1.xpose.msra.mxu0 0.0
    %3893 = vmatprep.subr.mxu0 0.0
    %3894 = vmatpush1.xpose.msra.mxu0 0.0
    %3895 = vmatprep.subr.mxu0 0.0
    %3896 = vmatpush1.xpose.msra.mxu0 0.0
    %3897 = vmatprep.subr.mxu0 0.0
    %3898 = vmatpush1.xpose.msra.mxu0 0.0
    %3899 = vmatprep.subr.mxu0 0.0
    %3900 = vmatpush1.xpose.msra.mxu0 0.0
    %3901 = vmatprep.subr.mxu0 0.0
    %3902 = vmatpush1.xpose.msra.mxu0 0.0
    %3903 = vmatprep.subr.mxu0 0.0
    %3904 = vmatpush1.xpose.msra.mxu0 0.0
    %3905 = vmatprep.subr.mxu0 0.0
    %3906 = vmatpush1.xpose.msra.mxu0 0.0
    %3907 = vmatprep.subr.mxu0 0.0
    %3908 = vmatpush1.xpose.msra.mxu0 0.0
    %3909 = vmatprep.subr.mxu0 0.0
    %3910 = vmatpush1.xpose.msra.mxu0 0.0
    %3911 = vmatprep.subr.mxu0 0.0
    %3912 = vmatpush1.xpose.msra.mxu0 %v3834
    %3913 = vmatprep.subr.mxu0 0.0
    %3914 = vmatpush2.xpose.msra.mxu0 0.0
    %3915 = vmatprep.subr.mxu0 0.0
    %3916 = vmatpush2.xpose.msra.mxu0 0.0
    %3917 = vmatprep.subr.mxu0 0.0
    %3918 = vmatpush2.xpose.msra.mxu0 0.0
    %3919 = vmatprep.subr.mxu0 0.0
    %3920 = vmatpush2.xpose.msra.mxu0 0.0
    %3921 = vmatprep.subr.mxu0 0.0
    %3922 = vmatpush2.xpose.msra.mxu0 0.0
    %3923 = vmatprep.subr.mxu0 0.0
    %3924 = vmatpush2.xpose.msra.mxu0 0.0
    %3925 = vmatprep.subr.mxu0 0.0
    %3926 = vmatpush2.xpose.msra.mxu0 0.0
    %3927 = vmatprep.subr.mxu0 0.0
    %3928 = vmatpush2.xpose.msra.mxu0 0.0
    %3929 = vmatprep.subr.mxu0 0.0
    %3930 = vmatpush2.xpose.msra.mxu0 0.0
    %3931 = vmatprep.subr.mxu0 0.0
    %3932 = vmatpush2.xpose.msra.mxu0 0.0
    %3933 = vmatprep.subr.mxu0 0.0
    %3934 = vmatpush2.xpose.msra.mxu0 0.0
    %3935 = vmatprep.subr.mxu0 0.0
    %3936 = vmatpush2.xpose.msra.mxu0 0.0
    %3937 = vmatprep.subr.mxu0 0.0
    %3938 = vmatpush2.xpose.msra.mxu0 0.0
    %3939 = vmatprep.subr.mxu0 0.0
    %3940 = vmatpush2.xpose.msra.mxu0 0.0
    %3941 = vmatprep.subr.mxu0 0.0
    %3942 = vmatpush2.xpose.msra.mxu0 0.0
    %3943 = vmatprep.subr.mxu0 0.0
    %3944 = vmatpush2.xpose.msra.mxu0 0.0
    %3945 = vmatprep.mubr.f32.mxu0 0.0
    %3946 = vmatmul.mubr.f32.gmra.mxu0 %v3793
    %v3947 = vpop.f32.mrf.mxu0
    %v3948 = vadd.f32 0.0, %v3947
    %v3949 = vpop.f32.mrf.mxu0
    %3950 = vdwg.mxu0
    %v3951 = vmul.f32 %v3948, 0.088388346
    %vm3952 = vcmask 9216
    %v3953 = vsel %vm3952, %v3951, -inf
    %3954 = vmax.xlane.f32.xlu0 %v3953
    %v3955 = vpop.xlane.xlu0 %3954
    %v3956 = vsub.f32 %v3951, %v3955
    %v3957 = vmul.f32 %v3956, 1.442695
    %v3958 = vpow.pop %v3957
    %v3959 = vsel %vm3952, %v3958, 0.0
    %3960 = vadd.xlane.f32.xlu0 %v3959
    %v3961 = vpop.xlane.xlu0 %3960
    %v3962 = vrcp.pop %v3961
    %v3963 = vmul.f32 %v3958, %v3962
    %vm3964 = vcmask 15360
    %v3966 = vsel %vm3964, %v3963, 0
    %vm3968 = vcmask 1041408
    %v3970 = vsel %vm3968, %v3875, 0
    %3972 = vmatprep.subr.mxu0 0.0
    %3973 = vmatpush1.msra.mxu0 0.0
    %3974 = vmatprep.subr.mxu0 0.0
    %3975 = vmatpush1.msra.mxu0 0.0
    %3976 = vmatprep.subr.mxu0 0.0
    %3977 = vmatpush1.msra.mxu0 0.0
    %3978 = vmatprep.subr.mxu0 0.0
    %3979 = vmatpush1.msra.mxu0 0.0
    %3980 = vmatprep.subr.mxu0 0.0
    %3981 = vmatpush1.msra.mxu0 0.0
    %3982 = vmatprep.subr.mxu0 0.0
    %3983 = vmatpush1.msra.mxu0 0.0
    %3984 = vmatprep.subr.mxu0 0.0
    %3985 = vmatpush1.msra.mxu0 0.0
    %3986 = vmatprep.subr.mxu0 0.0
    %3987 = vmatpush1.msra.mxu0 0.0
    %3988 = vmatprep.subr.mxu0 0.0
    %3989 = vmatpush1.msra.mxu0 0.0
    %3990 = vmatprep.subr.mxu0 0.0
    %3991 = vmatpush1.msra.mxu0 0.0
    %3992 = vmatprep.subr.mxu0 0.0
    %3993 = vmatpush1.msra.mxu0 0.0
    %3994 = vmatprep.subr.mxu0 0.0
    %3995 = vmatpush1.msra.mxu0 0.0
    %3996 = vmatprep.subr.mxu0 0.0
    %3997 = vmatpush1.msra.mxu0 0.0
    %3998 = vmatprep.subr.mxu0 0.0
    %3999 = vmatpush1.msra.mxu0 0.0
    %4000 = vmatprep.subr.mxu0 0.0
    %4001 = vmatpush1.msra.mxu0 0.0
    %4002 = vmatprep.subr.mxu0 0.0
    %4003 = vmatpush1.msra.mxu0 %v3970
    %4004 = vmatprep.subr.mxu0 0.0
    %4005 = vmatpush2.msra.mxu0 0.0
    %4006 = vmatprep.subr.mxu0 0.0
    %4007 = vmatpush2.msra.mxu0 0.0
    %4008 = vmatprep.subr.mxu0 0.0
    %4009 = vmatpush2.msra.mxu0 0.0
    %4010 = vmatprep.subr.mxu0 0.0
    %4011 = vmatpush2.msra.mxu0 0.0
    %4012 = vmatprep.subr.mxu0 0.0
    %4013 = vmatpush2.msra.mxu0 0.0
    %4014 = vmatprep.subr.mxu0 0.0
    %4015 = vmatpush2.msra.mxu0 0.0
    %4016 = vmatprep.subr.mxu0 0.0
    %4017 = vmatpush2.msra.mxu0 0.0
    %4018 = vmatprep.subr.mxu0 0.0
    %4019 = vmatpush2.msra.mxu0 0.0
    %4020 = vmatprep.subr.mxu0 0.0
    %4021 = vmatpush2.msra.mxu0 0.0
    %4022 = vmatprep.subr.mxu0 0.0
    %4023 = vmatpush2.msra.mxu0 0.0
    %4024 = vmatprep.subr.mxu0 0.0
    %4025 = vmatpush2.msra.mxu0 0.0
    %4026 = vmatprep.subr.mxu0 0.0
    %4027 = vmatpush2.msra.mxu0 0.0
    %4028 = vmatprep.subr.mxu0 0.0
    %4029 = vmatpush2.msra.mxu0 0.0
    %4030 = vmatprep.subr.mxu0 0.0
    %4031 = vmatpush2.msra.mxu0 0.0
    %4032 = vmatprep.subr.mxu0 0.0
    %4033 = vmatpush2.msra.mxu0 0.0
    %4034 = vmatprep.subr.mxu0 0.0
    %4035 = vmatpush2.msra.mxu0 0.0
    %4036 = vmatprep.mubr.f32.mxu0 0.0
    %4037 = vmatmul.mubr.f32.gmra.mxu0 %v3966
    %v4038 = vpop.f32.mrf.mxu0
    %v4039 = vadd.f32 0.0, %v4038
    %v4040 = vpop.f32.mrf.mxu0
    %4041 = vdwg.mxu0
    %v4042 = vpack.c.bf16 %v4039, %v4039
    %v4043 = vld [vmem:[#allocation10] sm:$0xff]
    %v4044 = vld [vmem:[#allocation10 + $0x8] sm:$0xff]
    %v4045 = vld [vmem:[#allocation10 + $0x10] sm:$0xff]
    %v4046 = vld [vmem:[#allocation10 + $0x18] sm:$0xff]
    %v4047 = vld [vmem:[#allocation10 + $0x20] sm:$0xff]
    %v4048 = vld [vmem:[#allocation10 + $0x28] sm:$0xff]
    %v4049 = vld [vmem:[#allocation10 + $0x30] sm:$0xff]
    %v4050 = vld [vmem:[#allocation10 + $0x38] sm:$0xff]
    %v4051 = vld [vmem:[#allocation10 + $0x40] sm:$0xff]
    %v4052 = vld [vmem:[#allocation10 + $0x48] sm:$0xff]
    %v4053 = vld [vmem:[#allocation10 + $0x50] sm:$0xff]
    %v4054 = vld [vmem:[#allocation10 + $0x58] sm:$0xff]
    %v4055 = vld [vmem:[#allocation10 + $0x60] sm:$0xff]
    %v4056 = vld [vmem:[#allocation10 + $0x68] sm:$0xff]
    %v4057 = vld [vmem:[#allocation10 + $0x70] sm:$0xff]
    %v4058 = vld [vmem:[#allocation10 + $0x78] sm:$0xff]
    %4059 = vmatprep.subr.mxu0 0.0
    %4060 = vmatpush1.xpose.msra.mxu0 0.0
    %4061 = vmatprep.subr.mxu0 0.0
    %4062 = vmatpush1.xpose.msra.mxu0 0.0
    %4063 = vmatprep.subr.mxu0 0.0
    %4064 = vmatpush1.xpose.msra.mxu0 0.0
    %4065 = vmatprep.subr.mxu0 0.0
    %4066 = vmatpush1.xpose.msra.mxu0 0.0
    %4067 = vmatprep.subr.mxu0 0.0
    %4068 = vmatpush1.xpose.msra.mxu0 0.0
    %4069 = vmatprep.subr.mxu0 0.0
    %4070 = vmatpush1.xpose.msra.mxu0 0.0
    %4071 = vmatprep.subr.mxu0 0.0
    %4072 = vmatpush1.xpose.msra.mxu0 0.0
    %4073 = vmatprep.subr.mxu0 0.0
    %4074 = vmatpush1.xpose.msra.mxu0 0.0
    %4075 = vmatprep.subr.mxu0 0.0
    %4076 = vmatpush1.xpose.msra.mxu0 0.0
    %4077 = vmatprep.subr.mxu0 0.0
    %4078 = vmatpush1.xpose.msra.mxu0 0.0
    %4079 = vmatprep.subr.mxu0 0.0
    %4080 = vmatpush1.xpose.msra.mxu0 0.0
    %4081 = vmatprep.subr.mxu0 0.0
    %4082 = vmatpush1.xpose.msra.mxu0 0.0
    %4083 = vmatprep.subr.mxu0 0.0
    %4084 = vmatpush1.xpose.msra.mxu0 0.0
    %4085 = vmatprep.subr.mxu0 0.0
    %4086 = vmatpush1.xpose.msra.mxu0 0.0
    %4087 = vmatprep.subr.mxu0 0.0
    %4088 = vmatpush1.xpose.msra.mxu0 0.0
    %4089 = vmatprep.subr.mxu0 0.0
    %4090 = vmatpush1.xpose.msra.mxu0 %v3836
    %4091 = vmatprep.subr.mxu0 0.0
    %4092 = vmatpush2.xpose.msra.mxu0 0.0
    %4093 = vmatprep.subr.mxu0 0.0
    %4094 = vmatpush2.xpose.msra.mxu0 0.0
    %4095 = vmatprep.subr.mxu0 0.0
    %4096 = vmatpush2.xpose.msra.mxu0 0.0
    %4097 = vmatprep.subr.mxu0 0.0
    %4098 = vmatpush2.xpose.msra.mxu0 0.0
    %4099 = vmatprep.subr.mxu0 0.0
    %4100 = vmatpush2.xpose.msra.mxu0 0.0
    %4101 = vmatprep.subr.mxu0 0.0
    %4102 = vmatpush2.xpose.msra.mxu0 0.0
    %4103 = vmatprep.subr.mxu0 0.0
    %4104 = vmatpush2.xpose.msra.mxu0 0.0
    %4105 = vmatprep.subr.mxu0 0.0
    %4106 = vmatpush2.xpose.msra.mxu0 0.0
    %4107 = vmatprep.subr.mxu0 0.0
    %4108 = vmatpush2.xpose.msra.mxu0 0.0
    %4109 = vmatprep.subr.mxu0 0.0
    %4110 = vmatpush2.xpose.msra.mxu0 0.0
    %4111 = vmatprep.subr.mxu0 0.0
    %4112 = vmatpush2.xpose.msra.mxu0 0.0
    %4113 = vmatprep.subr.mxu0 0.0
    %4114 = vmatpush2.xpose.msra.mxu0 0.0
    %4115 = vmatprep.subr.mxu0 0.0
    %4116 = vmatpush2.xpose.msra.mxu0 0.0
    %4117 = vmatprep.subr.mxu0 0.0
    %4118 = vmatpush2.xpose.msra.mxu0 0.0
    %4119 = vmatprep.subr.mxu0 0.0
    %4120 = vmatpush2.xpose.msra.mxu0 0.0
    %4121 = vmatprep.subr.mxu0 0.0
    %4122 = vmatpush2.xpose.msra.mxu0 0.0
    %4123 = vmatprep.mubr.f32.mxu0 0.0
    %4124 = vmatmul.mubr.f32.gmra.mxu0 %v3795
    %v4125 = vpop.f32.mrf.mxu0
    %v4126 = vadd.f32 0.0, %v4125
    %v4127 = vpop.f32.mrf.mxu0
    %4128 = vdwg.mxu0
    %v4129 = vmul.f32 %v4126, 0.088388346
    %v4130 = vsel %vm3952, %v4129, -inf
    %4131 = vmax.xlane.f32.xlu0 %v4130
    %v4132 = vpop.xlane.xlu0 %4131
    %v4133 = vsub.f32 %v4129, %v4132
    %v4134 = vmul.f32 %v4133, 1.442695
    %v4135 = vpow.pop %v4134
    %v4136 = vsel %vm3952, %v4135, 0.0
    %4137 = vadd.xlane.f32.xlu0 %v4136
    %v4138 = vpop.xlane.xlu0 %4137
    %v4139 = vrcp.pop %v4138
    %v4140 = vmul.f32 %v4135, %v4139
    %v4142 = vsel %vm3964, %v4140, 0
    %v4145 = vsel %vm3968, %v3877, 0
    %4147 = vmatprep.subr.mxu0 0.0
    %4148 = vmatpush1.msra.mxu0 0.0
    %4149 = vmatprep.subr.mxu0 0.0
    %4150 = vmatpush1.msra.mxu0 0.0
    %4151 = vmatprep.subr.mxu0 0.0
    %4152 = vmatpush1.msra.mxu0 0.0
    %4153 = vmatprep.subr.mxu0 0.0
    %4154 = vmatpush1.msra.mxu0 0.0
    %4155 = vmatprep.subr.mxu0 0.0
    %4156 = vmatpush1.msra.mxu0 0.0
    %4157 = vmatprep.subr.mxu0 0.0
    %4158 = vmatpush1.msra.mxu0 0.0
    %4159 = vmatprep.subr.mxu0 0.0
    %4160 = vmatpush1.msra.mxu0 0.0
    %4161 = vmatprep.subr.mxu0 0.0
    %4162 = vmatpush1.msra.mxu0 0.0
    %4163 = vmatprep.subr.mxu0 0.0
    %4164 = vmatpush1.msra.mxu0 0.0
    %4165 = vmatprep.subr.mxu0 0.0
    %4166 = vmatpush1.msra.mxu0 0.0
    %4167 = vmatprep.subr.mxu0 0.0
    %4168 = vmatpush1.msra.mxu0 0.0
    %4169 = vmatprep.subr.mxu0 0.0
    %4170 = vmatpush1.msra.mxu0 0.0
    %4171 = vmatprep.subr.mxu0 0.0
    %4172 = vmatpush1.msra.mxu0 0.0
    %4173 = vmatprep.subr.mxu0 0.0
    %4174 = vmatpush1.msra.mxu0 0.0
    %4175 = vmatprep.subr.mxu0 0.0
    %4176 = vmatpush1.msra.mxu0 0.0
    %4177 = vmatprep.subr.mxu0 0.0
    %4178 = vmatpush1.msra.mxu0 %v4145
    %4179 = vmatprep.subr.mxu0 0.0
    %4180 = vmatpush2.msra.mxu0 0.0
    %4181 = vmatprep.subr.mxu0 0.0
    %4182 = vmatpush2.msra.mxu0 0.0
    %4183 = vmatprep.subr.mxu0 0.0
    %4184 = vmatpush2.msra.mxu0 0.0
    %4185 = vmatprep.subr.mxu0 0.0
    %4186 = vmatpush2.msra.mxu0 0.0
    %4187 = vmatprep.subr.mxu0 0.0
    %4188 = vmatpush2.msra.mxu0 0.0
    %4189 = vmatprep.subr.mxu0 0.0
    %4190 = vmatpush2.msra.mxu0 0.0
    %4191 = vmatprep.subr.mxu0 0.0
    %4192 = vmatpush2.msra.mxu0 0.0
    %4193 = vmatprep.subr.mxu0 0.0
    %4194 = vmatpush2.msra.mxu0 0.0
    %4195 = vmatprep.subr.mxu0 0.0
    %4196 = vmatpush2.msra.mxu0 0.0
    %4197 = vmatprep.subr.mxu0 0.0
    %4198 = vmatpush2.msra.mxu0 0.0
    %4199 = vmatprep.subr.mxu0 0.0
    %4200 = vmatpush2.msra.mxu0 0.0
    %4201 = vmatprep.subr.mxu0 0.0
    %4202 = vmatpush2.msra.mxu0 0.0
    %4203 = vmatprep.subr.mxu0 0.0
    %4204 = vmatpush2.msra.mxu0 0.0
    %4205 = vmatprep.subr.mxu0 0.0
    %4206 = vmatpush2.msra.mxu0 0.0
    %4207 = vmatprep.subr.mxu0 0.0
    %4208 = vmatpush2.msra.mxu0 0.0
    %4209 = vmatprep.subr.mxu0 0.0
    %4210 = vmatpush2.msra.mxu0 0.0
    %4211 = vmatprep.mubr.f32.mxu0 0.0
    %4212 = vmatmul.mubr.f32.gmra.mxu0 %v4142
    %v4213 = vpop.f32.mrf.mxu0
    %v4214 = vadd.f32 0.0, %v4213
    %v4215 = vpop.f32.mrf.mxu0
    %4216 = vdwg.mxu0
    %v4217 = vpack.c.bf16 %v4214, %v4214
    %v4218 = vld [vmem:[#allocation10 + $0x80] sm:$0xff]
    %v4219 = vld [vmem:[#allocation10 + $0x88] sm:$0xff]
    %v4220 = vld [vmem:[#allocation10 + $0x90] sm:$0xff]
    %v4221 = vld [vmem:[#allocation10 + $0x98] sm:$0xff]
    %v4222 = vld [vmem:[#allocation10 + $0xa0] sm:$0xff]
    %v4223 = vld [vmem:[#allocation10 + $0xa8] sm:$0xff]
    %v4224 = vld [vmem:[#allocation10 + $0xb0] sm:$0xff]
    %v4225 = vld [vmem:[#allocation10 + $0xb8] sm:$0xff]
    %v4226 = vld [vmem:[#allocation10 + $0xc0] sm:$0xff]
    %v4227 = vld [vmem:[#allocation10 + $0xc8] sm:$0xff]
    %v4228 = vld [vmem:[#allocation10 + $0xd0] sm:$0xff]
    %v4229 = vld [vmem:[#allocation10 + $0xd8] sm:$0xff]
    %v4230 = vld [vmem:[#allocation10 + $0xe0] sm:$0xff]
    %v4231 = vld [vmem:[#allocation10 + $0xe8] sm:$0xff]
    %v4232 = vld [vmem:[#allocation10 + $0xf0] sm:$0xff]
    %v4233 = vld [vmem:[#allocation10 + $0xf8] sm:$0xff]
    %v4250 = vunpack.c.l.b16 %v4218
    %v4251 = vunpack.c.h.b16 %v4218
    %v4252 = vunpack.c.l.b16 %v4219
    %v4253 = vunpack.c.h.b16 %v4219
    %v4254 = vunpack.c.l.b16 %v4220
    %v4255 = vunpack.c.h.b16 %v4220
    %v4256 = vunpack.c.l.b16 %v4221
    %v4257 = vunpack.c.h.b16 %v4221
    %v4258 = vunpack.c.l.b16 %v4222
    %v4259 = vunpack.c.h.b16 %v4222
    %v4260 = vunpack.c.l.b16 %v4223
    %v4261 = vunpack.c.h.b16 %v4223
    %v4262 = vunpack.c.l.b16 %v4224
    %v4263 = vunpack.c.h.b16 %v4224
    %v4264 = vunpack.c.l.b16 %v4225
    %v4265 = vunpack.c.h.b16 %v4225
    %v4266 = vunpack.c.l.b16 %v4226
    %v4267 = vunpack.c.h.b16 %v4226
    %v4268 = vunpack.c.l.b16 %v4227
    %v4269 = vunpack.c.h.b16 %v4227
    %v4270 = vunpack.c.l.b16 %v4228
    %v4271 = vunpack.c.h.b16 %v4228
    %v4272 = vunpack.c.l.b16 %v4229
    %v4273 = vunpack.c.h.b16 %v4229
    %v4274 = vunpack.c.l.b16 %v4230
    %v4275 = vunpack.c.h.b16 %v4230
    %v4276 = vunpack.c.l.b16 %v4231
    %v4277 = vunpack.c.h.b16 %v4231
    %v4278 = vunpack.c.l.b16 %v4232
    %v4279 = vunpack.c.h.b16 %v4232
    %v4280 = vunpack.c.l.b16 %v4233
    %v4281 = vunpack.c.h.b16 %v4233
    %v4282 = vpack.c.b16 %v4252, %v4250
    %v4283 = vpack.c.b16 %v4253, %v4251
    %v4284 = vpack.c.b16 %v4256, %v4254
    %v4285 = vpack.c.b16 %v4257, %v4255
    %v4286 = vpack.c.b16 %v4260, %v4258
    %v4287 = vpack.c.b16 %v4261, %v4259
    %v4288 = vpack.c.b16 %v4264, %v4262
    %v4289 = vpack.c.b16 %v4265, %v4263
    %v4290 = vpack.c.b16 %v4268, %v4266
    %v4291 = vpack.c.b16 %v4269, %v4267
    %v4292 = vpack.c.b16 %v4272, %v4270
    %v4293 = vpack.c.b16 %v4273, %v4271
    %v4294 = vpack.c.b16 %v4276, %v4274
    %v4295 = vpack.c.b16 %v4277, %v4275
    %v4296 = vpack.c.b16 %v4280, %v4278
    %v4297 = vpack.c.b16 %v4281, %v4279
    %4314 = vmatprep.subr.bf16.mxu0 %v4297
    %4315 = vmatpush1.bf16.msra.mxu0 %v4296
    %4316 = vmatprep.subr.bf16.mxu0 %v4295
    %4317 = vmatpush1.bf16.msra.mxu0 %v4294
    %4318 = vmatprep.subr.bf16.mxu0 %v4293
    %4319 = vmatpush1.bf16.msra.mxu0 %v4292
    %4320 = vmatprep.subr.bf16.mxu0 %v4291
    %4321 = vmatpush1.bf16.msra.mxu0 %v4290
    %4322 = vmatprep.subr.bf16.mxu0 %v4289
    %4323 = vmatpush1.bf16.msra.mxu0 %v4288
    %4324 = vmatprep.subr.bf16.mxu0 %v4287
    %4325 = vmatpush1.bf16.msra.mxu0 %v4286
    %4326 = vmatprep.subr.bf16.mxu0 %v4285
    %4327 = vmatpush1.bf16.msra.mxu0 %v4284
    %4328 = vmatprep.subr.bf16.mxu0 %v4283
    %4329 = vmatpush1.bf16.msra.mxu0 %v4282
    %4330 = vmatprep.subr.bf16.mxu0 0
    %4331 = vmatpush2.bf16.msra.mxu0 0
    %4332 = vmatprep.subr.bf16.mxu0 0
    %4333 = vmatpush2.bf16.msra.mxu0 0
    %4334 = vmatprep.subr.bf16.mxu0 0
    %4335 = vmatpush2.bf16.msra.mxu0 0
    %4336 = vmatprep.subr.bf16.mxu0 0
    %4337 = vmatpush2.bf16.msra.mxu0 0
    %4338 = vmatprep.subr.bf16.mxu0 0
    %4339 = vmatpush2.bf16.msra.mxu0 0
    %4340 = vmatprep.subr.bf16.mxu0 0
    %4341 = vmatpush2.bf16.msra.mxu0 0
    %4342 = vmatprep.subr.bf16.mxu0 0
    %4343 = vmatpush2.bf16.msra.mxu0 0
    %4344 = vmatprep.subr.bf16.mxu0 0
    %4345 = vmatpush2.bf16.msra.mxu0 0
    %4346 = vmatprep.mubr.bf16.mxu0 0
    %4347 = vmatmul.mubr.bf16.gmra.mxu0 %v4217
    %v4348 = vpop.f32.mrf.mxu0
    %v4349 = vadd.f32 0.0, %v4348
    %v4350 = vpop.f32.mrf.mxu0
    %v4351 = vadd.f32 0.0, %v4350
    %v4352 = vpop.f32.mrf.mxu0
    %v4353 = vpop.f32.mrf.mxu0
    %4354 = vdwg.mxu0
    %v4371 = vunpack.c.l.b16 %v4043
    %v4372 = vunpack.c.h.b16 %v4043
    %v4373 = vunpack.c.l.b16 %v4044
    %v4374 = vunpack.c.h.b16 %v4044
    %v4375 = vunpack.c.l.b16 %v4045
    %v4376 = vunpack.c.h.b16 %v4045
    %v4377 = vunpack.c.l.b16 %v4046
    %v4378 = vunpack.c.h.b16 %v4046
    %v4379 = vunpack.c.l.b16 %v4047
    %v4380 = vunpack.c.h.b16 %v4047
    %v4381 = vunpack.c.l.b16 %v4048
    %v4382 = vunpack.c.h.b16 %v4048
    %v4383 = vunpack.c.l.b16 %v4049
    %v4384 = vunpack.c.h.b16 %v4049
    %v4385 = vunpack.c.l.b16 %v4050
    %v4386 = vunpack.c.h.b16 %v4050
    %v4387 = vunpack.c.l.b16 %v4051
    %v4388 = vunpack.c.h.b16 %v4051
    %v4389 = vunpack.c.l.b16 %v4052
    %v4390 = vunpack.c.h.b16 %v4052
    %v4391 = vunpack.c.l.b16 %v4053
    %v4392 = vunpack.c.h.b16 %v4053
    %v4393 = vunpack.c.l.b16 %v4054
    %v4394 = vunpack.c.h.b16 %v4054
    %v4395 = vunpack.c.l.b16 %v4055
    %v4396 = vunpack.c.h.b16 %v4055
    %v4397 = vunpack.c.l.b16 %v4056
    %v4398 = vunpack.c.h.b16 %v4056
    %v4399 = vunpack.c.l.b16 %v4057
    %v4400 = vunpack.c.h.b16 %v4057
    %v4401 = vunpack.c.l.b16 %v4058
    %v4402 = vunpack.c.h.b16 %v4058
    %v4403 = vpack.c.b16 %v4373, %v4371
    %v4404 = vpack.c.b16 %v4374, %v4372
    %v4405 = vpack.c.b16 %v4377, %v4375
    %v4406 = vpack.c.b16 %v4378, %v4376
    %v4407 = vpack.c.b16 %v4381, %v4379
    %v4408 = vpack.c.b16 %v4382, %v4380
    %v4409 = vpack.c.b16 %v4385, %v4383
    %v4410 = vpack.c.b16 %v4386, %v4384
    %v4411 = vpack.c.b16 %v4389, %v4387
    %v4412 = vpack.c.b16 %v4390, %v4388
    %v4413 = vpack.c.b16 %v4393, %v4391
    %v4414 = vpack.c.b16 %v4394, %v4392
    %v4415 = vpack.c.b16 %v4397, %v4395
    %v4416 = vpack.c.b16 %v4398, %v4396
    %v4417 = vpack.c.b16 %v4401, %v4399
    %v4418 = vpack.c.b16 %v4402, %v4400
    %4435 = vmatprep.subr.bf16.mxu0 %v4418
    %4436 = vmatpush1.bf16.msra.mxu0 %v4417
    %4437 = vmatprep.subr.bf16.mxu0 %v4416
    %4438 = vmatpush1.bf16.msra.mxu0 %v4415
    %4439 = vmatprep.subr.bf16.mxu0 %v4414
    %4440 = vmatpush1.bf16.msra.mxu0 %v4413
    %4441 = vmatprep.subr.bf16.mxu0 %v4412
    %4442 = vmatpush1.bf16.msra.mxu0 %v4411
    %4443 = vmatprep.subr.bf16.mxu0 %v4410
    %4444 = vmatpush1.bf16.msra.mxu0 %v4409
    %4445 = vmatprep.subr.bf16.mxu0 %v4408
    %4446 = vmatpush1.bf16.msra.mxu0 %v4407
    %4447 = vmatprep.subr.bf16.mxu0 %v4406
    %4448 = vmatpush1.bf16.msra.mxu0 %v4405
    %4449 = vmatprep.subr.bf16.mxu0 %v4404
    %4450 = vmatpush1.bf16.msra.mxu0 %v4403
    %4451 = vmatprep.subr.bf16.mxu0 0
    %4452 = vmatpush2.bf16.msra.mxu0 0
    %4453 = vmatprep.subr.bf16.mxu0 0
    %4454 = vmatpush2.bf16.msra.mxu0 0
    %4455 = vmatprep.subr.bf16.mxu0 0
    %4456 = vmatpush2.bf16.msra.mxu0 0
    %4457 = vmatprep.subr.bf16.mxu0 0
    %4458 = vmatpush2.bf16.msra.mxu0 0
    %4459 = vmatprep.subr.bf16.mxu0 0
    %4460 = vmatpush2.bf16.msra.mxu0 0
    %4461 = vmatprep.subr.bf16.mxu0 0
    %4462 = vmatpush2.bf16.msra.mxu0 0
    %4463 = vmatprep.subr.bf16.mxu0 0
    %4464 = vmatpush2.bf16.msra.mxu0 0
    %4465 = vmatprep.subr.bf16.mxu0 0
    %4466 = vmatpush2.bf16.msra.mxu0 0
    %4467 = vmatprep.mubr.bf16.mxu0 0
    %4468 = vmatmul.mubr.bf16.gmra.mxu0 %v4042
    %v4469 = vpop.f32.mrf.mxu0
    %v4470 = vadd.f32 %v4349, %v4469
    %v4471 = vpop.f32.mrf.mxu0
    %v4472 = vadd.f32 %v4351, %v4471
    %v4473 = vpop.f32.mrf.mxu0
    %v4474 = vpop.f32.mrf.mxu0
    %4475 = vdwg.mxu0
    %v4476 = vadd.f32 %v3146, %v4470
    %v4477 = vadd.f32 %v3147, %v4472
    %v4478 = vld [vmem:[#allocation11] sm:$0x3]
    %v4480 = vlaneseq
    %v4481 = vshrl.u32 %v4480, 7
    %v4482 = vsub.s32 0, %v4481
    %v4483 = vrot.slane %v4478, %v4482
    %v4484 = vlaneseq
    %v4485 = vshrl.u32 %v4484, 7
    %v4486 = vsub.s32 1, %v4485
    %v4487 = vrot.slane %v4478, %v4486
    %v4490 = vadd.f32 %v4476, %v4483
    %v4491 = vadd.f32 %v4477, %v4487
    %v4492 = vld [vmem:[#allocation13] sm:$0x3]
    %v4493 = vld [vmem:[#allocation14] sm:$0x3]
    %v4494 = vsel %vm3968, %v4490, 0.0
    %v4495 = vsel %vm3968, %v4491, 0.0
    %v4496 = vadd.f32 %v4494, %v4495
    %4497 = vadd.xlane.f32.xlu0 %v4496
    %v4498 = vpop.xlane.xlu0 %4497
    %v4499 = vrcp.pop 256.0
    %v4500 = vmul.f32 %v4498, %v4499
    %v4501 = vsub.f32 %v4490, %v4500
    %v4502 = vsub.f32 %v4491, %v4500
    %v4503 = vmul.f32 %v4501, %v4501
    %v4504 = vmul.f32 %v4502, %v4502
    %v4505 = vsel %vm3968, %v4503, 0.0
    %v4506 = vsel %vm3968, %v4504, 0.0
    %v4507 = vadd.f32 %v4505, %v4506
    %4508 = vadd.xlane.f32.xlu0 %v4507
    %v4509 = vpop.xlane.xlu0 %4508
    %v4510 = vmul.f32 %v4509, %v4499
    %v4511 = vadd.f32 %v4510, 1e-05
    %v4512 = vrsqrt.pop %v4511
    %v4513 = vmul.f32 %v4501, %v4512
    %v4514 = vmul.f32 %v4502, %v4512
    %v4516 = vlaneseq
    %v4517 = vshrl.u32 %v4516, 7
    %v4518 = vsub.s32 0, %v4517
    %v4519 = vrot.slane %v4492, %v4518
    %v4520 = vlaneseq
    %v4521 = vshrl.u32 %v4520, 7
    %v4522 = vsub.s32 1, %v4521
    %v4523 = vrot.slane %v4492, %v4522
    %v4526 = vmul.f32 %v4513, %v4519
    %v4527 = vmul.f32 %v4514, %v4523
    %v4529 = vlaneseq
    %v4530 = vshrl.u32 %v4529, 7
    %v4531 = vsub.s32 0, %v4530
    %v4532 = vrot.slane %v4493, %v4531
    %v4533 = vlaneseq
    %v4534 = vshrl.u32 %v4533, 7
    %v4535 = vsub.s32 1, %v4534
    %v4536 = vrot.slane %v4493, %v4535
    %v4539 = vadd.f32 %v4526, %v4532
    %v4540 = vadd.f32 %v4527, %v4536
    %v4541 = vpack.c.bf16 %v4539, %v4539
    %v4542 = vpack.c.bf16 %v4540, %v4540
    %v4543 = vld [vmem:[#allocation16] sm:$0xff]
    %v4544 = vld [vmem:[#allocation16 + $0x8] sm:$0xff]
    %v4545 = vld [vmem:[#allocation16 + $0x10] sm:$0xff]
    %v4546 = vld [vmem:[#allocation16 + $0x18] sm:$0xff]
    %v4547 = vld [vmem:[#allocation16 + $0x20] sm:$0xff]
    %v4548 = vld [vmem:[#allocation16 + $0x28] sm:$0xff]
    %v4549 = vld [vmem:[#allocation16 + $0x30] sm:$0xff]
    %v4550 = vld [vmem:[#allocation16 + $0x38] sm:$0xff]
    %v4551 = vld [vmem:[#allocation16 + $0x40] sm:$0xff]
    %v4552 = vld [vmem:[#allocation16 + $0x48] sm:$0xff]
    %v4553 = vld [vmem:[#allocation16 + $0x50] sm:$0xff]
    %v4554 = vld [vmem:[#allocation16 + $0x58] sm:$0xff]
    %v4555 = vld [vmem:[#allocation16 + $0x60] sm:$0xff]
    %v4556 = vld [vmem:[#allocation16 + $0x68] sm:$0xff]
    %v4557 = vld [vmem:[#allocation16 + $0x70] sm:$0xff]
    %v4558 = vld [vmem:[#allocation16 + $0x78] sm:$0xff]
    %v4559 = vld [vmem:[#allocation16 + $0x80] sm:$0xff]
    %v4560 = vld [vmem:[#allocation16 + $0x88] sm:$0xff]
    %v4561 = vld [vmem:[#allocation16 + $0x90] sm:$0xff]
    %v4562 = vld [vmem:[#allocation16 + $0x98] sm:$0xff]
    %v4563 = vld [vmem:[#allocation16 + $0xa0] sm:$0xff]
    %v4564 = vld [vmem:[#allocation16 + $0xa8] sm:$0xff]
    %v4565 = vld [vmem:[#allocation16 + $0xb0] sm:$0xff]
    %v4566 = vld [vmem:[#allocation16 + $0xb8] sm:$0xff]
    %v4567 = vld [vmem:[#allocation16 + $0xc0] sm:$0xff]
    %v4568 = vld [vmem:[#allocation16 + $0xc8] sm:$0xff]
    %v4569 = vld [vmem:[#allocation16 + $0xd0] sm:$0xff]
    %v4570 = vld [vmem:[#allocation16 + $0xd8] sm:$0xff]
    %v4571 = vld [vmem:[#allocation16 + $0xe0] sm:$0xff]
    %v4572 = vld [vmem:[#allocation16 + $0xe8] sm:$0xff]
    %v4573 = vld [vmem:[#allocation16 + $0xf0] sm:$0xff]
    %v4574 = vld [vmem:[#allocation16 + $0xf8] sm:$0xff]
    %v4575 = vld [vmem:[#allocation17] sm:$0x3]
    %v4577 = vlaneseq
    %v4578 = vshrl.u32 %v4577, 7
    %v4579 = vsub.s32 0, %v4578
    %v4580 = vrot.slane %v4575, %v4579
    %v4581 = vlaneseq
    %v4582 = vshrl.u32 %v4581, 7
    %v4583 = vsub.s32 1, %v4582
    %v4584 = vrot.slane %v4575, %v4583
    %v4619 = vunpack.c.l.b16 %v4543
    %v4620 = vunpack.c.h.b16 %v4543
    %v4621 = vunpack.c.l.b16 %v4544
    %v4622 = vunpack.c.h.b16 %v4544
    %v4623 = vunpack.c.l.b16 %v4545
    %v4624 = vunpack.c.h.b16 %v4545
    %v4625 = vunpack.c.l.b16 %v4546
    %v4626 = vunpack.c.h.b16 %v4546
    %v4627 = vunpack.c.l.b16 %v4547
    %v4628 = vunpack.c.h.b16 %v4547
    %v4629 = vunpack.c.l.b16 %v4548
    %v4630 = vunpack.c.h.b16 %v4548
    %v4631 = vunpack.c.l.b16 %v4549
    %v4632 = vunpack.c.h.b16 %v4549
    %v4633 = vunpack.c.l.b16 %v4550
    %v4634 = vunpack.c.h.b16 %v4550
    %v4635 = vunpack.c.l.b16 %v4551
    %v4636 = vunpack.c.h.b16 %v4551
    %v4637 = vunpack.c.l.b16 %v4552
    %v4638 = vunpack.c.h.b16 %v4552
    %v4639 = vunpack.c.l.b16 %v4553
    %v4640 = vunpack.c.h.b16 %v4553
    %v4641 = vunpack.c.l.b16 %v4554
    %v4642 = vunpack.c.h.b16 %v4554
    %v4643 = vunpack.c.l.b16 %v4555
    %v4644 = vunpack.c.h.b16 %v4555
    %v4645 = vunpack.c.l.b16 %v4556
    %v4646 = vunpack.c.h.b16 %v4556
    %v4647 = vunpack.c.l.b16 %v4557
    %v4648 = vunpack.c.h.b16 %v4557
    %v4649 = vunpack.c.l.b16 %v4558
    %v4650 = vunpack.c.h.b16 %v4558
    %v4651 = vunpack.c.l.b16 %v4559
    %v4652 = vunpack.c.h.b16 %v4559
    %v4653 = vunpack.c.l.b16 %v4560
    %v4654 = vunpack.c.h.b16 %v4560
    %v4655 = vunpack.c.l.b16 %v4561
    %v4656 = vunpack.c.h.b16 %v4561
    %v4657 = vunpack.c.l.b16 %v4562
    %v4658 = vunpack.c.h.b16 %v4562
    %v4659 = vunpack.c.l.b16 %v4563
    %v4660 = vunpack.c.h.b16 %v4563
    %v4661 = vunpack.c.l.b16 %v4564
    %v4662 = vunpack.c.h.b16 %v4564
    %v4663 = vunpack.c.l.b16 %v4565
    %v4664 = vunpack.c.h.b16 %v4565
    %v4665 = vunpack.c.l.b16 %v4566
    %v4666 = vunpack.c.h.b16 %v4566
    %v4667 = vunpack.c.l.b16 %v4567
    %v4668 = vunpack.c.h.b16 %v4567
    %v4669 = vunpack.c.l.b16 %v4568
    %v4670 = vunpack.c.h.b16 %v4568
    %v4671 = vunpack.c.l.b16 %v4569
    %v4672 = vunpack.c.h.b16 %v4569
    %v4673 = vunpack.c.l.b16 %v4570
    %v4674 = vunpack.c.h.b16 %v4570
    %v4675 = vunpack.c.l.b16 %v4571
    %v4676 = vunpack.c.h.b16 %v4571
    %v4677 = vunpack.c.l.b16 %v4572
    %v4678 = vunpack.c.h.b16 %v4572
    %v4679 = vunpack.c.l.b16 %v4573
    %v4680 = vunpack.c.h.b16 %v4573
    %v4681 = vunpack.c.l.b16 %v4574
    %v4682 = vunpack.c.h.b16 %v4574
    %v4683 = vpack.c.b16 %v4621, %v4619
    %v4684 = vpack.c.b16 %v4622, %v4620
    %v4685 = vpack.c.b16 %v4625, %v4623
    %v4686 = vpack.c.b16 %v4626, %v4624
    %v4687 = vpack.c.b16 %v4629, %v4627
    %v4688 = vpack.c.b16 %v4630, %v4628
    %v4689 = vpack.c.b16 %v4633, %v4631
    %v4690 = vpack.c.b16 %v4634, %v4632
    %v4691 = vpack.c.b16 %v4637, %v4635
    %v4692 = vpack.c.b16 %v4638, %v4636
    %v4693 = vpack.c.b16 %v4641, %v4639
    %v4694 = vpack.c.b16 %v4642, %v4640
    %v4695 = vpack.c.b16 %v4645, %v4643
    %v4696 = vpack.c.b16 %v4646, %v4644
    %v4697 = vpack.c.b16 %v4649, %v4647
    %v4698 = vpack.c.b16 %v4650, %v4648
    %v4699 = vpack.c.b16 %v4653, %v4651
    %v4700 = vpack.c.b16 %v4654, %v4652
    %v4701 = vpack.c.b16 %v4657, %v4655
    %v4702 = vpack.c.b16 %v4658, %v4656
    %v4703 = vpack.c.b16 %v4661, %v4659
    %v4704 = vpack.c.b16 %v4662, %v4660
    %v4705 = vpack.c.b16 %v4665, %v4663
    %v4706 = vpack.c.b16 %v4666, %v4664
    %v4707 = vpack.c.b16 %v4669, %v4667
    %v4708 = vpack.c.b16 %v4670, %v4668
    %v4709 = vpack.c.b16 %v4673, %v4671
    %v4710 = vpack.c.b16 %v4674, %v4672
    %v4711 = vpack.c.b16 %v4677, %v4675
    %v4712 = vpack.c.b16 %v4678, %v4676
    %v4713 = vpack.c.b16 %v4681, %v4679
    %v4714 = vpack.c.b16 %v4682, %v4680
    %4747 = vmatprep.subr.bf16.mxu0 %v4698
    %4748 = vmatpush1.bf16.msra.mxu0 %v4697
    %4749 = vmatprep.subr.bf16.mxu0 %v4696
    %4750 = vmatpush1.bf16.msra.mxu0 %v4695
    %4751 = vmatprep.subr.bf16.mxu0 %v4694
    %4752 = vmatpush1.bf16.msra.mxu0 %v4693
    %4753 = vmatprep.subr.bf16.mxu0 %v4692
    %4754 = vmatpush1.bf16.msra.mxu0 %v4691
    %4755 = vmatprep.subr.bf16.mxu0 %v4690
    %4756 = vmatpush1.bf16.msra.mxu0 %v4689
    %4757 = vmatprep.subr.bf16.mxu0 %v4688
    %4758 = vmatpush1.bf16.msra.mxu0 %v4687
    %4759 = vmatprep.subr.bf16.mxu0 %v4686
    %4760 = vmatpush1.bf16.msra.mxu0 %v4685
    %4761 = vmatprep.subr.bf16.mxu0 %v4684
    %4762 = vmatpush1.bf16.msra.mxu0 %v4683
    %4763 = vmatprep.subr.bf16.mxu0 %v4714
    %4764 = vmatpush2.bf16.msra.mxu0 %v4713
    %4765 = vmatprep.subr.bf16.mxu0 %v4712
    %4766 = vmatpush2.bf16.msra.mxu0 %v4711
    %4767 = vmatprep.subr.bf16.mxu0 %v4710
    %4768 = vmatpush2.bf16.msra.mxu0 %v4709
    %4769 = vmatprep.subr.bf16.mxu0 %v4708
    %4770 = vmatpush2.bf16.msra.mxu0 %v4707
    %4771 = vmatprep.subr.bf16.mxu0 %v4706
    %4772 = vmatpush2.bf16.msra.mxu0 %v4705
    %4773 = vmatprep.subr.bf16.mxu0 %v4704
    %4774 = vmatpush2.bf16.msra.mxu0 %v4703
    %4775 = vmatprep.subr.bf16.mxu0 %v4702
    %4776 = vmatpush2.bf16.msra.mxu0 %v4701
    %4777 = vmatprep.subr.bf16.mxu0 %v4700
    %4778 = vmatpush2.bf16.msra.mxu0 %v4699
    %4779 = vmatprep.mubr.bf16.mxu0 %v4542
    %4780 = vmatmul.mubr.bf16.gmra.mxu0 %v4541
    %v4781 = vpop.f32.mrf.mxu0
    %v4782 = vadd.f32 %v4580, %v4781
    %v4783 = vpop.f32.mrf.mxu0
    %v4784 = vadd.f32 %v4584, %v4783
    %v4785 = vpop.f32.mrf.mxu0
    %v4786 = vpop.f32.mrf.mxu0
    %4787 = vdwg.mxu0
    %v4788 = vmax.f32 %v4782, 0.0
    %v4789 = vmax.f32 %v4784, 0.0
    %v4790 = vpack.c.bf16 %v4788, %v4788
    %v4791 = vpack.c.bf16 %v4789, %v4789
    %v4792 = vld [vmem:[#allocation19] sm:$0xff]
    %v4793 = vld [vmem:[#allocation19 + $0x8] sm:$0xff]
    %v4794 = vld [vmem:[#allocation19 + $0x10] sm:$0xff]
    %v4795 = vld [vmem:[#allocation19 + $0x18] sm:$0xff]
    %v4796 = vld [vmem:[#allocation19 + $0x20] sm:$0xff]
    %v4797 = vld [vmem:[#allocation19 + $0x28] sm:$0xff]
    %v4798 = vld [vmem:[#allocation19 + $0x30] sm:$0xff]
    %v4799 = vld [vmem:[#allocation19 + $0x38] sm:$0xff]
    %v4800 = vld [vmem:[#allocation19 + $0x40] sm:$0xff]
    %v4801 = vld [vmem:[#allocation19 + $0x48] sm:$0xff]
    %v4802 = vld [vmem:[#allocation19 + $0x50] sm:$0xff]
    %v4803 = vld [vmem:[#allocation19 + $0x58] sm:$0xff]
    %v4804 = vld [vmem:[#allocation19 + $0x60] sm:$0xff]
    %v4805 = vld [vmem:[#allocation19 + $0x68] sm:$0xff]
    %v4806 = vld [vmem:[#allocation19 + $0x70] sm:$0xff]
    %v4807 = vld [vmem:[#allocation19 + $0x78] sm:$0xff]
    %v4808 = vld [vmem:[#allocation19 + $0x80] sm:$0xff]
    %v4809 = vld [vmem:[#allocation19 + $0x88] sm:$0xff]
    %v4810 = vld [vmem:[#allocation19 + $0x90] sm:$0xff]
    %v4811 = vld [vmem:[#allocation19 + $0x98] sm:$0xff]
    %v4812 = vld [vmem:[#allocation19 + $0xa0] sm:$0xff]
    %v4813 = vld [vmem:[#allocation19 + $0xa8] sm:$0xff]
    %v4814 = vld [vmem:[#allocation19 + $0xb0] sm:$0xff]
    %v4815 = vld [vmem:[#allocation19 + $0xb8] sm:$0xff]
    %v4816 = vld [vmem:[#allocation19 + $0xc0] sm:$0xff]
    %v4817 = vld [vmem:[#allocation19 + $0xc8] sm:$0xff]
    %v4818 = vld [vmem:[#allocation19 + $0xd0] sm:$0xff]
    %v4819 = vld [vmem:[#allocation19 + $0xd8] sm:$0xff]
    %v4820 = vld [vmem:[#allocation19 + $0xe0] sm:$0xff]
    %v4821 = vld [vmem:[#allocation19 + $0xe8] sm:$0xff]
    %v4822 = vld [vmem:[#allocation19 + $0xf0] sm:$0xff]
    %v4823 = vld [vmem:[#allocation19 + $0xf8] sm:$0xff]
    %v4824 = vld [vmem:[#allocation20] sm:$0x3]
    %v4826 = vlaneseq
    %v4827 = vshrl.u32 %v4826, 7
    %v4828 = vsub.s32 0, %v4827
    %v4829 = vrot.slane %v4824, %v4828
    %v4830 = vlaneseq
    %v4831 = vshrl.u32 %v4830, 7
    %v4832 = vsub.s32 1, %v4831
    %v4833 = vrot.slane %v4824, %v4832
    %v4868 = vunpack.c.l.b16 %v4792
    %v4869 = vunpack.c.h.b16 %v4792
    %v4870 = vunpack.c.l.b16 %v4793
    %v4871 = vunpack.c.h.b16 %v4793
    %v4872 = vunpack.c.l.b16 %v4794
    %v4873 = vunpack.c.h.b16 %v4794
    %v4874 = vunpack.c.l.b16 %v4795
    %v4875 = vunpack.c.h.b16 %v4795
    %v4876 = vunpack.c.l.b16 %v4796
    %v4877 = vunpack.c.h.b16 %v4796
    %v4878 = vunpack.c.l.b16 %v4797
    %v4879 = vunpack.c.h.b16 %v4797
    %v4880 = vunpack.c.l.b16 %v4798
    %v4881 = vunpack.c.h.b16 %v4798
    %v4882 = vunpack.c.l.b16 %v4799
    %v4883 = vunpack.c.h.b16 %v4799
    %v4884 = vunpack.c.l.b16 %v4800
    %v4885 = vunpack.c.h.b16 %v4800
    %v4886 = vunpack.c.l.b16 %v4801
    %v4887 = vunpack.c.h.b16 %v4801
    %v4888 = vunpack.c.l.b16 %v4802
    %v4889 = vunpack.c.h.b16 %v4802
    %v4890 = vunpack.c.l.b16 %v4803
    %v4891 = vunpack.c.h.b16 %v4803
    %v4892 = vunpack.c.l.b16 %v4804
    %v4893 = vunpack.c.h.b16 %v4804
    %v4894 = vunpack.c.l.b16 %v4805
    %v4895 = vunpack.c.h.b16 %v4805
    %v4896 = vunpack.c.l.b16 %v4806
    %v4897 = vunpack.c.h.b16 %v4806
    %v4898 = vunpack.c.l.b16 %v4807
    %v4899 = vunpack.c.h.b16 %v4807
    %v4900 = vunpack.c.l.b16 %v4808
    %v4901 = vunpack.c.h.b16 %v4808
    %v4902 = vunpack.c.l.b16 %v4809
    %v4903 = vunpack.c.h.b16 %v4809
    %v4904 = vunpack.c.l.b16 %v4810
    %v4905 = vunpack.c.h.b16 %v4810
    %v4906 = vunpack.c.l.b16 %v4811
    %v4907 = vunpack.c.h.b16 %v4811
    %v4908 = vunpack.c.l.b16 %v4812
    %v4909 = vunpack.c.h.b16 %v4812
    %v4910 = vunpack.c.l.b16 %v4813
    %v4911 = vunpack.c.h.b16 %v4813
    %v4912 = vunpack.c.l.b16 %v4814
    %v4913 = vunpack.c.h.b16 %v4814
    %v4914 = vunpack.c.l.b16 %v4815
    %v4915 = vunpack.c.h.b16 %v4815
    %v4916 = vunpack.c.l.b16 %v4816
    %v4917 = vunpack.c.h.b16 %v4816
    %v4918 = vunpack.c.l.b16 %v4817
    %v4919 = vunpack.c.h.b16 %v4817
    %v4920 = vunpack.c.l.b16 %v4818
    %v4921 = vunpack.c.h.b16 %v4818
    %v4922 = vunpack.c.l.b16 %v4819
    %v4923 = vunpack.c.h.b16 %v4819
    %v4924 = vunpack.c.l.b16 %v4820
    %v4925 = vunpack.c.h.b16 %v4820
    %v4926 = vunpack.c.l.b16 %v4821
    %v4927 = vunpack.c.h.b16 %v4821
    %v4928 = vunpack.c.l.b16 %v4822
    %v4929 = vunpack.c.h.b16 %v4822
    %v4930 = vunpack.c.l.b16 %v4823
    %v4931 = vunpack.c.h.b16 %v4823
    %v4932 = vpack.c.b16 %v4870, %v4868
    %v4933 = vpack.c.b16 %v4871, %v4869
    %v4934 = vpack.c.b16 %v4874, %v4872
    %v4935 = vpack.c.b16 %v4875, %v4873
    %v4936 = vpack.c.b16 %v4878, %v4876
    %v4937 = vpack.c.b16 %v4879, %v4877
    %v4938 = vpack.c.b16 %v4882, %v4880
    %v4939 = vpack.c.b16 %v4883, %v4881
    %v4940 = vpack.c.b16 %v4886, %v4884
    %v4941 = vpack.c.b16 %v4887, %v4885
    %v4942 = vpack.c.b16 %v4890, %v4888
    %v4943 = vpack.c.b16 %v4891, %v4889
    %v4944 = vpack.c.b16 %v4894, %v4892
    %v4945 = vpack.c.b16 %v4895, %v4893
    %v4946 = vpack.c.b16 %v4898, %v4896
    %v4947 = vpack.c.b16 %v4899, %v4897
    %v4948 = vpack.c.b16 %v4902, %v4900
    %v4949 = vpack.c.b16 %v4903, %v4901
    %v4950 = vpack.c.b16 %v4906, %v4904
    %v4951 = vpack.c.b16 %v4907, %v4905
    %v4952 = vpack.c.b16 %v4910, %v4908
    %v4953 = vpack.c.b16 %v4911, %v4909
    %v4954 = vpack.c.b16 %v4914, %v4912
    %v4955 = vpack.c.b16 %v4915, %v4913
    %v4956 = vpack.c.b16 %v4918, %v4916
    %v4957 = vpack.c.b16 %v4919, %v4917
    %v4958 = vpack.c.b16 %v4922, %v4920
    %v4959 = vpack.c.b16 %v4923, %v4921
    %v4960 = vpack.c.b16 %v4926, %v4924
    %v4961 = vpack.c.b16 %v4927, %v4925
    %v4962 = vpack.c.b16 %v4930, %v4928
    %v4963 = vpack.c.b16 %v4931, %v4929
    %4996 = vmatprep.subr.bf16.mxu0 %v4947
    %4997 = vmatpush1.bf16.msra.mxu0 %v4946
    %4998 = vmatprep.subr.bf16.mxu0 %v4945
    %4999 = vmatpush1.bf16.msra.mxu0 %v4944
    %5000 = vmatprep.subr.bf16.mxu0 %v4943
    %5001 = vmatpush1.bf16.msra.mxu0 %v4942
    %5002 = vmatprep.subr.bf16.mxu0 %v4941
    %5003 = vmatpush1.bf16.msra.mxu0 %v4940
    %5004 = vmatprep.subr.bf16.mxu0 %v4939
    %5005 = vmatpush1.bf16.msra.mxu0 %v4938
    %5006 = vmatprep.subr.bf16.mxu0 %v4937
    %5007 = vmatpush1.bf16.msra.mxu0 %v4936
    %5008 = vmatprep.subr.bf16.mxu0 %v4935
    %5009 = vmatpush1.bf16.msra.mxu0 %v4934
    %5010 = vmatprep.subr.bf16.mxu0 %v4933
    %5011 = vmatpush1.bf16.msra.mxu0 %v4932
    %5012 = vmatprep.subr.bf16.mxu0 %v4963
    %5013 = vmatpush2.bf16.msra.mxu0 %v4962
    %5014 = vmatprep.subr.bf16.mxu0 %v4961
    %5015 = vmatpush2.bf16.msra.mxu0 %v4960
    %5016 = vmatprep.subr.bf16.mxu0 %v4959
    %5017 = vmatpush2.bf16.msra.mxu0 %v4958
    %5018 = vmatprep.subr.bf16.mxu0 %v4957
    %5019 = vmatpush2.bf16.msra.mxu0 %v4956
    %5020 = vmatprep.subr.bf16.mxu0 %v4955
    %5021 = vmatpush2.bf16.msra.mxu0 %v4954
    %5022 = vmatprep.subr.bf16.mxu0 %v4953
    %5023 = vmatpush2.bf16.msra.mxu0 %v4952
    %5024 = vmatprep.subr.bf16.mxu0 %v4951
    %5025 = vmatpush2.bf16.msra.mxu0 %v4950
    %5026 = vmatprep.subr.bf16.mxu0 %v4949
    %5027 = vmatpush2.bf16.msra.mxu0 %v4948
    %5028 = vmatprep.mubr.bf16.mxu0 %v4791
    %5029 = vmatmul.mubr.bf16.gmra.mxu0 %v4790
    %v5030 = vpop.f32.mrf.mxu0
    %v5031 = vadd.f32 %v4829, %v5030
    %v5032 = vpop.f32.mrf.mxu0
    %v5033 = vadd.f32 %v4833, %v5032
    %v5034 = vpop.f32.mrf.mxu0
    %v5035 = vpop.f32.mrf.mxu0
    %5036 = vdwg.mxu0
    %v5037 = vadd.f32 %v4539, %v5031
    %v5038 = vadd.f32 %v4540, %v5033
    %v5039 = vld [vmem:[#allocation22] sm:$0x3]
    %v5040 = vld [vmem:[#allocation23] sm:$0x3]
    %v5041 = vsel %vm3968, %v5037, 0.0
    %v5042 = vsel %vm3968, %v5038, 0.0
    %v5043 = vadd.f32 %v5041, %v5042
    %5044 = vadd.xlane.f32.xlu0 %v5043
    %v5045 = vpop.xlane.xlu0 %5044
    %v5046 = vmul.f32 %v5045, %v4499
    %v5047 = vsub.f32 %v5037, %v5046
    %v5048 = vsub.f32 %v5038, %v5046
    %v5049 = vmul.f32 %v5047, %v5047
    %v5050 = vmul.f32 %v5048, %v5048
    %v5051 = vsel %vm3968, %v5049, 0.0
    %v5052 = vsel %vm3968, %v5050, 0.0
    %v5053 = vadd.f32 %v5051, %v5052
    %5054 = vadd.xlane.f32.xlu0 %v5053
    %v5055 = vpop.xlane.xlu0 %5054
    %v5056 = vmul.f32 %v5055, %v4499
    %v5057 = vadd.f32 %v5056, 1e-05
    %v5058 = vrsqrt.pop %v5057
    %v5059 = vmul.f32 %v5047, %v5058
    %v5060 = vmul.f32 %v5048, %v5058
    %v5062 = vlaneseq
    %v5063 = vshrl.u32 %v5062, 7
    %v5064 = vsub.s32 0, %v5063
    %v5065 = vrot.slane %v5039, %v5064
    %v5066 = vlaneseq
    %v5067 = vshrl.u32 %v5066, 7
    %v5068 = vsub.s32 1, %v5067
    %v5069 = vrot.slane %v5039, %v5068
    %v5072 = vmul.f32 %v5059, %v5065
    %v5073 = vmul.f32 %v5060, %v5069
    %v5075 = vlaneseq
    %v5076 = vshrl.u32 %v5075, 7
    %v5077 = vsub.s32 0, %v5076
    %v5078 = vrot.slane %v5040, %v5077
    %v5079 = vlaneseq
    %v5080 = vshrl.u32 %v5079, 7
    %v5081 = vsub.s32 1, %v5080
    %v5082 = vrot.slane %v5040, %v5081
    %v5085 = vadd.f32 %v5072, %v5078
    %v5086 = vadd.f32 %v5073, %v5082
    %v5087 = vpack.c.bf16 %v5085, %v5085
    %v5088 = vpack.c.bf16 %v5086, %v5086
    %v5089 = vld [vmem:[#allocation25] sm:$0xf]
    %v5090 = vld [vmem:[#allocation25 + $0x4] sm:$0xf]
    %v5091 = vld [vmem:[#allocation25 + $0x8] sm:$0xf]
    %v5092 = vld [vmem:[#allocation25 + $0xc] sm:$0xf]
    %v5093 = vld [vmem:[#allocation25 + $0x10] sm:$0xf]
    %v5094 = vld [vmem:[#allocation25 + $0x14] sm:$0xf]
    %v5095 = vld [vmem:[#allocation25 + $0x18] sm:$0xf]
    %v5096 = vld [vmem:[#allocation25 + $0x1c] sm:$0xf]
    %v5097 = vld [vmem:[#allocation25 + $0x20] sm:$0xf]
    %v5098 = vld [vmem:[#allocation25 + $0x24] sm:$0xf]
    %v5099 = vld [vmem:[#allocation25 + $0x28] sm:$0xf]
    %v5100 = vld [vmem:[#allocation25 + $0x2c] sm:$0xf]
    %v5101 = vld [vmem:[#allocation25 + $0x30] sm:$0xf]
    %v5102 = vld [vmem:[#allocation25 + $0x34] sm:$0xf]
    %v5103 = vld [vmem:[#allocation25 + $0x38] sm:$0xf]
    %v5104 = vld [vmem:[#allocation25 + $0x3c] sm:$0xf]
    %v5105 = vld [vmem:[#allocation25 + $0x40] sm:$0xf]
    %v5106 = vld [vmem:[#allocation25 + $0x44] sm:$0xf]
    %v5107 = vld [vmem:[#allocation25 + $0x48] sm:$0xf]
    %v5108 = vld [vmem:[#allocation25 + $0x4c] sm:$0xf]
    %v5109 = vld [vmem:[#allocation25 + $0x50] sm:$0xf]
    %v5110 = vld [vmem:[#allocation25 + $0x54] sm:$0xf]
    %v5111 = vld [vmem:[#allocation25 + $0x58] sm:$0xf]
    %v5112 = vld [vmem:[#allocation25 + $0x5c] sm:$0xf]
    %v5113 = vld [vmem:[#allocation25 + $0x60] sm:$0xf]
    %v5114 = vld [vmem:[#allocation25 + $0x64] sm:$0xf]
    %v5115 = vld [vmem:[#allocation25 + $0x68] sm:$0xf]
    %v5116 = vld [vmem:[#allocation25 + $0x6c] sm:$0xf]
    %v5117 = vld [vmem:[#allocation25 + $0x70] sm:$0xf]
    %v5118 = vld [vmem:[#allocation25 + $0x74] sm:$0xf]
    %v5119 = vld [vmem:[#allocation25 + $0x78] sm:$0xf]
    %v5120 = vld [vmem:[#allocation25 + $0x7c] sm:$0xf]
    %v5121 = vld [vmem:[#allocation26] sm:$0x1]
    %v5123 = vlaneseq
    %v5124 = vshrl.u32 %v5123, 7
    %v5125 = vsub.s32 0, %v5124
    %v5126 = vrot.slane %v5121, %v5125
    %v5160 = vunpack.c.l.b16 %v5089
    %v5161 = vunpack.c.l.b16 %v5090
    %v5162 = vunpack.c.l.b16 %v5091
    %v5163 = vunpack.c.l.b16 %v5092
    %v5164 = vunpack.c.l.b16 %v5093
    %v5165 = vunpack.c.l.b16 %v5094
    %v5166 = vunpack.c.l.b16 %v5095
    %v5167 = vunpack.c.l.b16 %v5096
    %v5168 = vunpack.c.l.b16 %v5097
    %v5169 = vunpack.c.l.b16 %v5098
    %v5170 = vunpack.c.l.b16 %v5099
    %v5171 = vunpack.c.l.b16 %v5100
    %v5172 = vunpack.c.l.b16 %v5101
    %v5173 = vunpack.c.l.b16 %v5102
    %v5174 = vunpack.c.l.b16 %v5103
    %v5175 = vunpack.c.l.b16 %v5104
    %v5176 = vunpack.c.l.b16 %v5105
    %v5177 = vunpack.c.l.b16 %v5106
    %v5178 = vunpack.c.l.b16 %v5107
    %v5179 = vunpack.c.l.b16 %v5108
    %v5180 = vunpack.c.l.b16 %v5109
    %v5181 = vunpack.c.l.b16 %v5110
    %v5182 = vunpack.c.l.b16 %v5111
    %v5183 = vunpack.c.l.b16 %v5112
    %v5184 = vunpack.c.l.b16 %v5113
    %v5185 = vunpack.c.l.b16 %v5114
    %v5186 = vunpack.c.l.b16 %v5115
    %v5187 = vunpack.c.l.b16 %v5116
    %v5188 = vunpack.c.l.b16 %v5117
    %v5189 = vunpack.c.l.b16 %v5118
    %v5190 = vunpack.c.l.b16 %v5119
    %v5191 = vunpack.c.l.b16 %v5120
    %v5192 = vpack.c.b16 %v5161, %v5160
    %v5193 = vpack.c.b16 %v5163, %v5162
    %v5194 = vpack.c.b16 %v5165, %v5164
    %v5195 = vpack.c.b16 %v5167, %v5166
    %v5196 = vpack.c.b16 %v5169, %v5168
    %v5197 = vpack.c.b16 %v5171, %v5170
    %v5198 = vpack.c.b16 %v5173, %v5172
    %v5199 = vpack.c.b16 %v5175, %v5174
    %v5200 = vpack.c.b16 %v5177, %v5176
    %v5201 = vpack.c.b16 %v5179, %v5178
    %v5202 = vpack.c.b16 %v5181, %v5180
    %v5203 = vpack.c.b16 %v5183, %v5182
    %v5204 = vpack.c.b16 %v5185, %v5184
    %v5205 = vpack.c.b16 %v5187, %v5186
    %v5206 = vpack.c.b16 %v5189, %v5188
    %v5207 = vpack.c.b16 %v5191, %v5190
    %5224 = vmatprep.subr.bf16.mxu0 0
    %5225 = vmatpush1.bf16.msra.mxu0 %v5199
    %5226 = vmatprep.subr.bf16.mxu0 0
    %5227 = vmatpush1.bf16.msra.mxu0 %v5198
    %5228 = vmatprep.subr.bf16.mxu0 0
    %5229 = vmatpush1.bf16.msra.mxu0 %v5197
    %5230 = vmatprep.subr.bf16.mxu0 0
    %5231 = vmatpush1.bf16.msra.mxu0 %v5196
    %5232 = vmatprep.subr.bf16.mxu0 0
    %5233 = vmatpush1.bf16.msra.mxu0 %v5195
    %5234 = vmatprep.subr.bf16.mxu0 0
    %5235 = vmatpush1.bf16.msra.mxu0 %v5194
    %5236 = vmatprep.subr.bf16.mxu0 0
    %5237 = vmatpush1.bf16.msra.mxu0 %v5193
    %5238 = vmatprep.subr.bf16.mxu0 0
    %5239 = vmatpush1.bf16.msra.mxu0 %v5192
    %5240 = vmatprep.subr.bf16.mxu0 0
    %5241 = vmatpush2.bf16.msra.mxu0 %v5207
    %5242 = vmatprep.subr.bf16.mxu0 0
    %5243 = vmatpush2.bf16.msra.mxu0 %v5206
    %5244 = vmatprep.subr.bf16.mxu0 0
    %5245 = vmatpush2.bf16.msra.mxu0 %v5205
    %5246 = vmatprep.subr.bf16.mxu0 0
    %5247 = vmatpush2.bf16.msra.mxu0 %v5204
    %5248 = vmatprep.subr.bf16.mxu0 0
    %5249 = vmatpush2.bf16.msra.mxu0 %v5203
    %5250 = vmatprep.subr.bf16.mxu0 0
    %5251 = vmatpush2.bf16.msra.mxu0 %v5202
    %5252 = vmatprep.subr.bf16.mxu0 0
    %5253 = vmatpush2.bf16.msra.mxu0 %v5201
    %5254 = vmatprep.subr.bf16.mxu0 0
    %5255 = vmatpush2.bf16.msra.mxu0 %v5200
    %5256 = vmatprep.mubr.bf16.mxu0 %v5088
    %5257 = vmatmul.mubr.bf16.gmra.mxu0 %v5087
    %v5258 = vpop.f32.mrf.mxu0
    %v5259 = vadd.f32 %v5126, %v5258
    %v5260 = vpop.f32.mrf.mxu0
    %v5261 = vpop.f32.mrf.mxu0
    %v5262 = vpop.f32.mrf.mxu0
    %5263 = vdwg.mxu0
    %5264 = vst [vmem:[#allocation28] sm:$0x3] %v5259
    %v5265 = vld [vmem:[#allocation25] sm:$0xf]
    %v5266 = vld [vmem:[#allocation25 + $0x4] sm:$0xf]
    %v5267 = vld [vmem:[#allocation25 + $0x8] sm:$0xf]
    %v5268 = vld [vmem:[#allocation25 + $0xc] sm:$0xf]
    %v5269 = vld [vmem:[#allocation25 + $0x10] sm:$0xf]
    %v5270 = vld [vmem:[#allocation25 + $0x14] sm:$0xf]
    %v5271 = vld [vmem:[#allocation25 + $0x18] sm:$0xf]
    %v5272 = vld [vmem:[#allocation25 + $0x1c] sm:$0xf]
    %v5273 = vld [vmem:[#allocation25 + $0x20] sm:$0xf]
    %v5274 = vld [vmem:[#allocation25 + $0x24] sm:$0xf]
    %v5275 = vld [vmem:[#allocation25 + $0x28] sm:$0xf]
    %v5276 = vld [vmem:[#allocation25 + $0x2c] sm:$0xf]
    %v5277 = vld [vmem:[#allocation25 + $0x30] sm:$0xf]
    %v5278 = vld [vmem:[#allocation25 + $0x34] sm:$0xf]
    %v5279 = vld [vmem:[#allocation25 + $0x38] sm:$0xf]
    %v5280 = vld [vmem:[#allocation25 + $0x3c] sm:$0xf]
    %v5281 = vld [vmem:[#allocation25 + $0x40] sm:$0xf]
    %v5282 = vld [vmem:[#allocation25 + $0x44] sm:$0xf]
    %v5283 = vld [vmem:[#allocation25 + $0x48] sm:$0xf]
    %v5284 = vld [vmem:[#allocation25 + $0x4c] sm:$0xf]
    %v5285 = vld [vmem:[#allocation25 + $0x50] sm:$0xf]
    %v5286 = vld [vmem:[#allocation25 + $0x54] sm:$0xf]
    %v5287 = vld [vmem:[#allocation25 + $0x58] sm:$0xf]
    %v5288 = vld [vmem:[#allocation25 + $0x5c] sm:$0xf]
    %v5289 = vld [vmem:[#allocation25 + $0x60] sm:$0xf]
    %v5290 = vld [vmem:[#allocation25 + $0x64] sm:$0xf]
    %v5291 = vld [vmem:[#allocation25 + $0x68] sm:$0xf]
    %v5292 = vld [vmem:[#allocation25 + $0x6c] sm:$0xf]
    %v5293 = vld [vmem:[#allocation25 + $0x70] sm:$0xf]
    %v5294 = vld [vmem:[#allocation25 + $0x74] sm:$0xf]
    %v5295 = vld [vmem:[#allocation25 + $0x78] sm:$0xf]
    %v5296 = vld [vmem:[#allocation25 + $0x7c] sm:$0xf]
    %v5297 = vld [vmem:[#allocation26] sm:$0x1]
    %v5299 = vlaneseq
    %v5300 = vshrl.u32 %v5299, 7
    %v5301 = vsub.s32 0, %v5300
    %v5302 = vrot.slane %v5297, %v5301
    %v5336 = vunpack.c.l.b16 %v5265
    %v5337 = vunpack.c.l.b16 %v5266
    %v5338 = vunpack.c.l.b16 %v5267
    %v5339 = vunpack.c.l.b16 %v5268
    %v5340 = vunpack.c.l.b16 %v5269
    %v5341 = vunpack.c.l.b16 %v5270
    %v5342 = vunpack.c.l.b16 %v5271
    %v5343 = vunpack.c.l.b16 %v5272
    %v5344 = vunpack.c.l.b16 %v5273
    %v5345 = vunpack.c.l.b16 %v5274
    %v5346 = vunpack.c.l.b16 %v5275
    %v5347 = vunpack.c.l.b16 %v5276
    %v5348 = vunpack.c.l.b16 %v5277
    %v5349 = vunpack.c.l.b16 %v5278
    %v5350 = vunpack.c.l.b16 %v5279
    %v5351 = vunpack.c.l.b16 %v5280
    %v5352 = vunpack.c.l.b16 %v5281
    %v5353 = vunpack.c.l.b16 %v5282
    %v5354 = vunpack.c.l.b16 %v5283
    %v5355 = vunpack.c.l.b16 %v5284
    %v5356 = vunpack.c.l.b16 %v5285
    %v5357 = vunpack.c.l.b16 %v5286
    %v5358 = vunpack.c.l.b16 %v5287
    %v5359 = vunpack.c.l.b16 %v5288
    %v5360 = vunpack.c.l.b16 %v5289
    %v5361 = vunpack.c.l.b16 %v5290
    %v5362 = vunpack.c.l.b16 %v5291
    %v5363 = vunpack.c.l.b16 %v5292
    %v5364 = vunpack.c.l.b16 %v5293
    %v5365 = vunpack.c.l.b16 %v5294
    %v5366 = vunpack.c.l.b16 %v5295
    %v5367 = vunpack.c.l.b16 %v5296
    %v5368 = vpack.c.b16 %v5337, %v5336
    %v5369 = vpack.c.b16 %v5339, %v5338
    %v5370 = vpack.c.b16 %v5341, %v5340
    %v5371 = vpack.c.b16 %v5343, %v5342
    %v5372 = vpack.c.b16 %v5345, %v5344
    %v5373 = vpack.c.b16 %v5347, %v5346
    %v5374 = vpack.c.b16 %v5349, %v5348
    %v5375 = vpack.c.b16 %v5351, %v5350
    %v5376 = vpack.c.b16 %v5353, %v5352
    %v5377 = vpack.c.b16 %v5355, %v5354
    %v5378 = vpack.c.b16 %v5357, %v5356
    %v5379 = vpack.c.b16 %v5359, %v5358
    %v5380 = vpack.c.b16 %v5361, %v5360
    %v5381 = vpack.c.b16 %v5363, %v5362
    %v5382 = vpack.c.b16 %v5365, %v5364
    %v5383 = vpack.c.b16 %v5367, %v5366
    %5400 = vmatprep.subr.bf16.mxu0 0
    %5401 = vmatpush1.bf16.msra.mxu0 %v5375
    %5402 = vmatprep.subr.bf16.mxu0 0
    %5403 = vmatpush1.bf16.msra.mxu0 %v5374
    %5404 = vmatprep.subr.bf16.mxu0 0
    %5405 = vmatpush1.bf16.msra.mxu0 %v5373
    %5406 = vmatprep.subr.bf16.mxu0 0
    %5407 = vmatpush1.bf16.msra.mxu0 %v5372
    %5408 = vmatprep.subr.bf16.mxu0 0
    %5409 = vmatpush1.bf16.msra.mxu0 %v5371
    %5410 = vmatprep.subr.bf16.mxu0 0
    %5411 = vmatpush1.bf16.msra.mxu0 %v5370
    %5412 = vmatprep.subr.bf16.mxu0 0
    %5413 = vmatpush1.bf16.msra.mxu0 %v5369
    %5414 = vmatprep.subr.bf16.mxu0 0
    %5415 = vmatpush1.bf16.msra.mxu0 %v5368
    %5416 = vmatprep.subr.bf16.mxu0 0
    %5417 = vmatpush2.bf16.msra.mxu0 %v5383
    %5418 = vmatprep.subr.bf16.mxu0 0
    %5419 = vmatpush2.bf16.msra.mxu0 %v5382
    %5420 = vmatprep.subr.bf16.mxu0 0
    %5421 = vmatpush2.bf16.msra.mxu0 %v5381
    %5422 = vmatprep.subr.bf16.mxu0 0
    %5423 = vmatpush2.bf16.msra.mxu0 %v5380
    %5424 = vmatprep.subr.bf16.mxu0 0
    %5425 = vmatpush2.bf16.msra.mxu0 %v5379
    %5426 = vmatprep.subr.bf16.mxu0 0
    %5427 = vmatpush2.bf16.msra.mxu0 %v5378
    %5428 = vmatprep.subr.bf16.mxu0 0
    %5429 = vmatpush2.bf16.msra.mxu0 %v5377
    %5430 = vmatprep.subr.bf16.mxu0 0
    %5431 = vmatpush2.bf16.msra.mxu0 %v5376
    %5432 = vmatprep.mubr.bf16.mxu0 %v3149
    %5433 = vmatmul.mubr.bf16.gmra.mxu0 %v3148
    %v5434 = vpop.f32.mrf.mxu0
    %v5435 = vadd.f32 %v5302, %v5434
    %v5436 = vpop.f32.mrf.mxu0
    %v5437 = vpop.f32.mrf.mxu0
    %v5438 = vpop.f32.mrf.mxu0
    %5439 = vdwg.mxu0
    %s5440 = scalar_lea.vmem [#allocation28], 2
    %5441 = vst [vmem:[%s5440] sm:$0x3] %v5435
    // Predicated region
    $region134: #{cnn_with_batch_forward.1} parent=1 // pred_check
      _
    $region135: #{cnn_with_batch_forward.1} parent=1 // pred_check_branch
      %5443 = sbr.rel (0) target = $region137
    $region136: #{cnn_with_batch_forward.1} parent=1 // pred_region
      %s5445 = ssub.s32 64, 64
      %5446 = vsyncadd [#allocation4], %s5445
      %s5447 = sshll.u32 [#allocation28], 4
      %s5448 = int_to_ptr.vmem [resolvable:$true] %s5447
      %5453 = dma.vmem_to_hbm [thread:$0]  %s5448, 64, %s17, [#allocation4], 32, 32, 2
    $region137: #{cnn_with_batch_forward.1} parent=1 // pred_fallthru
      _
    // Predicated region
    $region138: #{cnn_with_batch_forward.1} parent=1 // pred_check
      _
    $region139: #{cnn_with_batch_forward.1} parent=1 // pred_check_branch
      %5455 = sbr.rel (0) target = $region141
    $region140: #{cnn_with_batch_forward.1} parent=1 // pred_region
      %5456 = dma.done [#allocation4], 64
    $region141: #{cnn_with_batch_forward.1} parent=1 // pred_fallthru
      _
    %5457 = vsyncpa [#allocation3], 1
    %5458 = vsyncpa [#allocation6], 1
    %5459 = vsyncpa [#allocation9], 1
    %5460 = vsyncpa [#allocation12], 1
    %5461 = vsyncpa [#allocation15], 1
    %5462 = vsyncpa [#allocation18], 1
    %5463 = vsyncpa [#allocation21], 1
    %5464 = vsyncpa [#allocation24], 1
    %5465 = vsyncpa [#allocation27], 1
    %5466 = vsyncpa [#allocation4], 1

</llo_original>
